<compile_context>
chip_gen: v6e
topology: v6e:2x2x1
jax: 0.10.0
libtpu: 0.0.40
codegen_flags: <defaults>
</compile_context>

<pallas_src>
import functools

import jax
import jax.numpy as jnp
from jax.experimental import pallas as pl
from jax.experimental.pallas import tpu as pltpu


LANE = 128
NEG_INF = -1e30


def _round_up(v, m):
    return ((v + m - 1) // m) * m


# ----------------------------------------------------------------------------
# Fused ViT kernel (one grid step = one batch tile of stacked token rows)
# ----------------------------------------------------------------------------

def _vit_kernel(patches_ref, wp_ref, tok_ref, mask_ref, sel_ref,
                ln1_g_ref, ln1_b_ref, wq_ref, wk_ref, wvo_ref, bo_ref,
                ln2_g_ref, ln2_b_ref, w1_ref, b1_ref, w2_ref, b2_ref,
                hln_g_ref, hln_b_ref, hw_ref, hb_ref,
                o_ref, *, nheads, eps, exact_softmax=False):
    f32 = jnp.float32
    bf16 = jnp.bfloat16

    def ln(v, g, b):
        # LayerNorm, biased variance (torch semantics), f32 math.
        mu = jnp.mean(v, axis=-1, keepdims=True)
        c = v - mu
        var = jnp.mean(c * c, axis=-1, keepdims=True)
        return c * jax.lax.rsqrt(var + eps) * g + b

    def gelu(v):
        # exact (erf) GELU, matching torch.nn.GELU() default, f32 math.
        return 0.5 * v * (1.0 + jax.lax.erf(v * (2.0 ** -0.5)))

    mask = mask_ref[...]                                     # (T, T) additive bias

    # ---- patch embedding; class token / pos embedding / patch bias are all
    #      pre-folded into tok_ref (exact: class & pad patch rows are zero) ----
    x = jnp.dot(patches_ref[...], wp_ref[...],
                preferred_element_type=f32) + tok_ref[...]   # (T, D) f32

    nlayers = ln1_g_ref.shape[0]
    for l in range(nlayers):                  # unrolled; weights stay VMEM-resident
        # ---- attention sublayer: x = x + SelfAttention(LayerNorm(x)) ----
        h = ln(x, ln1_g_ref[l], ln1_b_ref[l])                # (T, D) f32
        h_bf = h.astype(bf16)
        att = None
        for hd in range(nheads):
            # per-head weights (no lane slicing); scale folded into Wq,
            # value & output projection folded into one (D, D) weight.
            q = jnp.dot(h_bf, wq_ref[l, hd], preferred_element_type=f32)    # (T, Dh)
            k = jnp.dot(h_bf, wk_ref[l, hd], preferred_element_type=f32)    # (T, Dh)
            vo = jnp.dot(h_bf, wvo_ref[l, hd], preferred_element_type=f32)  # (T, D)
            # block-diagonal scores over the stacked tokens (NT matmul)
            s = jax.lax.dot_general(q.astype(bf16), k.astype(bf16),
                                    (((1,), (1,)), ((), ())),
                                    preferred_element_type=f32)             # (T, T)
            s = s + mask                                      # kill cross-image / pad keys
            s = s - jnp.max(s, axis=-1, keepdims=True)
            e = jnp.exp(s)
            denom = jnp.sum(e, axis=-1, keepdims=True)
            if exact_softmax:
                p = e / denom
            else:
                p = e * pl.reciprocal(denom, approx=True)     # EUP slot
            contrib = jnp.dot(p.astype(bf16), vo.astype(bf16),
                              preferred_element_type=f32)     # (T, D)
            att = contrib if att is None else att + contrib
        x = x + att + bo_ref[l]                               # residual + out-proj bias

        # ---- mlp sublayer: x = x + MLP(LayerNorm(x)) ----
        h = ln(x, ln2_g_ref[l], ln2_b_ref[l])
        h = jnp.dot(h.astype(bf16), w1_ref[l], preferred_element_type=f32) + b1_ref[l]
        h = gelu(h)
        h = jnp.dot(h.astype(bf16), w2_ref[l], preferred_element_type=f32) + b2_ref[l]
        x = x + h

    # ---- prediction head on class-token rows (rows 0, S_pad, 2*S_pad, ...),
    #      selected with a tiny exact f32 matmul (layout-safe) ----
    cls = jnp.dot(sel_ref[...], x, preferred_element_type=f32)              # (bt, D)
    hc = ln(cls, hln_g_ref[...], hln_b_ref[...])
    logits = jnp.dot(hc.astype(bf16), hw_ref[...],
                     preferred_element_type=f32) + hb_ref[...]              # (bt, 128)
    o_ref[...] = logits.astype(o_ref.dtype)


# ----------------------------------------------------------------------------
# Parameters (PyTorch conventions) + one-time packing to kernel-ready layout
# ----------------------------------------------------------------------------

CFG = dict(
    input_size=(16, 16),
    patch_size=4,
    embed_dim=32,
    att_layers=2,
    nheads=2,
    head_dim=8,
    mlp_hidden_dim=64,
    dropout=0.0,
    nclasses=10,
)


def init_params(key, cfg):
    P = cfg["patch_size"]
    D = cfg["embed_dim"]
    H = cfg["nheads"]
    Dh = cfg["head_dim"]
    hidden = H * Dh
    mlp = cfg["mlp_hidden_dim"]
    ncls = cfg["nclasses"]
    num_patches = (cfg["input_size"][0] // P) * (cfg["input_size"][1] // P) + 1

    def nrm(key, shape, scale=0.02):
        return scale * jax.random.normal(key, shape, dtype=jnp.float32)

    keys = iter(jax.random.split(key, 8 + cfg["att_layers"] * 10))
    params = {
        "patch_w": nrm(next(keys), (D, P * P * 3)),
        "patch_b": jnp.zeros((D,), jnp.float32),
        "class_token": nrm(next(keys), (1, 1, D), scale=1.0),
        "pos_embedding": nrm(next(keys), (1, num_patches, D), scale=1.0),
        "head_ln_g": jnp.ones((D,), jnp.float32),
        "head_ln_b": jnp.zeros((D,), jnp.float32),
        "head_w": nrm(next(keys), (ncls, D)),
        "head_b": jnp.zeros((ncls,), jnp.float32),
        "layers": [],
    }
    for _ in range(cfg["att_layers"]):
        params["layers"].append({
            "ln1_g": jnp.ones((D,), jnp.float32),
            "ln1_b": jnp.zeros((D,), jnp.float32),
            "wq": nrm(next(keys), (hidden, D)),
            "wk": nrm(next(keys), (hidden, D)),
            "wv": nrm(next(keys), (hidden, D)),
            "wo": nrm(next(keys), (D, hidden)),
            "bo": jnp.zeros((D,), jnp.float32),
            "ln2_g": jnp.ones((D,), jnp.float32),
            "ln2_b": jnp.zeros((D,), jnp.float32),
            "w1": nrm(next(keys), (mlp, D)),
            "b1": jnp.zeros((mlp,), jnp.float32),
            "w2": nrm(next(keys), (D, mlp)),
            "b2": jnp.zeros((D,), jnp.float32),
        })
    return params


def pack_params(params, cfg):
    """One-time hoist: transpose / split / fold / cast weights to kernel layout."""
    P = cfg["patch_size"]
    D = cfg["embed_dim"]
    H = cfg["nheads"]
    Dh = cfg["head_dim"]
    hidden = H * Dh
    mlp = cfg["mlp_hidden_dim"]
    ncls = cfg["nclasses"]
    L = cfg["att_layers"]
    PPC = P * P * 3
    PPC_PAD = _round_up(PPC, LANE)
    NCLS_PAD = _round_up(ncls, LANE)
    Np = (cfg["input_size"][0] // P) * (cfg["input_size"][1] // P)
    S = Np + 1
    S_pad = _round_up(S, 8)
    scale = hidden ** (-0.5)          # SelfAttention.scale = hidden_dim**-0.5
    bf16 = jnp.bfloat16
    layers = params["layers"]

    # patch embedding weight: transposed + lane-padded rows, bf16
    wp_t = jnp.pad(params["patch_w"].T, ((0, PPC_PAD - PPC), (0, 0))).astype(bf16)

    # fold class token, positional embedding and patch bias into one init tensor:
    #   x = patches @ Wp + tok   (class & pad patch rows are all-zero)
    cls = params["class_token"][0]          # (1, D)
    pos = params["pos_embedding"][0]        # (S, D)
    pb = params["patch_b"][None, :]         # (1, D)
    tok = jnp.concatenate(
        [cls + pos[0:1], pos[1:] + pb,
         jnp.zeros((S_pad - S, D), jnp.float32)], axis=0)            # (S_pad, D)

    def stk(key):
        return jnp.stack([layers[l][key] for l in range(L)], axis=0)

    # per-head Q/K weights (scale folded into Q) and folded V@Wo weight
    wq, wk, wvo = [], [], []
    for l in range(L):
        wq_l = layers[l]["wq"].T * scale     # (D, hidden)
        wk_l = layers[l]["wk"].T             # (D, hidden)
        wv_l = layers[l]["wv"].T             # (D, hidden)
        wo_l = layers[l]["wo"].T             # (hidden, D)
        wq.append(jnp.stack([wq_l[:, h * Dh:(h + 1) * Dh] for h in range(H)], 0))
        wk.append(jnp.stack([wk_l[:, h * Dh:(h + 1) * Dh] for h in range(H)], 0))
        wvo.append(jnp.stack([wv_l[:, h * Dh:(h + 1) * Dh]
                              @ wo_l[h * Dh:(h + 1) * Dh, :] for h in range(H)], 0))

    return {
        "wp_t": wp_t,                                                # (PPC_PAD, D) bf16
        "tok": tok,                                                  # (S_pad, D) f32
        "ln1_g": stk("ln1_g").reshape(L, 1, D),
        "ln1_b": stk("ln1_b").reshape(L, 1, D),
        "wq": jnp.stack(wq, 0).astype(bf16),                         # (L, H, D, Dh)
        "wk": jnp.stack(wk, 0).astype(bf16),                         # (L, H, D, Dh)
        "wvo": jnp.stack(wvo, 0).astype(bf16),                       # (L, H, D, D)
        "bo": stk("bo").reshape(L, 1, D),
        "ln2_g": stk("ln2_g").reshape(L, 1, D),
        "ln2_b": stk("ln2_b").reshape(L, 1, D),
        "w1_t": jnp.stack([layers[l]["w1"].T for l in range(L)], 0).astype(bf16),
        "b1": stk("b1").reshape(L, 1, mlp),
        "w2_t": jnp.stack([layers[l]["w2"].T for l in range(L)], 0).astype(bf16),
        "b2": stk("b2").reshape(L, 1, D),
        "hln_g": params["head_ln_g"].reshape(1, D),
        "hln_b": params["head_ln_b"].reshape(1, D),
        "hw_t": jnp.pad(params["head_w"].T,
                        ((0, 0), (0, NCLS_PAD - ncls))).astype(bf16),   # (D, 128)
        "hb": jnp.pad(params["head_b"].reshape(1, ncls),
                      ((0, 0), (0, NCLS_PAD - ncls))),                  # (1, 128)
    }


# ----------------------------------------------------------------------------
# Forward
# ----------------------------------------------------------------------------

def cropped_vit_forward(packed, x, *, batch_tile=8, exact_softmax=False):
    """x: (B, 3, H, W) float32 image batch (NCHW, like PyTorch)."""
    # TODO(synk): maskrcnn crop + torchvision resize preprocessing not translated.
    cfg = CFG
    B, C, Himg, Wimg = x.shape
    P = cfg["patch_size"]
    D = cfg["embed_dim"]
    H = cfg["nheads"]
    ncls = cfg["nclasses"]
    hP, wP = Himg // P, Wimg // P
    Np = hP * wP
    PPC = P * P * C
    PPC_PAD = _round_up(PPC, LANE)
    NCLS_PAD = _round_up(ncls, LANE)
    S = Np + 1
    S_pad = _round_up(S, 8)

    # TODO(synk): pos-embedding interpolation branch (npatches != num_patches).
    assert packed["tok"].shape[0] == S_pad, "npatches != num_patches not supported"

    # batch tile size; keep sublane alignment when the grid has multiple steps
    bt = min(batch_tile, B)
    if B > bt and bt % 8 != 0:
        bt = max(8, (bt // 8) * 8)
    num_tiles = -(-B // bt)
    B_pad = num_tiles * bt
    T = bt * S_pad                        # stacked token rows per grid step

    # 'b c (h px) (w py) -> b (h w) (px py c)'
    patches = (x.reshape(B, C, hP, P, wP, P)
                .transpose(0, 2, 4, 3, 5, 1)
                .reshape(B, Np, PPC))
    # one zero pad: batch -> B_pad, class slot + pad rows -> S_pad, lanes -> 128
    patches = jnp.pad(patches,
                      ((0, B_pad - B), (1, S_pad - 1 - Np), (0, PPC_PAD - PPC)))
    patches = patches.astype(jnp.bfloat16).reshape(B_pad * S_pad, PPC_PAD)

    tok_tiled = jnp.tile(packed["tok"], (bt, 1))                     # (T, D) f32

    # block-diagonal additive attention bias: 0 where (same image & real-token
    # key column), -1e30 elsewhere (exp underflows to exactly 0).
    r = jnp.arange(T, dtype=jnp.int32)
    same = (r[:, None] // S_pad) == (r[None, :] // S_pad)
    valid = (r[None, :] % S_pad) < S
    attn_bias = jnp.where(same & valid, 0.0, NEG_INF).astype(jnp.float32)  # (T, T)

    # class-row selection matrix: row i picks token 0 of image i in the tile
    sel = jnp.zeros((bt, T), jnp.float32).at[
        jnp.arange(bt), jnp.arange(bt) * S_pad].set(1.0)

    kernel = functools.partial(_vit_kernel, nheads=H, eps=1e-5,
                               exact_softmax=exact_softmax)

    args = (patches, packed["wp_t"], tok_tiled, attn_bias, sel,
            packed["ln1_g"], packed["ln1_b"], packed["wq"], packed["wk"],
            packed["wvo"], packed["bo"], packed["ln2_g"], packed["ln2_b"],
            packed["w1_t"], packed["b1"], packed["w2_t"], packed["b2"],
            packed["hln_g"], packed["hln_b"], packed["hw_t"], packed["hb"])

    def const_spec(arr):
        nd = arr.ndim
        return pl.BlockSpec(arr.shape, lambda i, _n=nd: (0,) * _n)

    in_specs = [pl.BlockSpec((T, PPC_PAD), lambda i: (i, 0))]    # per-tile patches
    in_specs += [const_spec(a) for a in args[1:]]                # VMEM-resident weights

    out = pl.pallas_call(
        kernel,
        out_shape=jax.ShapeDtypeStruct((B_pad, NCLS_PAD), jnp.float32),
        grid=(num_tiles,),
        in_specs=in_specs,
        out_specs=pl.BlockSpec((bt, NCLS_PAD), lambda i: (i, 0)),
        compiler_params=pltpu.CompilerParams(dimension_semantics=("parallel",)),
    )(*args)
    return out[:B, :ncls]


# ----------------------------------------------------------------------------
# Main
# ----------------------------------------------------------------------------

if __name__ == "__main__":
    key = jax.random.PRNGKey(0)
    kp, kx = jax.random.split(key)
    params = init_params(kp, CFG)
    packed = pack_params(params, CFG)          # one-time weight packing (hoisted)

    B = 2
    Himg, Wimg = CFG["input_size"]
    x = jax.random.normal(kx, (B, 3, Himg, Wimg), dtype=jnp.float32)

    fwd = jax.jit(cropped_vit_forward)
    logits = jax.block_until_ready(fwd(packed, x))
    assert logits.shape == (B, CFG["nclasses"]), logits.shape
    assert bool(jnp.all(jnp.isfinite(logits)))
    print("KERNEL_OK")
</pallas_src>

<mosaic_0001>
module attributes {stable_mosaic.version = 11 : i64} {
  func.func @_vit_kernel(%arg0: i32, %arg1: memref<48x128xbf16, #tpu.memory_space<vmem>>, %arg2: memref<128x32xbf16, #tpu.memory_space<vmem>>, %arg3: memref<48x32xf32, #tpu.memory_space<vmem>>, %arg4: memref<48x48xf32, #tpu.memory_space<vmem>>, %arg5: memref<2x48xf32, #tpu.memory_space<vmem>>, %arg6: memref<2x1x32xf32, #tpu.memory_space<vmem>>, %arg7: memref<2x1x32xf32, #tpu.memory_space<vmem>>, %arg8: memref<2x2x32x8xbf16, #tpu.memory_space<vmem>>, %arg9: memref<2x2x32x8xbf16, #tpu.memory_space<vmem>>, %arg10: memref<2x2x32x32xbf16, #tpu.memory_space<vmem>>, %arg11: memref<2x1x32xf32, #tpu.memory_space<vmem>>, %arg12: memref<2x1x32xf32, #tpu.memory_space<vmem>>, %arg13: memref<2x1x32xf32, #tpu.memory_space<vmem>>, %arg14: memref<2x32x64xbf16, #tpu.memory_space<vmem>>, %arg15: memref<2x1x64xf32, #tpu.memory_space<vmem>>, %arg16: memref<2x64x32xbf16, #tpu.memory_space<vmem>>, %arg17: memref<2x1x32xf32, #tpu.memory_space<vmem>>, %arg18: memref<1x32xf32, #tpu.memory_space<vmem>>, %arg19: memref<1x32xf32, #tpu.memory_space<vmem>>, %arg20: memref<32x128xbf16, #tpu.memory_space<vmem>>, %arg21: memref<1x128xf32, #tpu.memory_space<vmem>>, %arg22: memref<2x128xf32, #tpu.memory_space<vmem>>) attributes {dimension_semantics = [#tpu.dimension_semantics<parallel>], iteration_bounds = array<i64: 1>, scalar_prefetch = 0 : i64, scratch_operands = 0 : i64, tpu.core_type = #tpu.core_type<tc>, window_params = [{transform_indices = @transform_0, window_bounds = array<i64: 48, 128>}, {pipeline_mode = #tpu.pipeline_mode<synchronous>, transform_indices = @transform_1, window_bounds = array<i64: 128, 32>}, {pipeline_mode = #tpu.pipeline_mode<synchronous>, transform_indices = @transform_2, window_bounds = array<i64: 48, 32>}, {pipeline_mode = #tpu.pipeline_mode<synchronous>, transform_indices = @transform_3, window_bounds = array<i64: 48, 48>}, {pipeline_mode = #tpu.pipeline_mode<synchronous>, transform_indices = @transform_4, window_bounds = array<i64: 2, 48>}, {pipeline_mode = #tpu.pipeline_mode<synchronous>, transform_indices = @transform_5, window_bounds = array<i64: 2, 1, 32>}, {pipeline_mode = #tpu.pipeline_mode<synchronous>, transform_indices = @transform_6, window_bounds = array<i64: 2, 1, 32>}, {pipeline_mode = #tpu.pipeline_mode<synchronous>, transform_indices = @transform_7, window_bounds = array<i64: 2, 2, 32, 8>}, {pipeline_mode = #tpu.pipeline_mode<synchronous>, transform_indices = @transform_8, window_bounds = array<i64: 2, 2, 32, 8>}, {pipeline_mode = #tpu.pipeline_mode<synchronous>, transform_indices = @transform_9, window_bounds = array<i64: 2, 2, 32, 32>}, {pipeline_mode = #tpu.pipeline_mode<synchronous>, transform_indices = @transform_10, window_bounds = array<i64: 2, 1, 32>}, {pipeline_mode = #tpu.pipeline_mode<synchronous>, transform_indices = @transform_11, window_bounds = array<i64: 2, 1, 32>}, {pipeline_mode = #tpu.pipeline_mode<synchronous>, transform_indices = @transform_12, window_bounds = array<i64: 2, 1, 32>}, {pipeline_mode = #tpu.pipeline_mode<synchronous>, transform_indices = @transform_13, window_bounds = array<i64: 2, 32, 64>}, {pipeline_mode = #tpu.pipeline_mode<synchronous>, transform_indices = @transform_14, window_bounds = array<i64: 2, 1, 64>}, {pipeline_mode = #tpu.pipeline_mode<synchronous>, transform_indices = @transform_15, window_bounds = array<i64: 2, 64, 32>}, {pipeline_mode = #tpu.pipeline_mode<synchronous>, transform_indices = @transform_16, window_bounds = array<i64: 2, 1, 32>}, {pipeline_mode = #tpu.pipeline_mode<synchronous>, transform_indices = @transform_17, window_bounds = array<i64: 1, 32>}, {pipeline_mode = #tpu.pipeline_mode<synchronous>, transform_indices = @transform_18, window_bounds = array<i64: 1, 32>}, {pipeline_mode = #tpu.pipeline_mode<synchronous>, transform_indices = @transform_19, window_bounds = array<i64: 32, 128>}, {pipeline_mode = #tpu.pipeline_mode<synchronous>, transform_indices = @transform_20, window_bounds = array<i64: 1, 128>}, {transform_indices = @transform_21, window_bounds = array<i64: 2, 128>}]} {
    %c0 = arith.constant 0 : index
    %c0_0 = arith.constant 0 : index
    %0 = vector.load %arg4[%c0, %c0_0] : memref<48x48xf32, #tpu.memory_space<vmem>>, vector<48x48xf32>
    %c0_1 = arith.constant 0 : index
    %c0_2 = arith.constant 0 : index
    %1 = vector.load %arg1[%c0_1, %c0_2] : memref<48x128xbf16, #tpu.memory_space<vmem>>, vector<48x128xbf16>
    %c0_3 = arith.constant 0 : index
    %c0_4 = arith.constant 0 : index
    %2 = vector.load %arg2[%c0_3, %c0_4] : memref<128x32xbf16, #tpu.memory_space<vmem>>, vector<128x32xbf16>
    %cst = arith.constant dense<0.000000e+00> : vector<48x32xf32>
    %3 = tpu.matmul %1, %2, %cst {dimension_numbers = #tpu.dot_dimension_numbers<[1], [0], [0], [1], [0, 0, 1, 1], [], []>} : vector<48x128xbf16>, vector<128x32xbf16>, vector<48x32xf32> -> vector<48x32xf32>
    %c0_5 = arith.constant 0 : index
    %c0_6 = arith.constant 0 : index
    %4 = vector.load %arg3[%c0_5, %c0_6] : memref<48x32xf32, #tpu.memory_space<vmem>>, vector<48x32xf32>
    %5 = arith.addf %3, %4 : vector<48x32xf32>
    %c0_7 = arith.constant 0 : index
    %c0_8 = arith.constant 0 : index
    %c0_9 = arith.constant 0 : index
    %6 = vector.load %arg6[%c0_7, %c0_8, %c0_9] : memref<2x1x32xf32, #tpu.memory_space<vmem>>, vector<1x1x32xf32>
    %7 = vector.shape_cast %6 : vector<1x1x32xf32> to vector<1x32xf32>
    %c0_10 = arith.constant 0 : index
    %c0_11 = arith.constant 0 : index
    %c0_12 = arith.constant 0 : index
    %8 = vector.load %arg7[%c0_10, %c0_11, %c0_12] : memref<2x1x32xf32, #tpu.memory_space<vmem>>, vector<1x1x32xf32>
    %9 = vector.shape_cast %8 : vector<1x1x32xf32> to vector<1x32xf32>
    %cst_13 = arith.constant dense<0.000000e+00> : vector<48xf32>
    %10 = vector.multi_reduction <add>, %5, %cst_13 [1] : vector<48x32xf32> to vector<48xf32>
    %11 = vector.shape_cast %10 : vector<48xf32> to vector<48x1xf32>
    %cst_14 = arith.constant 3.200000e+01 : f32
    %12 = vector.broadcast %cst_14 : f32 to vector<48x1xf32>
    %13 = arith.divf %11, %12 : vector<48x1xf32>
    %14 = vector.broadcast %13 : vector<48x1xf32> to vector<48x32xf32>
    %15 = arith.subf %5, %14 : vector<48x32xf32>
    %16 = arith.mulf %15, %15 : vector<48x32xf32>
    %cst_15 = arith.constant dense<0.000000e+00> : vector<48xf32>
    %17 = vector.multi_reduction <add>, %16, %cst_15 [1] : vector<48x32xf32> to vector<48xf32>
    %18 = vector.shape_cast %17 : vector<48xf32> to vector<48x1xf32>
    %cst_16 = arith.constant 3.200000e+01 : f32
    %19 = vector.broadcast %cst_16 : f32 to vector<48x1xf32>
    %20 = arith.divf %18, %19 : vector<48x1xf32>
    %cst_17 = arith.constant 9.99999974E-6 : f32
    %21 = vector.broadcast %cst_17 : f32 to vector<48x1xf32>
    %22 = arith.addf %20, %21 : vector<48x1xf32>
    %23 = math.rsqrt %22 : vector<48x1xf32>
    %24 = vector.broadcast %23 : vector<48x1xf32> to vector<48x32xf32>
    %25 = arith.mulf %15, %24 : vector<48x32xf32>
    %26 = vector.broadcast %7 : vector<1x32xf32> to vector<48x32xf32>
    %27 = arith.mulf %25, %26 : vector<48x32xf32>
    %28 = vector.broadcast %9 : vector<1x32xf32> to vector<48x32xf32>
    %29 = arith.addf %27, %28 : vector<48x32xf32>
    %30 = arith.truncf %29 : vector<48x32xf32> to vector<48x32xbf16>
    %c0_18 = arith.constant 0 : index
    %c0_19 = arith.constant 0 : index
    %c0_20 = arith.constant 0 : index
    %c0_21 = arith.constant 0 : index
    %31 = vector.load %arg8[%c0_18, %c0_19, %c0_20, %c0_21] : memref<2x2x32x8xbf16, #tpu.memory_space<vmem>>, vector<1x1x32x8xbf16>
    %32 = vector.shape_cast %31 : vector<1x1x32x8xbf16> to vector<32x8xbf16>
    %cst_22 = arith.constant dense<0.000000e+00> : vector<48x8xf32>
    %33 = tpu.matmul %30, %32, %cst_22 {dimension_numbers = #tpu.dot_dimension_numbers<[1], [0], [0], [1], [0, 0, 1, 1], [], []>} : vector<48x32xbf16>, vector<32x8xbf16>, vector<48x8xf32> -> vector<48x8xf32>
    %c0_23 = arith.constant 0 : index
    %c0_24 = arith.constant 0 : index
    %c0_25 = arith.constant 0 : index
    %c0_26 = arith.constant 0 : index
    %34 = vector.load %arg9[%c0_23, %c0_24, %c0_25, %c0_26] : memref<2x2x32x8xbf16, #tpu.memory_space<vmem>>, vector<1x1x32x8xbf16>
    %35 = vector.shape_cast %34 : vector<1x1x32x8xbf16> to vector<32x8xbf16>
    %cst_27 = arith.constant dense<0.000000e+00> : vector<48x8xf32>
    %36 = tpu.matmul %30, %35, %cst_27 {dimension_numbers = #tpu.dot_dimension_numbers<[1], [0], [0], [1], [0, 0, 1, 1], [], []>} : vector<48x32xbf16>, vector<32x8xbf16>, vector<48x8xf32> -> vector<48x8xf32>
    %c0_28 = arith.constant 0 : index
    %c0_29 = arith.constant 0 : index
    %c0_30 = arith.constant 0 : index
    %c0_31 = arith.constant 0 : index
    %37 = vector.load %arg10[%c0_28, %c0_29, %c0_30, %c0_31] : memref<2x2x32x32xbf16, #tpu.memory_space<vmem>>, vector<1x1x32x32xbf16>
    %38 = vector.shape_cast %37 : vector<1x1x32x32xbf16> to vector<32x32xbf16>
    %cst_32 = arith.constant dense<0.000000e+00> : vector<48x32xf32>
    %39 = tpu.matmul %30, %38, %cst_32 {dimension_numbers = #tpu.dot_dimension_numbers<[1], [0], [0], [1], [0, 0, 1, 1], [], []>} : vector<48x32xbf16>, vector<32x32xbf16>, vector<48x32xf32> -> vector<48x32xf32>
    %40 = arith.truncf %33 : vector<48x8xf32> to vector<48x8xbf16>
    %41 = arith.truncf %36 : vector<48x8xf32> to vector<48x8xbf16>
    %cst_33 = arith.constant dense<0.000000e+00> : vector<48x48xf32>
    %42 = tpu.matmul %40, %41, %cst_33 {dimension_numbers = #tpu.dot_dimension_numbers<[1], [1], [0], [0], [0, 0, 1, 0], [], []>} : vector<48x8xbf16>, vector<48x8xbf16>, vector<48x48xf32> -> vector<48x48xf32>
    %43 = arith.addf %42, %0 : vector<48x48xf32>
    %cst_34 = arith.constant dense<0xFF800000> : vector<48xf32>
    %44 = vector.multi_reduction <maximumf>, %43, %cst_34 [1] : vector<48x48xf32> to vector<48xf32>
    %45 = vector.shape_cast %44 : vector<48xf32> to vector<48x1xf32>
    %46 = vector.broadcast %45 : vector<48x1xf32> to vector<48x48xf32>
    %47 = arith.subf %43, %46 : vector<48x48xf32>
    %48 = math.exp %47 : vector<48x48xf32>
    %cst_35 = arith.constant dense<0.000000e+00> : vector<48xf32>
    %49 = vector.multi_reduction <add>, %48, %cst_35 [1] : vector<48x48xf32> to vector<48xf32>
    %50 = vector.shape_cast %49 : vector<48xf32> to vector<48x1xf32>
    %51 = tpu.reciprocal %50 {approx = true} : vector<48x1xf32> -> vector<48x1xf32>
    %52 = vector.broadcast %51 : vector<48x1xf32> to vector<48x48xf32>
    %53 = arith.mulf %48, %52 : vector<48x48xf32>
    %54 = arith.truncf %53 : vector<48x48xf32> to vector<48x48xbf16>
    %55 = arith.truncf %39 : vector<48x32xf32> to vector<48x32xbf16>
    %cst_36 = arith.constant dense<0.000000e+00> : vector<48x32xf32>
    %56 = tpu.matmul %54, %55, %cst_36 {dimension_numbers = #tpu.dot_dimension_numbers<[1], [0], [0], [1], [0, 0, 1, 1], [], []>} : vector<48x48xbf16>, vector<48x32xbf16>, vector<48x32xf32> -> vector<48x32xf32>
    %c0_37 = arith.constant 0 : index
    %c1 = arith.constant 1 : index
    %c0_38 = arith.constant 0 : index
    %c0_39 = arith.constant 0 : index
    %57 = vector.load %arg8[%c0_37, %c1, %c0_38, %c0_39] : memref<2x2x32x8xbf16, #tpu.memory_space<vmem>>, vector<1x1x32x8xbf16>
    %58 = vector.shape_cast %57 : vector<1x1x32x8xbf16> to vector<32x8xbf16>
    %cst_40 = arith.constant dense<0.000000e+00> : vector<48x8xf32>
    %59 = tpu.matmul %30, %58, %cst_40 {dimension_numbers = #tpu.dot_dimension_numbers<[1], [0], [0], [1], [0, 0, 1, 1], [], []>} : vector<48x32xbf16>, vector<32x8xbf16>, vector<48x8xf32> -> vector<48x8xf32>
    %c0_41 = arith.constant 0 : index
    %c1_42 = arith.constant 1 : index
    %c0_43 = arith.constant 0 : index
    %c0_44 = arith.constant 0 : index
    %60 = vector.load %arg9[%c0_41, %c1_42, %c0_43, %c0_44] : memref<2x2x32x8xbf16, #tpu.memory_space<vmem>>, vector<1x1x32x8xbf16>
    %61 = vector.shape_cast %60 : vector<1x1x32x8xbf16> to vector<32x8xbf16>
    %cst_45 = arith.constant dense<0.000000e+00> : vector<48x8xf32>
    %62 = tpu.matmul %30, %61, %cst_45 {dimension_numbers = #tpu.dot_dimension_numbers<[1], [0], [0], [1], [0, 0, 1, 1], [], []>} : vector<48x32xbf16>, vector<32x8xbf16>, vector<48x8xf32> -> vector<48x8xf32>
    %c0_46 = arith.constant 0 : index
    %c1_47 = arith.constant 1 : index
    %c0_48 = arith.constant 0 : index
    %c0_49 = arith.constant 0 : index
    %63 = vector.load %arg10[%c0_46, %c1_47, %c0_48, %c0_49] : memref<2x2x32x32xbf16, #tpu.memory_space<vmem>>, vector<1x1x32x32xbf16>
    %64 = vector.shape_cast %63 : vector<1x1x32x32xbf16> to vector<32x32xbf16>
    %cst_50 = arith.constant dense<0.000000e+00> : vector<48x32xf32>
    %65 = tpu.matmul %30, %64, %cst_50 {dimension_numbers = #tpu.dot_dimension_numbers<[1], [0], [0], [1], [0, 0, 1, 1], [], []>} : vector<48x32xbf16>, vector<32x32xbf16>, vector<48x32xf32> -> vector<48x32xf32>
    %66 = arith.truncf %59 : vector<48x8xf32> to vector<48x8xbf16>
    %67 = arith.truncf %62 : vector<48x8xf32> to vector<48x8xbf16>
    %cst_51 = arith.constant dense<0.000000e+00> : vector<48x48xf32>
    %68 = tpu.matmul %66, %67, %cst_51 {dimension_numbers = #tpu.dot_dimension_numbers<[1], [1], [0], [0], [0, 0, 1, 0], [], []>} : vector<48x8xbf16>, vector<48x8xbf16>, vector<48x48xf32> -> vector<48x48xf32>
    %69 = arith.addf %68, %0 : vector<48x48xf32>
    %cst_52 = arith.constant dense<0xFF800000> : vector<48xf32>
    %70 = vector.multi_reduction <maximumf>, %69, %cst_52 [1] : vector<48x48xf32> to vector<48xf32>
    %71 = vector.shape_cast %70 : vector<48xf32> to vector<48x1xf32>
    %72 = vector.broadcast %71 : vector<48x1xf32> to vector<48x48xf32>
    %73 = arith.subf %69, %72 : vector<48x48xf32>
    %74 = math.exp %73 : vector<48x48xf32>
    %cst_53 = arith.constant dense<0.000000e+00> : vector<48xf32>
    %75 = vector.multi_reduction <add>, %74, %cst_53 [1] : vector<48x48xf32> to vector<48xf32>
    %76 = vector.shape_cast %75 : vector<48xf32> to vector<48x1xf32>
    %77 = tpu.reciprocal %76 {approx = true} : vector<48x1xf32> -> vector<48x1xf32>
    %78 = vector.broadcast %77 : vector<48x1xf32> to vector<48x48xf32>
    %79 = arith.mulf %74, %78 : vector<48x48xf32>
    %80 = arith.truncf %79 : vector<48x48xf32> to vector<48x48xbf16>
    %81 = arith.truncf %65 : vector<48x32xf32> to vector<48x32xbf16>
    %cst_54 = arith.constant dense<0.000000e+00> : vector<48x32xf32>
    %82 = tpu.matmul %80, %81, %cst_54 {dimension_numbers = #tpu.dot_dimension_numbers<[1], [0], [0], [1], [0, 0, 1, 1], [], []>} : vector<48x48xbf16>, vector<48x32xbf16>, vector<48x32xf32> -> vector<48x32xf32>
    %83 = arith.addf %56, %82 : vector<48x32xf32>
    %84 = arith.addf %5, %83 : vector<48x32xf32>
    %c0_55 = arith.constant 0 : index
    %c0_56 = arith.constant 0 : index
    %c0_57 = arith.constant 0 : index
    %85 = vector.load %arg11[%c0_55, %c0_56, %c0_57] : memref<2x1x32xf32, #tpu.memory_space<vmem>>, vector<1x1x32xf32>
    %86 = vector.shape_cast %85 : vector<1x1x32xf32> to vector<1x32xf32>
    %87 = vector.broadcast %86 : vector<1x32xf32> to vector<48x32xf32>
    %88 = arith.addf %84, %87 : vector<48x32xf32>
    %c0_58 = arith.constant 0 : index
    %c0_59 = arith.constant 0 : index
    %c0_60 = arith.constant 0 : index
    %89 = vector.load %arg12[%c0_58, %c0_59, %c0_60] : memref<2x1x32xf32, #tpu.memory_space<vmem>>, vector<1x1x32xf32>
    %90 = vector.shape_cast %89 : vector<1x1x32xf32> to vector<1x32xf32>
    %c0_61 = arith.constant 0 : index
    %c0_62 = arith.constant 0 : index
    %c0_63 = arith.constant 0 : index
    %91 = vector.load %arg13[%c0_61, %c0_62, %c0_63] : memref<2x1x32xf32, #tpu.memory_space<vmem>>, vector<1x1x32xf32>
    %92 = vector.shape_cast %91 : vector<1x1x32xf32> to vector<1x32xf32>
    %cst_64 = arith.constant dense<0.000000e+00> : vector<48xf32>
    %93 = vector.multi_reduction <add>, %88, %cst_64 [1] : vector<48x32xf32> to vector<48xf32>
    %94 = vector.shape_cast %93 : vector<48xf32> to vector<48x1xf32>
    %cst_65 = arith.constant 3.200000e+01 : f32
    %95 = vector.broadcast %cst_65 : f32 to vector<48x1xf32>
    %96 = arith.divf %94, %95 : vector<48x1xf32>
    %97 = vector.broadcast %96 : vector<48x1xf32> to vector<48x32xf32>
    %98 = arith.subf %88, %97 : vector<48x32xf32>
    %99 = arith.mulf %98, %98 : vector<48x32xf32>
    %cst_66 = arith.constant dense<0.000000e+00> : vector<48xf32>
    %100 = vector.multi_reduction <add>, %99, %cst_66 [1] : vector<48x32xf32> to vector<48xf32>
    %101 = vector.shape_cast %100 : vector<48xf32> to vector<48x1xf32>
    %cst_67 = arith.constant 3.200000e+01 : f32
    %102 = vector.broadcast %cst_67 : f32 to vector<48x1xf32>
    %103 = arith.divf %101, %102 : vector<48x1xf32>
    %cst_68 = arith.constant 9.99999974E-6 : f32
    %104 = vector.broadcast %cst_68 : f32 to vector<48x1xf32>
    %105 = arith.addf %103, %104 : vector<48x1xf32>
    %106 = math.rsqrt %105 : vector<48x1xf32>
    %107 = vector.broadcast %106 : vector<48x1xf32> to vector<48x32xf32>
    %108 = arith.mulf %98, %107 : vector<48x32xf32>
    %109 = vector.broadcast %90 : vector<1x32xf32> to vector<48x32xf32>
    %110 = arith.mulf %108, %109 : vector<48x32xf32>
    %111 = vector.broadcast %92 : vector<1x32xf32> to vector<48x32xf32>
    %112 = arith.addf %110, %111 : vector<48x32xf32>
    %113 = arith.truncf %112 : vector<48x32xf32> to vector<48x32xbf16>
    %c0_69 = arith.constant 0 : index
    %c0_70 = arith.constant 0 : index
    %c0_71 = arith.constant 0 : index
    %114 = vector.load %arg14[%c0_69, %c0_70, %c0_71] : memref<2x32x64xbf16, #tpu.memory_space<vmem>>, vector<1x32x64xbf16>
    %115 = vector.shape_cast %114 : vector<1x32x64xbf16> to vector<32x64xbf16>
    %cst_72 = arith.constant dense<0.000000e+00> : vector<48x64xf32>
    %116 = tpu.matmul %113, %115, %cst_72 {dimension_numbers = #tpu.dot_dimension_numbers<[1], [0], [0], [1], [0, 0, 1, 1], [], []>} : vector<48x32xbf16>, vector<32x64xbf16>, vector<48x64xf32> -> vector<48x64xf32>
    %c0_73 = arith.constant 0 : index
    %c0_74 = arith.constant 0 : index
    %c0_75 = arith.constant 0 : index
    %117 = vector.load %arg15[%c0_73, %c0_74, %c0_75] : memref<2x1x64xf32, #tpu.memory_space<vmem>>, vector<1x1x64xf32>
    %118 = vector.shape_cast %117 : vector<1x1x64xf32> to vector<1x64xf32>
    %119 = vector.broadcast %118 : vector<1x64xf32> to vector<48x64xf32>
    %120 = arith.addf %116, %119 : vector<48x64xf32>
    %cst_76 = arith.constant 5.000000e-01 : f32
    %121 = vector.broadcast %cst_76 : f32 to vector<48x64xf32>
    %122 = arith.mulf %121, %120 : vector<48x64xf32>
    %cst_77 = arith.constant 0.707106769 : f32
    %123 = vector.broadcast %cst_77 : f32 to vector<48x64xf32>
    %124 = arith.mulf %120, %123 : vector<48x64xf32>
    %125 = math.erf %124 : vector<48x64xf32>
    %cst_78 = arith.constant 1.000000e+00 : f32
    %126 = vector.broadcast %cst_78 : f32 to vector<48x64xf32>
    %127 = arith.addf %126, %125 : vector<48x64xf32>
    %128 = arith.mulf %122, %127 : vector<48x64xf32>
    %129 = arith.truncf %128 : vector<48x64xf32> to vector<48x64xbf16>
    %c0_79 = arith.constant 0 : index
    %c0_80 = arith.constant 0 : index
    %c0_81 = arith.constant 0 : index
    %130 = vector.load %arg16[%c0_79, %c0_80, %c0_81] : memref<2x64x32xbf16, #tpu.memory_space<vmem>>, vector<1x64x32xbf16>
    %131 = vector.shape_cast %130 : vector<1x64x32xbf16> to vector<64x32xbf16>
    %cst_82 = arith.constant dense<0.000000e+00> : vector<48x32xf32>
    %132 = tpu.matmul %129, %131, %cst_82 {dimension_numbers = #tpu.dot_dimension_numbers<[1], [0], [0], [1], [0, 0, 1, 1], [], []>} : vector<48x64xbf16>, vector<64x32xbf16>, vector<48x32xf32> -> vector<48x32xf32>
    %c0_83 = arith.constant 0 : index
    %c0_84 = arith.constant 0 : index
    %c0_85 = arith.constant 0 : index
    %133 = vector.load %arg17[%c0_83, %c0_84, %c0_85] : memref<2x1x32xf32, #tpu.memory_space<vmem>>, vector<1x1x32xf32>
    %134 = vector.shape_cast %133 : vector<1x1x32xf32> to vector<1x32xf32>
    %135 = vector.broadcast %134 : vector<1x32xf32> to vector<48x32xf32>
    %136 = arith.addf %132, %135 : vector<48x32xf32>
    %137 = arith.addf %88, %136 : vector<48x32xf32>
    %c1_86 = arith.constant 1 : index
    %c0_87 = arith.constant 0 : index
    %c0_88 = arith.constant 0 : index
    %138 = vector.load %arg6[%c1_86, %c0_87, %c0_88] : memref<2x1x32xf32, #tpu.memory_space<vmem>>, vector<1x1x32xf32>
    %139 = vector.shape_cast %138 : vector<1x1x32xf32> to vector<1x32xf32>
    %c1_89 = arith.constant 1 : index
    %c0_90 = arith.constant 0 : index
    %c0_91 = arith.constant 0 : index
    %140 = vector.load %arg7[%c1_89, %c0_90, %c0_91] : memref<2x1x32xf32, #tpu.memory_space<vmem>>, vector<1x1x32xf32>
    %141 = vector.shape_cast %140 : vector<1x1x32xf32> to vector<1x32xf32>
    %cst_92 = arith.constant dense<0.000000e+00> : vector<48xf32>
    %142 = vector.multi_reduction <add>, %137, %cst_92 [1] : vector<48x32xf32> to vector<48xf32>
    %143 = vector.shape_cast %142 : vector<48xf32> to vector<48x1xf32>
    %cst_93 = arith.constant 3.200000e+01 : f32
    %144 = vector.broadcast %cst_93 : f32 to vector<48x1xf32>
    %145 = arith.divf %143, %144 : vector<48x1xf32>
    %146 = vector.broadcast %145 : vector<48x1xf32> to vector<48x32xf32>
    %147 = arith.subf %137, %146 : vector<48x32xf32>
    %148 = arith.mulf %147, %147 : vector<48x32xf32>
    %cst_94 = arith.constant dense<0.000000e+00> : vector<48xf32>
    %149 = vector.multi_reduction <add>, %148, %cst_94 [1] : vector<48x32xf32> to vector<48xf32>
    %150 = vector.shape_cast %149 : vector<48xf32> to vector<48x1xf32>
    %cst_95 = arith.constant 3.200000e+01 : f32
    %151 = vector.broadcast %cst_95 : f32 to vector<48x1xf32>
    %152 = arith.divf %150, %151 : vector<48x1xf32>
    %cst_96 = arith.constant 9.99999974E-6 : f32
    %153 = vector.broadcast %cst_96 : f32 to vector<48x1xf32>
    %154 = arith.addf %152, %153 : vector<48x1xf32>
    %155 = math.rsqrt %154 : vector<48x1xf32>
    %156 = vector.broadcast %155 : vector<48x1xf32> to vector<48x32xf32>
    %157 = arith.mulf %147, %156 : vector<48x32xf32>
    %158 = vector.broadcast %139 : vector<1x32xf32> to vector<48x32xf32>
    %159 = arith.mulf %157, %158 : vector<48x32xf32>
    %160 = vector.broadcast %141 : vector<1x32xf32> to vector<48x32xf32>
    %161 = arith.addf %159, %160 : vector<48x32xf32>
    %162 = arith.truncf %161 : vector<48x32xf32> to vector<48x32xbf16>
    %c1_97 = arith.constant 1 : index
    %c0_98 = arith.constant 0 : index
    %c0_99 = arith.constant 0 : index
    %c0_100 = arith.constant 0 : index
    %163 = vector.load %arg8[%c1_97, %c0_98, %c0_99, %c0_100] : memref<2x2x32x8xbf16, #tpu.memory_space<vmem>>, vector<1x1x32x8xbf16>
    %164 = vector.shape_cast %163 : vector<1x1x32x8xbf16> to vector<32x8xbf16>
    %cst_101 = arith.constant dense<0.000000e+00> : vector<48x8xf32>
    %165 = tpu.matmul %162, %164, %cst_101 {dimension_numbers = #tpu.dot_dimension_numbers<[1], [0], [0], [1], [0, 0, 1, 1], [], []>} : vector<48x32xbf16>, vector<32x8xbf16>, vector<48x8xf32> -> vector<48x8xf32>
    %c1_102 = arith.constant 1 : index
    %c0_103 = arith.constant 0 : index
    %c0_104 = arith.constant 0 : index
    %c0_105 = arith.constant 0 : index
    %166 = vector.load %arg9[%c1_102, %c0_103, %c0_104, %c0_105] : memref<2x2x32x8xbf16, #tpu.memory_space<vmem>>, vector<1x1x32x8xbf16>
    %167 = vector.shape_cast %166 : vector<1x1x32x8xbf16> to vector<32x8xbf16>
    %cst_106 = arith.constant dense<0.000000e+00> : vector<48x8xf32>
    %168 = tpu.matmul %162, %167, %cst_106 {dimension_numbers = #tpu.dot_dimension_numbers<[1], [0], [0], [1], [0, 0, 1, 1], [], []>} : vector<48x32xbf16>, vector<32x8xbf16>, vector<48x8xf32> -> vector<48x8xf32>
    %c1_107 = arith.constant 1 : index
    %c0_108 = arith.constant 0 : index
    %c0_109 = arith.constant 0 : index
    %c0_110 = arith.constant 0 : index
    %169 = vector.load %arg10[%c1_107, %c0_108, %c0_109, %c0_110] : memref<2x2x32x32xbf16, #tpu.memory_space<vmem>>, vector<1x1x32x32xbf16>
    %170 = vector.shape_cast %169 : vector<1x1x32x32xbf16> to vector<32x32xbf16>
    %cst_111 = arith.constant dense<0.000000e+00> : vector<48x32xf32>
    %171 = tpu.matmul %162, %170, %cst_111 {dimension_numbers = #tpu.dot_dimension_numbers<[1], [0], [0], [1], [0, 0, 1, 1], [], []>} : vector<48x32xbf16>, vector<32x32xbf16>, vector<48x32xf32> -> vector<48x32xf32>
    %172 = arith.truncf %165 : vector<48x8xf32> to vector<48x8xbf16>
    %173 = arith.truncf %168 : vector<48x8xf32> to vector<48x8xbf16>
    %cst_112 = arith.constant dense<0.000000e+00> : vector<48x48xf32>
    %174 = tpu.matmul %172, %173, %cst_112 {dimension_numbers = #tpu.dot_dimension_numbers<[1], [1], [0], [0], [0, 0, 1, 0], [], []>} : vector<48x8xbf16>, vector<48x8xbf16>, vector<48x48xf32> -> vector<48x48xf32>
    %175 = arith.addf %174, %0 : vector<48x48xf32>
    %cst_113 = arith.constant dense<0xFF800000> : vector<48xf32>
    %176 = vector.multi_reduction <maximumf>, %175, %cst_113 [1] : vector<48x48xf32> to vector<48xf32>
    %177 = vector.shape_cast %176 : vector<48xf32> to vector<48x1xf32>
    %178 = vector.broadcast %177 : vector<48x1xf32> to vector<48x48xf32>
    %179 = arith.subf %175, %178 : vector<48x48xf32>
    %180 = math.exp %179 : vector<48x48xf32>
    %cst_114 = arith.constant dense<0.000000e+00> : vector<48xf32>
    %181 = vector.multi_reduction <add>, %180, %cst_114 [1] : vector<48x48xf32> to vector<48xf32>
    %182 = vector.shape_cast %181 : vector<48xf32> to vector<48x1xf32>
    %183 = tpu.reciprocal %182 {approx = true} : vector<48x1xf32> -> vector<48x1xf32>
    %184 = vector.broadcast %183 : vector<48x1xf32> to vector<48x48xf32>
    %185 = arith.mulf %180, %184 : vector<48x48xf32>
    %186 = arith.truncf %185 : vector<48x48xf32> to vector<48x48xbf16>
    %187 = arith.truncf %171 : vector<48x32xf32> to vector<48x32xbf16>
    %cst_115 = arith.constant dense<0.000000e+00> : vector<48x32xf32>
    %188 = tpu.matmul %186, %187, %cst_115 {dimension_numbers = #tpu.dot_dimension_numbers<[1], [0], [0], [1], [0, 0, 1, 1], [], []>} : vector<48x48xbf16>, vector<48x32xbf16>, vector<48x32xf32> -> vector<48x32xf32>
    %c1_116 = arith.constant 1 : index
    %c1_117 = arith.constant 1 : index
    %c0_118 = arith.constant 0 : index
    %c0_119 = arith.constant 0 : index
    %189 = vector.load %arg8[%c1_116, %c1_117, %c0_118, %c0_119] : memref<2x2x32x8xbf16, #tpu.memory_space<vmem>>, vector<1x1x32x8xbf16>
    %190 = vector.shape_cast %189 : vector<1x1x32x8xbf16> to vector<32x8xbf16>
    %cst_120 = arith.constant dense<0.000000e+00> : vector<48x8xf32>
    %191 = tpu.matmul %162, %190, %cst_120 {dimension_numbers = #tpu.dot_dimension_numbers<[1], [0], [0], [1], [0, 0, 1, 1], [], []>} : vector<48x32xbf16>, vector<32x8xbf16>, vector<48x8xf32> -> vector<48x8xf32>
    %c1_121 = arith.constant 1 : index
    %c1_122 = arith.constant 1 : index
    %c0_123 = arith.constant 0 : index
    %c0_124 = arith.constant 0 : index
    %192 = vector.load %arg9[%c1_121, %c1_122, %c0_123, %c0_124] : memref<2x2x32x8xbf16, #tpu.memory_space<vmem>>, vector<1x1x32x8xbf16>
    %193 = vector.shape_cast %192 : vector<1x1x32x8xbf16> to vector<32x8xbf16>
    %cst_125 = arith.constant dense<0.000000e+00> : vector<48x8xf32>
    %194 = tpu.matmul %162, %193, %cst_125 {dimension_numbers = #tpu.dot_dimension_numbers<[1], [0], [0], [1], [0, 0, 1, 1], [], []>} : vector<48x32xbf16>, vector<32x8xbf16>, vector<48x8xf32> -> vector<48x8xf32>
    %c1_126 = arith.constant 1 : index
    %c1_127 = arith.constant 1 : index
    %c0_128 = arith.constant 0 : index
    %c0_129 = arith.constant 0 : index
    %195 = vector.load %arg10[%c1_126, %c1_127, %c0_128, %c0_129] : memref<2x2x32x32xbf16, #tpu.memory_space<vmem>>, vector<1x1x32x32xbf16>
    %196 = vector.shape_cast %195 : vector<1x1x32x32xbf16> to vector<32x32xbf16>
    %cst_130 = arith.constant dense<0.000000e+00> : vector<48x32xf32>
    %197 = tpu.matmul %162, %196, %cst_130 {dimension_numbers = #tpu.dot_dimension_numbers<[1], [0], [0], [1], [0, 0, 1, 1], [], []>} : vector<48x32xbf16>, vector<32x32xbf16>, vector<48x32xf32> -> vector<48x32xf32>
    %198 = arith.truncf %191 : vector<48x8xf32> to vector<48x8xbf16>
    %199 = arith.truncf %194 : vector<48x8xf32> to vector<48x8xbf16>
    %cst_131 = arith.constant dense<0.000000e+00> : vector<48x48xf32>
    %200 = tpu.matmul %198, %199, %cst_131 {dimension_numbers = #tpu.dot_dimension_numbers<[1], [1], [0], [0], [0, 0, 1, 0], [], []>} : vector<48x8xbf16>, vector<48x8xbf16>, vector<48x48xf32> -> vector<48x48xf32>
    %201 = arith.addf %200, %0 : vector<48x48xf32>
    %cst_132 = arith.constant dense<0xFF800000> : vector<48xf32>
    %202 = vector.multi_reduction <maximumf>, %201, %cst_132 [1] : vector<48x48xf32> to vector<48xf32>
    %203 = vector.shape_cast %202 : vector<48xf32> to vector<48x1xf32>
    %204 = vector.broadcast %203 : vector<48x1xf32> to vector<48x48xf32>
    %205 = arith.subf %201, %204 : vector<48x48xf32>
    %206 = math.exp %205 : vector<48x48xf32>
    %cst_133 = arith.constant dense<0.000000e+00> : vector<48xf32>
    %207 = vector.multi_reduction <add>, %206, %cst_133 [1] : vector<48x48xf32> to vector<48xf32>
    %208 = vector.shape_cast %207 : vector<48xf32> to vector<48x1xf32>
    %209 = tpu.reciprocal %208 {approx = true} : vector<48x1xf32> -> vector<48x1xf32>
    %210 = vector.broadcast %209 : vector<48x1xf32> to vector<48x48xf32>
    %211 = arith.mulf %206, %210 : vector<48x48xf32>
    %212 = arith.truncf %211 : vector<48x48xf32> to vector<48x48xbf16>
    %213 = arith.truncf %197 : vector<48x32xf32> to vector<48x32xbf16>
    %cst_134 = arith.constant dense<0.000000e+00> : vector<48x32xf32>
    %214 = tpu.matmul %212, %213, %cst_134 {dimension_numbers = #tpu.dot_dimension_numbers<[1], [0], [0], [1], [0, 0, 1, 1], [], []>} : vector<48x48xbf16>, vector<48x32xbf16>, vector<48x32xf32> -> vector<48x32xf32>
    %215 = arith.addf %188, %214 : vector<48x32xf32>
    %216 = arith.addf %137, %215 : vector<48x32xf32>
    %c1_135 = arith.constant 1 : index
    %c0_136 = arith.constant 0 : index
    %c0_137 = arith.constant 0 : index
    %217 = vector.load %arg11[%c1_135, %c0_136, %c0_137] : memref<2x1x32xf32, #tpu.memory_space<vmem>>, vector<1x1x32xf32>
    %218 = vector.shape_cast %217 : vector<1x1x32xf32> to vector<1x32xf32>
    %219 = vector.broadcast %218 : vector<1x32xf32> to vector<48x32xf32>
    %220 = arith.addf %216, %219 : vector<48x32xf32>
    %c1_138 = arith.constant 1 : index
    %c0_139 = arith.constant 0 : index
    %c0_140 = arith.constant 0 : index
    %221 = vector.load %arg12[%c1_138, %c0_139, %c0_140] : memref<2x1x32xf32, #tpu.memory_space<vmem>>, vector<1x1x32xf32>
    %222 = vector.shape_cast %221 : vector<1x1x32xf32> to vector<1x32xf32>
    %c1_141 = arith.constant 1 : index
    %c0_142 = arith.constant 0 : index
    %c0_143 = arith.constant 0 : index
    %223 = vector.load %arg13[%c1_141, %c0_142, %c0_143] : memref<2x1x32xf32, #tpu.memory_space<vmem>>, vector<1x1x32xf32>
    %224 = vector.shape_cast %223 : vector<1x1x32xf32> to vector<1x32xf32>
    %cst_144 = arith.constant dense<0.000000e+00> : vector<48xf32>
    %225 = vector.multi_reduction <add>, %220, %cst_144 [1] : vector<48x32xf32> to vector<48xf32>
    %226 = vector.shape_cast %225 : vector<48xf32> to vector<48x1xf32>
    %cst_145 = arith.constant 3.200000e+01 : f32
    %227 = vector.broadcast %cst_145 : f32 to vector<48x1xf32>
    %228 = arith.divf %226, %227 : vector<48x1xf32>
    %229 = vector.broadcast %228 : vector<48x1xf32> to vector<48x32xf32>
    %230 = arith.subf %220, %229 : vector<48x32xf32>
    %231 = arith.mulf %230, %230 : vector<48x32xf32>
    %cst_146 = arith.constant dense<0.000000e+00> : vector<48xf32>
    %232 = vector.multi_reduction <add>, %231, %cst_146 [1] : vector<48x32xf32> to vector<48xf32>
    %233 = vector.shape_cast %232 : vector<48xf32> to vector<48x1xf32>
    %cst_147 = arith.constant 3.200000e+01 : f32
    %234 = vector.broadcast %cst_147 : f32 to vector<48x1xf32>
    %235 = arith.divf %233, %234 : vector<48x1xf32>
    %cst_148 = arith.constant 9.99999974E-6 : f32
    %236 = vector.broadcast %cst_148 : f32 to vector<48x1xf32>
    %237 = arith.addf %235, %236 : vector<48x1xf32>
    %238 = math.rsqrt %237 : vector<48x1xf32>
    %239 = vector.broadcast %238 : vector<48x1xf32> to vector<48x32xf32>
    %240 = arith.mulf %230, %239 : vector<48x32xf32>
    %241 = vector.broadcast %222 : vector<1x32xf32> to vector<48x32xf32>
    %242 = arith.mulf %240, %241 : vector<48x32xf32>
    %243 = vector.broadcast %224 : vector<1x32xf32> to vector<48x32xf32>
    %244 = arith.addf %242, %243 : vector<48x32xf32>
    %245 = arith.truncf %244 : vector<48x32xf32> to vector<48x32xbf16>
    %c1_149 = arith.constant 1 : index
    %c0_150 = arith.constant 0 : index
    %c0_151 = arith.constant 0 : index
    %246 = vector.load %arg14[%c1_149, %c0_150, %c0_151] : memref<2x32x64xbf16, #tpu.memory_space<vmem>>, vector<1x32x64xbf16>
    %247 = vector.shape_cast %246 : vector<1x32x64xbf16> to vector<32x64xbf16>
    %cst_152 = arith.constant dense<0.000000e+00> : vector<48x64xf32>
    %248 = tpu.matmul %245, %247, %cst_152 {dimension_numbers = #tpu.dot_dimension_numbers<[1], [0], [0], [1], [0, 0, 1, 1], [], []>} : vector<48x32xbf16>, vector<32x64xbf16>, vector<48x64xf32> -> vector<48x64xf32>
    %c1_153 = arith.constant 1 : index
    %c0_154 = arith.constant 0 : index
    %c0_155 = arith.constant 0 : index
    %249 = vector.load %arg15[%c1_153, %c0_154, %c0_155] : memref<2x1x64xf32, #tpu.memory_space<vmem>>, vector<1x1x64xf32>
    %250 = vector.shape_cast %249 : vector<1x1x64xf32> to vector<1x64xf32>
    %251 = vector.broadcast %250 : vector<1x64xf32> to vector<48x64xf32>
    %252 = arith.addf %248, %251 : vector<48x64xf32>
    %cst_156 = arith.constant 5.000000e-01 : f32
    %253 = vector.broadcast %cst_156 : f32 to vector<48x64xf32>
    %254 = arith.mulf %253, %252 : vector<48x64xf32>
    %cst_157 = arith.constant 0.707106769 : f32
    %255 = vector.broadcast %cst_157 : f32 to vector<48x64xf32>
    %256 = arith.mulf %252, %255 : vector<48x64xf32>
    %257 = math.erf %256 : vector<48x64xf32>
    %cst_158 = arith.constant 1.000000e+00 : f32
    %258 = vector.broadcast %cst_158 : f32 to vector<48x64xf32>
    %259 = arith.addf %258, %257 : vector<48x64xf32>
    %260 = arith.mulf %254, %259 : vector<48x64xf32>
    %261 = arith.truncf %260 : vector<48x64xf32> to vector<48x64xbf16>
    %c1_159 = arith.constant 1 : index
    %c0_160 = arith.constant 0 : index
    %c0_161 = arith.constant 0 : index
    %262 = vector.load %arg16[%c1_159, %c0_160, %c0_161] : memref<2x64x32xbf16, #tpu.memory_space<vmem>>, vector<1x64x32xbf16>
    %263 = vector.shape_cast %262 : vector<1x64x32xbf16> to vector<64x32xbf16>
    %cst_162 = arith.constant dense<0.000000e+00> : vector<48x32xf32>
    %264 = tpu.matmul %261, %263, %cst_162 {dimension_numbers = #tpu.dot_dimension_numbers<[1], [0], [0], [1], [0, 0, 1, 1], [], []>} : vector<48x64xbf16>, vector<64x32xbf16>, vector<48x32xf32> -> vector<48x32xf32>
    %c1_163 = arith.constant 1 : index
    %c0_164 = arith.constant 0 : index
    %c0_165 = arith.constant 0 : index
    %265 = vector.load %arg17[%c1_163, %c0_164, %c0_165] : memref<2x1x32xf32, #tpu.memory_space<vmem>>, vector<1x1x32xf32>
    %266 = vector.shape_cast %265 : vector<1x1x32xf32> to vector<1x32xf32>
    %267 = vector.broadcast %266 : vector<1x32xf32> to vector<48x32xf32>
    %268 = arith.addf %264, %267 : vector<48x32xf32>
    %269 = arith.addf %220, %268 : vector<48x32xf32>
    %c0_166 = arith.constant 0 : index
    %c0_167 = arith.constant 0 : index
    %270 = vector.load %arg5[%c0_166, %c0_167] : memref<2x48xf32, #tpu.memory_space<vmem>>, vector<2x48xf32>
    %cst_168 = arith.constant dense<0.000000e+00> : vector<2x32xf32>
    %271 = tpu.matmul %270, %269, %cst_168 {dimension_numbers = #tpu.dot_dimension_numbers<[1], [0], [0], [1], [0, 0, 1, 1], [], []>} : vector<2x48xf32>, vector<48x32xf32>, vector<2x32xf32> -> vector<2x32xf32>
    %c0_169 = arith.constant 0 : index
    %c0_170 = arith.constant 0 : index
    %272 = vector.load %arg18[%c0_169, %c0_170] : memref<1x32xf32, #tpu.memory_space<vmem>>, vector<1x32xf32>
    %c0_171 = arith.constant 0 : index
    %c0_172 = arith.constant 0 : index
    %273 = vector.load %arg19[%c0_171, %c0_172] : memref<1x32xf32, #tpu.memory_space<vmem>>, vector<1x32xf32>
    %cst_173 = arith.constant dense<0.000000e+00> : vector<2xf32>
    %274 = vector.multi_reduction <add>, %271, %cst_173 [1] : vector<2x32xf32> to vector<2xf32>
    %275 = vector.shape_cast %274 : vector<2xf32> to vector<2x1xf32>
    %cst_174 = arith.constant 3.200000e+01 : f32
    %276 = vector.broadcast %cst_174 : f32 to vector<2x1xf32>
    %277 = arith.divf %275, %276 : vector<2x1xf32>
    %278 = vector.broadcast %277 : vector<2x1xf32> to vector<2x32xf32>
    %279 = arith.subf %271, %278 : vector<2x32xf32>
    %280 = arith.mulf %279, %279 : vector<2x32xf32>
    %cst_175 = arith.constant dense<0.000000e+00> : vector<2xf32>
    %281 = vector.multi_reduction <add>, %280, %cst_175 [1] : vector<2x32xf32> to vector<2xf32>
    %282 = vector.shape_cast %281 : vector<2xf32> to vector<2x1xf32>
    %cst_176 = arith.constant 3.200000e+01 : f32
    %283 = vector.broadcast %cst_176 : f32 to vector<2x1xf32>
    %284 = arith.divf %282, %283 : vector<2x1xf32>
    %cst_177 = arith.constant 9.99999974E-6 : f32
    %285 = vector.broadcast %cst_177 : f32 to vector<2x1xf32>
    %286 = arith.addf %284, %285 : vector<2x1xf32>
    %287 = math.rsqrt %286 : vector<2x1xf32>
    %288 = vector.broadcast %287 : vector<2x1xf32> to vector<2x32xf32>
    %289 = arith.mulf %279, %288 : vector<2x32xf32>
    %290 = vector.broadcast %272 : vector<1x32xf32> to vector<2x32xf32>
    %291 = arith.mulf %289, %290 : vector<2x32xf32>
    %292 = vector.broadcast %273 : vector<1x32xf32> to vector<2x32xf32>
    %293 = arith.addf %291, %292 : vector<2x32xf32>
    %294 = arith.truncf %293 : vector<2x32xf32> to vector<2x32xbf16>
    %c0_178 = arith.constant 0 : index
    %c0_179 = arith.constant 0 : index
    %295 = vector.load %arg20[%c0_178, %c0_179] : memref<32x128xbf16, #tpu.memory_space<vmem>>, vector<32x128xbf16>
    %cst_180 = arith.constant dense<0.000000e+00> : vector<2x128xf32>
    %296 = tpu.matmul %294, %295, %cst_180 {dimension_numbers = #tpu.dot_dimension_numbers<[1], [0], [0], [1], [0, 0, 1, 1], [], []>} : vector<2x32xbf16>, vector<32x128xbf16>, vector<2x128xf32> -> vector<2x128xf32>
    %c0_181 = arith.constant 0 : index
    %c0_182 = arith.constant 0 : index
    %297 = vector.load %arg21[%c0_181, %c0_182] : memref<1x128xf32, #tpu.memory_space<vmem>>, vector<1x128xf32>
    %298 = vector.broadcast %297 : vector<1x128xf32> to vector<2x128xf32>
    %299 = arith.addf %296, %298 : vector<2x128xf32>
    %c0_183 = arith.constant 0 : index
    %c0_184 = arith.constant 0 : index
    %300 = vector.load %arg22[%c0_183, %c0_184] : memref<2x128xf32, #tpu.memory_space<vmem>>, vector<2x128xf32>
    tpu.vector_store %arg22[%c0_183, %c0_184], %299 {strides = array<i32>} : memref<2x128xf32, #tpu.memory_space<vmem>>, vector<2x128xf32>,
    return
  }
  func.func @transform_0(%arg0: i32) -> (i32, i32) {
    %c0_i32 = arith.constant 0 : i32
    %c0_i32_0 = arith.constant 0 : i32
    return %arg0, %c0_i32 : i32, i32
  }
  func.func @transform_1(%arg0: i32) -> (i32, i32) {
    %c0_i32 = arith.constant 0 : i32
    %c0_i32_0 = arith.constant 0 : i32
    %c0_i32_1 = arith.constant 0 : i32
    return %c0_i32, %c0_i32_0 : i32, i32
  }
  func.func @transform_2(%arg0: i32) -> (i32, i32) {
    %c0_i32 = arith.constant 0 : i32
    %c0_i32_0 = arith.constant 0 : i32
    %c0_i32_1 = arith.constant 0 : i32
    return %c0_i32, %c0_i32_0 : i32, i32
  }
  func.func @transform_3(%arg0: i32) -> (i32, i32) {
    %c0_i32 = arith.constant 0 : i32
    %c0_i32_0 = arith.constant 0 : i32
    %c0_i32_1 = arith.constant 0 : i32
    return %c0_i32, %c0_i32_0 : i32, i32
  }
  func.func @transform_4(%arg0: i32) -> (i32, i32) {
    %c0_i32 = arith.constant 0 : i32
    %c0_i32_0 = arith.constant 0 : i32
    %c0_i32_1 = arith.constant 0 : i32
    return %c0_i32, %c0_i32_0 : i32, i32
  }
  func.func @transform_5(%arg0: i32) -> (i32, i32, i32) {
    %c0_i32 = arith.constant 0 : i32
    %c0_i32_0 = arith.constant 0 : i32
    %c0_i32_1 = arith.constant 0 : i32
    %c0_i32_2 = arith.constant 0 : i32
    return %c0_i32, %c0_i32_0, %c0_i32_1 : i32, i32, i32
  }
  func.func @transform_6(%arg0: i32) -> (i32, i32, i32) {
    %c0_i32 = arith.constant 0 : i32
    %c0_i32_0 = arith.constant 0 : i32
    %c0_i32_1 = arith.constant 0 : i32
    %c0_i32_2 = arith.constant 0 : i32
    return %c0_i32, %c0_i32_0, %c0_i32_1 : i32, i32, i32
  }
  func.func @transform_7(%arg0: i32) -> (i32, i32, i32, i32) {
    %c0_i32 = arith.constant 0 : i32
    %c0_i32_0 = arith.constant 0 : i32
    %c0_i32_1 = arith.constant 0 : i32
    %c0_i32_2 = arith.constant 0 : i32
    %c0_i32_3 = arith.constant 0 : i32
    return %c0_i32, %c0_i32_0, %c0_i32_1, %c0_i32_2 : i32, i32, i32, i32
  }
  func.func @transform_8(%arg0: i32) -> (i32, i32, i32, i32) {
    %c0_i32 = arith.constant 0 : i32
    %c0_i32_0 = arith.constant 0 : i32
    %c0_i32_1 = arith.constant 0 : i32
    %c0_i32_2 = arith.constant 0 : i32
    %c0_i32_3 = arith.constant 0 : i32
    return %c0_i32, %c0_i32_0, %c0_i32_1, %c0_i32_2 : i32, i32, i32, i32
  }
  func.func @transform_9(%arg0: i32) -> (i32, i32, i32, i32) {
    %c0_i32 = arith.constant 0 : i32
    %c0_i32_0 = arith.constant 0 : i32
    %c0_i32_1 = arith.constant 0 : i32
    %c0_i32_2 = arith.constant 0 : i32
    %c0_i32_3 = arith.constant 0 : i32
    return %c0_i32, %c0_i32_0, %c0_i32_1, %c0_i32_2 : i32, i32, i32, i32
  }
  func.func @transform_10(%arg0: i32) -> (i32, i32, i32) {
    %c0_i32 = arith.constant 0 : i32
    %c0_i32_0 = arith.constant 0 : i32
    %c0_i32_1 = arith.constant 0 : i32
    %c0_i32_2 = arith.constant 0 : i32
    return %c0_i32, %c0_i32_0, %c0_i32_1 : i32, i32, i32
  }
  func.func @transform_11(%arg0: i32) -> (i32, i32, i32) {
    %c0_i32 = arith.constant 0 : i32
    %c0_i32_0 = arith.constant 0 : i32
    %c0_i32_1 = arith.constant 0 : i32
    %c0_i32_2 = arith.constant 0 : i32
    return %c0_i32, %c0_i32_0, %c0_i32_1 : i32, i32, i32
  }
  func.func @transform_12(%arg0: i32) -> (i32, i32, i32) {
    %c0_i32 = arith.constant 0 : i32
    %c0_i32_0 = arith.constant 0 : i32
    %c0_i32_1 = arith.constant 0 : i32
    %c0_i32_2 = arith.constant 0 : i32
    return %c0_i32, %c0_i32_0, %c0_i32_1 : i32, i32, i32
  }
  func.func @transform_13(%arg0: i32) -> (i32, i32, i32) {
    %c0_i32 = arith.constant 0 : i32
    %c0_i32_0 = arith.constant 0 : i32
    %c0_i32_1 = arith.constant 0 : i32
    %c0_i32_2 = arith.constant 0 : i32
    return %c0_i32, %c0_i32_0, %c0_i32_1 : i32, i32, i32
  }
  func.func @transform_14(%arg0: i32) -> (i32, i32, i32) {
    %c0_i32 = arith.constant 0 : i32
    %c0_i32_0 = arith.constant 0 : i32
    %c0_i32_1 = arith.constant 0 : i32
    %c0_i32_2 = arith.constant 0 : i32
    return %c0_i32, %c0_i32_0, %c0_i32_1 : i32, i32, i32
  }
  func.func @transform_15(%arg0: i32) -> (i32, i32, i32) {
    %c0_i32 = arith.constant 0 : i32
    %c0_i32_0 = arith.constant 0 : i32
    %c0_i32_1 = arith.constant 0 : i32
    %c0_i32_2 = arith.constant 0 : i32
    return %c0_i32, %c0_i32_0, %c0_i32_1 : i32, i32, i32
  }
  func.func @transform_16(%arg0: i32) -> (i32, i32, i32) {
    %c0_i32 = arith.constant 0 : i32
    %c0_i32_0 = arith.constant 0 : i32
    %c0_i32_1 = arith.constant 0 : i32
    %c0_i32_2 = arith.constant 0 : i32
    return %c0_i32, %c0_i32_0, %c0_i32_1 : i32, i32, i32
  }
  func.func @transform_17(%arg0: i32) -> (i32, i32) {
    %c0_i32 = arith.constant 0 : i32
    %c0_i32_0 = arith.constant 0 : i32
    %c0_i32_1 = arith.constant 0 : i32
    return %c0_i32, %c0_i32_0 : i32, i32
  }
  func.func @transform_18(%arg0: i32) -> (i32, i32) {
    %c0_i32 = arith.constant 0 : i32
    %c0_i32_0 = arith.constant 0 : i32
    %c0_i32_1 = arith.constant 0 : i32
    return %c0_i32, %c0_i32_0 : i32, i32
  }
  func.func @transform_19(%arg0: i32) -> (i32, i32) {
    %c0_i32 = arith.constant 0 : i32
    %c0_i32_0 = arith.constant 0 : i32
    %c0_i32_1 = arith.constant 0 : i32
    return %c0_i32, %c0_i32_0 : i32, i32
  }
  func.func @transform_20(%arg0: i32) -> (i32, i32) {
    %c0_i32 = arith.constant 0 : i32
    %c0_i32_0 = arith.constant 0 : i32
    %c0_i32_1 = arith.constant 0 : i32
    return %c0_i32, %c0_i32_0 : i32, i32
  }
  func.func @transform_21(%arg0: i32) -> (i32, i32) {
    %c0_i32 = arith.constant 0 : i32
    %c0_i32_0 = arith.constant 0 : i32
    return %arg0, %c0_i32 : i32, i32
  }
}

</mosaic_0001>

<llo_original>
// kernel: cropped_vit_forward.1
$region0: #{cropped_vit_forward.1}
  #allocation0 [shape = 'u32[]', space=smem, size = 0x4, offset = 0x4, fixed_abs, tag = 'smem constant byte address 0x4 - core index']
  #allocation1 [shape = 'u32[144,128]{1,0:T(1,128)}', space=vmem, size = 0x12000, scoped, tag = 'internal scratch']
  %s0 = inlined_call_operand.vmem [shape: bf16[48,128], index: 0, kind: input, shape index: {}]
  %s1 = inlined_call_operand.vmem [shape: bf16[128,32], index: 1, kind: input, shape index: {}]
  %s2 = inlined_call_operand.vmem [shape: f32[48,32], index: 2, kind: input, shape index: {}]
  %s3 = inlined_call_operand.vmem [shape: f32[48,48], index: 3, kind: input, shape index: {}]
  %s4 = inlined_call_operand.vmem [shape: f32[2,48], index: 4, kind: input, shape index: {}]
  %s5 = inlined_call_operand.vmem [shape: f32[2,1,32], index: 5, kind: input, shape index: {}]
  %s6 = inlined_call_operand.vmem [shape: f32[2,1,32], index: 6, kind: input, shape index: {}]
  %s7 = inlined_call_operand.vmem [shape: bf16[2,2,32,8], index: 7, kind: input, shape index: {}]
  %s8 = inlined_call_operand.vmem [shape: bf16[2,2,32,8], index: 8, kind: input, shape index: {}]
  %s9 = inlined_call_operand.vmem [shape: bf16[2,2,32,32], index: 9, kind: input, shape index: {}]
  %s10 = inlined_call_operand.vmem [shape: f32[2,1,32], index: 10, kind: input, shape index: {}]
  %s11 = inlined_call_operand.vmem [shape: f32[2,1,32], index: 11, kind: input, shape index: {}]
  %s12 = inlined_call_operand.vmem [shape: f32[2,1,32], index: 12, kind: input, shape index: {}]
  %s13 = inlined_call_operand.vmem [shape: bf16[2,32,64], index: 13, kind: input, shape index: {}]
  %s14 = inlined_call_operand.vmem [shape: f32[2,1,64], index: 14, kind: input, shape index: {}]
  %s15 = inlined_call_operand.vmem [shape: bf16[2,64,32], index: 15, kind: input, shape index: {}]
  %s16 = inlined_call_operand.vmem [shape: f32[2,1,32], index: 16, kind: input, shape index: {}]
  %s17 = inlined_call_operand.vmem [shape: f32[1,32], index: 17, kind: input, shape index: {}]
  %s18 = inlined_call_operand.vmem [shape: f32[1,32], index: 18, kind: input, shape index: {}]
  %s19 = inlined_call_operand.vmem [shape: bf16[32,128], index: 19, kind: input, shape index: {}]
  %s20 = inlined_call_operand.vmem [shape: f32[1,128], index: 20, kind: input, shape index: {}]
  %s21 = inlined_call_operand.hbm [shape: f32[2,128], index: 21, kind: output, shape index: {}]
  %s22 = sld [smem:[#allocation0]]
  $region94: #{cropped_vit_forward.1} parent=0
    _
  %s24 = ssub.s32 1, %s22
  %s25 = scalar_select 0, %s24, %s22
  $region1: #{cropped_vit_forward.1} parent=0
    #allocation2 [shape = 'u8[1024]{0}', space=vmem, size = 0x400, scoped, tag = 'output window, operand 0, single buffered']
    #allocation3 [shape = 's32[1]{0}', space=sflag, size = 0x4, scoped, tag = 'scoped memory for cropped_vit_forward.1']
    %26 = vsyncpa [#allocation3], 0
    // Predicated region
    $region2: #{cropped_vit_forward.1} parent=1 // pred_check
      _
    $region3: #{cropped_vit_forward.1} parent=1 // pred_check_branch
      %28 = sbr.rel (0) target = $region5
    $region4: #{cropped_vit_forward.1} parent=1 // pred_region
      _
    $region5: #{cropped_vit_forward.1} parent=1 // pred_fallthru
      _
    // Predicated region
    $region6: #{cropped_vit_forward.1} parent=1 // pred_check
      _
    $region7: #{cropped_vit_forward.1} parent=1 // pred_check_branch
      %30 = sbr.rel (0) target = $region9
    $region8: #{cropped_vit_forward.1} parent=1 // pred_region
      _
    $region9: #{cropped_vit_forward.1} parent=1 // pred_fallthru
      _
    // Predicated region
    $region10: #{cropped_vit_forward.1} parent=1 // pred_check
      _
    $region11: #{cropped_vit_forward.1} parent=1 // pred_check_branch
      %32 = sbr.rel (0) target = $region13
    $region12: #{cropped_vit_forward.1} parent=1 // pred_region
      _
    $region13: #{cropped_vit_forward.1} parent=1 // pred_fallthru
      _
    // Predicated region
    $region14: #{cropped_vit_forward.1} parent=1 // pred_check
      _
    $region15: #{cropped_vit_forward.1} parent=1 // pred_check_branch
      %34 = sbr.rel (0) target = $region17
    $region16: #{cropped_vit_forward.1} parent=1 // pred_region
      _
    $region17: #{cropped_vit_forward.1} parent=1 // pred_fallthru
      _
    // Predicated region
    $region18: #{cropped_vit_forward.1} parent=1 // pred_check
      _
    $region19: #{cropped_vit_forward.1} parent=1 // pred_check_branch
      %36 = sbr.rel (0) target = $region21
    $region20: #{cropped_vit_forward.1} parent=1 // pred_region
      _
    $region21: #{cropped_vit_forward.1} parent=1 // pred_fallthru
      _
    // Predicated region
    $region22: #{cropped_vit_forward.1} parent=1 // pred_check
      _
    $region23: #{cropped_vit_forward.1} parent=1 // pred_check_branch
      %38 = sbr.rel (0) target = $region25
    $region24: #{cropped_vit_forward.1} parent=1 // pred_region
      _
    $region25: #{cropped_vit_forward.1} parent=1 // pred_fallthru
      _
    // Predicated region
    $region26: #{cropped_vit_forward.1} parent=1 // pred_check
      _
    $region27: #{cropped_vit_forward.1} parent=1 // pred_check_branch
      %40 = sbr.rel (0) target = $region29
    $region28: #{cropped_vit_forward.1} parent=1 // pred_region
      _
    $region29: #{cropped_vit_forward.1} parent=1 // pred_fallthru
      _
    // Predicated region
    $region30: #{cropped_vit_forward.1} parent=1 // pred_check
      _
    $region31: #{cropped_vit_forward.1} parent=1 // pred_check_branch
      %42 = sbr.rel (0) target = $region33
    $region32: #{cropped_vit_forward.1} parent=1 // pred_region
      _
    $region33: #{cropped_vit_forward.1} parent=1 // pred_fallthru
      _
    // Predicated region
    $region34: #{cropped_vit_forward.1} parent=1 // pred_check
      _
    $region35: #{cropped_vit_forward.1} parent=1 // pred_check_branch
      %44 = sbr.rel (0) target = $region37
    $region36: #{cropped_vit_forward.1} parent=1 // pred_region
      _
    $region37: #{cropped_vit_forward.1} parent=1 // pred_fallthru
      _
    // Predicated region
    $region38: #{cropped_vit_forward.1} parent=1 // pred_check
      _
    $region39: #{cropped_vit_forward.1} parent=1 // pred_check_branch
      %46 = sbr.rel (0) target = $region41
    $region40: #{cropped_vit_forward.1} parent=1 // pred_region
      _
    $region41: #{cropped_vit_forward.1} parent=1 // pred_fallthru
      _
    // Predicated region
    $region42: #{cropped_vit_forward.1} parent=1 // pred_check
      _
    $region43: #{cropped_vit_forward.1} parent=1 // pred_check_branch
      %48 = sbr.rel (0) target = $region45
    $region44: #{cropped_vit_forward.1} parent=1 // pred_region
      _
    $region45: #{cropped_vit_forward.1} parent=1 // pred_fallthru
      _
    // Predicated region
    $region46: #{cropped_vit_forward.1} parent=1 // pred_check
      _
    $region47: #{cropped_vit_forward.1} parent=1 // pred_check_branch
      %50 = sbr.rel (0) target = $region49
    $region48: #{cropped_vit_forward.1} parent=1 // pred_region
      _
    $region49: #{cropped_vit_forward.1} parent=1 // pred_fallthru
      _
    // Predicated region
    $region50: #{cropped_vit_forward.1} parent=1 // pred_check
      _
    $region51: #{cropped_vit_forward.1} parent=1 // pred_check_branch
      %52 = sbr.rel (0) target = $region53
    $region52: #{cropped_vit_forward.1} parent=1 // pred_region
      _
    $region53: #{cropped_vit_forward.1} parent=1 // pred_fallthru
      _
    // Predicated region
    $region54: #{cropped_vit_forward.1} parent=1 // pred_check
      _
    $region55: #{cropped_vit_forward.1} parent=1 // pred_check_branch
      %54 = sbr.rel (0) target = $region57
    $region56: #{cropped_vit_forward.1} parent=1 // pred_region
      _
    $region57: #{cropped_vit_forward.1} parent=1 // pred_fallthru
      _
    // Predicated region
    $region58: #{cropped_vit_forward.1} parent=1 // pred_check
      _
    $region59: #{cropped_vit_forward.1} parent=1 // pred_check_branch
      %56 = sbr.rel (0) target = $region61
    $region60: #{cropped_vit_forward.1} parent=1 // pred_region
      _
    $region61: #{cropped_vit_forward.1} parent=1 // pred_fallthru
      _
    // Predicated region
    $region62: #{cropped_vit_forward.1} parent=1 // pred_check
      _
    $region63: #{cropped_vit_forward.1} parent=1 // pred_check_branch
      %58 = sbr.rel (0) target = $region65
    $region64: #{cropped_vit_forward.1} parent=1 // pred_region
      _
    $region65: #{cropped_vit_forward.1} parent=1 // pred_fallthru
      _
    // Predicated region
    $region66: #{cropped_vit_forward.1} parent=1 // pred_check
      _
    $region67: #{cropped_vit_forward.1} parent=1 // pred_check_branch
      %60 = sbr.rel (0) target = $region69
    $region68: #{cropped_vit_forward.1} parent=1 // pred_region
      _
    $region69: #{cropped_vit_forward.1} parent=1 // pred_fallthru
      _
    // Predicated region
    $region70: #{cropped_vit_forward.1} parent=1 // pred_check
      _
    $region71: #{cropped_vit_forward.1} parent=1 // pred_check_branch
      %62 = sbr.rel (0) target = $region73
    $region72: #{cropped_vit_forward.1} parent=1 // pred_region
      _
    $region73: #{cropped_vit_forward.1} parent=1 // pred_fallthru
      _
    // Predicated region
    $region74: #{cropped_vit_forward.1} parent=1 // pred_check
      _
    $region75: #{cropped_vit_forward.1} parent=1 // pred_check_branch
      %64 = sbr.rel (0) target = $region77
    $region76: #{cropped_vit_forward.1} parent=1 // pred_region
      _
    $region77: #{cropped_vit_forward.1} parent=1 // pred_fallthru
      _
    // Predicated region
    $region78: #{cropped_vit_forward.1} parent=1 // pred_check
      _
    $region79: #{cropped_vit_forward.1} parent=1 // pred_check_branch
      %66 = sbr.rel (0) target = $region81
    $region80: #{cropped_vit_forward.1} parent=1 // pred_region
      _
    $region81: #{cropped_vit_forward.1} parent=1 // pred_fallthru
      _
    // Predicated region
    $region82: #{cropped_vit_forward.1} parent=1 // pred_check
      _
    $region83: #{cropped_vit_forward.1} parent=1 // pred_check_branch
      %68 = sbr.rel (0) target = $region85
    $region84: #{cropped_vit_forward.1} parent=1 // pred_region
      _
    $region85: #{cropped_vit_forward.1} parent=1 // pred_fallthru
      _
    %v70 = vld [vmem:[%s3] sm:$0xff]
    %v71 = vld [vmem:[%s3 + $0x8] sm:$0xff]
    %v72 = vld [vmem:[%s3 + $0x10] sm:$0xff]
    %v73 = vld [vmem:[%s3 + $0x18] sm:$0xff]
    %v74 = vld [vmem:[%s3 + $0x20] sm:$0xff]
    %v75 = vld [vmem:[%s3 + $0x28] sm:$0xff]
    %v76 = vld [vmem:[%s0] sm:$0xf]
    %v77 = vld [vmem:[%s0 + $0x4] sm:$0xf]
    %v78 = vld [vmem:[%s0 + $0x8] sm:$0xf]
    %v79 = vld [vmem:[%s0 + $0xc] sm:$0xf]
    %v80 = vld [vmem:[%s0 + $0x10] sm:$0xf]
    %v81 = vld [vmem:[%s0 + $0x14] sm:$0xf]
    %v82 = vld [vmem:[%s1] sm:$0xf]
    %v83 = vld [vmem:[%s1 + $0x4] sm:$0xf]
    %v84 = vld [vmem:[%s1 + $0x8] sm:$0xf]
    %v85 = vld [vmem:[%s1 + $0xc] sm:$0xf]
    %v86 = vld [vmem:[%s1 + $0x10] sm:$0xf]
    %v87 = vld [vmem:[%s1 + $0x14] sm:$0xf]
    %v88 = vld [vmem:[%s1 + $0x18] sm:$0xf]
    %v89 = vld [vmem:[%s1 + $0x1c] sm:$0xf]
    %v90 = vld [vmem:[%s1 + $0x20] sm:$0xf]
    %v91 = vld [vmem:[%s1 + $0x24] sm:$0xf]
    %v92 = vld [vmem:[%s1 + $0x28] sm:$0xf]
    %v93 = vld [vmem:[%s1 + $0x2c] sm:$0xf]
    %v94 = vld [vmem:[%s1 + $0x30] sm:$0xf]
    %v95 = vld [vmem:[%s1 + $0x34] sm:$0xf]
    %v96 = vld [vmem:[%s1 + $0x38] sm:$0xf]
    %v97 = vld [vmem:[%s1 + $0x3c] sm:$0xf]
    %v98 = vld [vmem:[%s2] sm:$0xff]
    %v99 = vld [vmem:[%s2 + $0x8] sm:$0xff]
    %v100 = vld [vmem:[%s2 + $0x10] sm:$0xff]
    %v101 = vld [vmem:[%s2 + $0x18] sm:$0xff]
    %v102 = vld [vmem:[%s2 + $0x20] sm:$0xff]
    %v103 = vld [vmem:[%s2 + $0x28] sm:$0xff]
    %v110 = vunpack.c.l.b16 %v76
    %v111 = vunpack.c.l.b16 %v77
    %v112 = vunpack.c.l.b16 %v78
    %v113 = vunpack.c.l.b16 %v79
    %v114 = vunpack.c.l.b16 %v80
    %v115 = vunpack.c.l.b16 %v81
    %v116 = vpack.c.b16 %v111, %v110
    %v117 = vpack.c.b16 %v113, %v112
    %v118 = vpack.c.b16 %v115, %v114
    %v138 = vunpack.c.l.b16 %v82
    %v139 = vunpack.c.l.b16 %v83
    %v140 = vunpack.c.l.b16 %v84
    %v141 = vunpack.c.l.b16 %v85
    %v142 = vunpack.c.l.b16 %v86
    %v143 = vunpack.c.l.b16 %v87
    %v144 = vunpack.c.l.b16 %v88
    %v145 = vunpack.c.l.b16 %v89
    %v146 = vunpack.c.l.b16 %v90
    %v147 = vunpack.c.l.b16 %v91
    %v148 = vunpack.c.l.b16 %v92
    %v149 = vunpack.c.l.b16 %v93
    %v150 = vunpack.c.l.b16 %v94
    %v151 = vunpack.c.l.b16 %v95
    %v152 = vunpack.c.l.b16 %v96
    %v153 = vunpack.c.l.b16 %v97
    %v154 = vpack.c.b16 %v139, %v138
    %v155 = vpack.c.b16 %v141, %v140
    %v156 = vpack.c.b16 %v143, %v142
    %v157 = vpack.c.b16 %v145, %v144
    %v158 = vpack.c.b16 %v147, %v146
    %v159 = vpack.c.b16 %v149, %v148
    %v160 = vpack.c.b16 %v151, %v150
    %v161 = vpack.c.b16 %v153, %v152
    %170 = vmatprep.subr.bf16.mxu0 0
    %171 = vmatpush1.bf16.msra.mxu0 %v161
    %172 = vmatprep.subr.bf16.mxu0 0
    %173 = vmatpush1.bf16.msra.mxu0 %v160
    %174 = vmatprep.subr.bf16.mxu0 0
    %175 = vmatpush1.bf16.msra.mxu0 %v159
    %176 = vmatprep.subr.bf16.mxu0 0
    %177 = vmatpush1.bf16.msra.mxu0 %v158
    %178 = vmatprep.subr.bf16.mxu0 0
    %179 = vmatpush1.bf16.msra.mxu0 %v157
    %180 = vmatprep.subr.bf16.mxu0 0
    %181 = vmatpush1.bf16.msra.mxu0 %v156
    %182 = vmatprep.subr.bf16.mxu0 0
    %183 = vmatpush1.bf16.msra.mxu0 %v155
    %184 = vmatprep.subr.bf16.mxu0 0
    %185 = vmatpush1.bf16.msra.mxu0 %v154
    %186 = vmatprep.subr.bf16.mxu0 0
    %187 = vmatpush2.bf16.msra.mxu0 0
    %188 = vmatprep.subr.bf16.mxu0 0
    %189 = vmatpush2.bf16.msra.mxu0 0
    %190 = vmatprep.subr.bf16.mxu0 0
    %191 = vmatpush2.bf16.msra.mxu0 0
    %192 = vmatprep.subr.bf16.mxu0 0
    %193 = vmatpush2.bf16.msra.mxu0 0
    %194 = vmatprep.subr.bf16.mxu0 0
    %195 = vmatpush2.bf16.msra.mxu0 0
    %196 = vmatprep.subr.bf16.mxu0 0
    %197 = vmatpush2.bf16.msra.mxu0 0
    %198 = vmatprep.subr.bf16.mxu0 0
    %199 = vmatpush2.bf16.msra.mxu0 0
    %200 = vmatprep.subr.bf16.mxu0 0
    %201 = vmatpush2.bf16.msra.mxu0 0
    %202 = vmatprep.mubr.bf16.mxu0 0
    %203 = vmatmul.mubr.bf16.gmra.mxu0 %v116
    %v204 = vpop.f32.mrf.mxu0
    %v205 = vadd.f32 %v98, %v204
    %v206 = vpop.f32.mrf.mxu0
    %v207 = vpop.f32.mrf.mxu0
    %v208 = vadd.f32 %v99, %v207
    %v209 = vpop.f32.mrf.mxu0
    %210 = vmatprep.mubr.bf16.mxu0 0
    %211 = vmatmul.mubr.bf16.gmra.mxu0 %v117
    %v212 = vpop.f32.mrf.mxu0
    %v213 = vadd.f32 %v100, %v212
    %v214 = vpop.f32.mrf.mxu0
    %v215 = vpop.f32.mrf.mxu0
    %v216 = vadd.f32 %v101, %v215
    %v217 = vpop.f32.mrf.mxu0
    %218 = vmatprep.mubr.bf16.mxu0 0
    %219 = vmatmul.mubr.bf16.gmra.mxu0 %v118
    %v220 = vpop.f32.mrf.mxu0
    %v221 = vadd.f32 %v102, %v220
    %v222 = vpop.f32.mrf.mxu0
    %v223 = vpop.f32.mrf.mxu0
    %v224 = vadd.f32 %v103, %v223
    %v225 = vpop.f32.mrf.mxu0
    %226 = vdwg.mxu0
    %v227 = vld [vmem:[%s5] sm:$0x1]
    %v228 = vld [vmem:[%s6] sm:$0x1]
    %vm229 = vcmask 261120
    %v230 = vsel %vm229, %v205, 0.0
    %231 = vadd.xlane.f32.xlu0 %v230
    %v232 = vpop.xlane.xlu0 %231
    %v233 = vsel %vm229, %v208, 0.0
    %234 = vadd.xlane.f32.xlu0 %v233
    %v235 = vpop.xlane.xlu0 %234
    %v236 = vsel %vm229, %v213, 0.0
    %237 = vadd.xlane.f32.xlu0 %v236
    %v238 = vpop.xlane.xlu0 %237
    %v239 = vsel %vm229, %v216, 0.0
    %240 = vadd.xlane.f32.xlu0 %v239
    %v241 = vpop.xlane.xlu0 %240
    %v242 = vsel %vm229, %v221, 0.0
    %243 = vadd.xlane.f32.xlu0 %v242
    %v244 = vpop.xlane.xlu0 %243
    %v245 = vsel %vm229, %v224, 0.0
    %246 = vadd.xlane.f32.xlu0 %v245
    %v247 = vpop.xlane.xlu0 %246
    %v248 = vrcp.pop 32.0
    %v249 = vmul.f32 %v232, %v248
    %v250 = vmul.f32 %v235, %v248
    %v251 = vmul.f32 %v238, %v248
    %v252 = vmul.f32 %v241, %v248
    %v253 = vmul.f32 %v244, %v248
    %v254 = vmul.f32 %v247, %v248
    %v255 = vsub.f32 %v205, %v249
    %v256 = vsub.f32 %v208, %v250
    %v257 = vsub.f32 %v213, %v251
    %v258 = vsub.f32 %v216, %v252
    %v259 = vsub.f32 %v221, %v253
    %v260 = vsub.f32 %v224, %v254
    %v261 = vmul.f32 %v255, %v255
    %v262 = vmul.f32 %v256, %v256
    %v263 = vmul.f32 %v257, %v257
    %v264 = vmul.f32 %v258, %v258
    %v265 = vmul.f32 %v259, %v259
    %v266 = vmul.f32 %v260, %v260
    %v267 = vsel %vm229, %v261, 0.0
    %268 = vadd.xlane.f32.xlu0 %v267
    %v269 = vpop.xlane.xlu0 %268
    %v270 = vsel %vm229, %v262, 0.0
    %271 = vadd.xlane.f32.xlu0 %v270
    %v272 = vpop.xlane.xlu0 %271
    %v273 = vsel %vm229, %v263, 0.0
    %274 = vadd.xlane.f32.xlu0 %v273
    %v275 = vpop.xlane.xlu0 %274
    %v276 = vsel %vm229, %v264, 0.0
    %277 = vadd.xlane.f32.xlu0 %v276
    %v278 = vpop.xlane.xlu0 %277
    %v279 = vsel %vm229, %v265, 0.0
    %280 = vadd.xlane.f32.xlu0 %v279
    %v281 = vpop.xlane.xlu0 %280
    %v282 = vsel %vm229, %v266, 0.0
    %283 = vadd.xlane.f32.xlu0 %v282
    %v284 = vpop.xlane.xlu0 %283
    %v285 = vmul.f32 %v269, %v248
    %v286 = vmul.f32 %v272, %v248
    %v287 = vmul.f32 %v275, %v248
    %v288 = vmul.f32 %v278, %v248
    %v289 = vmul.f32 %v281, %v248
    %v290 = vmul.f32 %v284, %v248
    %v291 = vadd.f32 %v285, 1e-05
    %v292 = vadd.f32 %v286, 1e-05
    %v293 = vadd.f32 %v287, 1e-05
    %v294 = vadd.f32 %v288, 1e-05
    %v295 = vadd.f32 %v289, 1e-05
    %v296 = vadd.f32 %v290, 1e-05
    %v297 = vrsqrt.pop %v291
    %v298 = vrsqrt.pop %v292
    %v299 = vrsqrt.pop %v293
    %v300 = vrsqrt.pop %v294
    %v301 = vrsqrt.pop %v295
    %v302 = vrsqrt.pop %v296
    %v303 = vmul.f32 %v255, %v297
    %v304 = vmul.f32 %v256, %v298
    %v305 = vmul.f32 %v257, %v299
    %v306 = vmul.f32 %v258, %v300
    %v307 = vmul.f32 %v259, %v301
    %v308 = vmul.f32 %v260, %v302
    %v310 = vlaneseq
    %v311 = vshrl.u32 %v310, 7
    %v312 = vsub.s32 0, %v311
    %v313 = vrot.slane %v227, %v312
    %v315 = vmul.f32 %v303, %v313
    %v316 = vmul.f32 %v304, %v313
    %v317 = vmul.f32 %v305, %v313
    %v318 = vmul.f32 %v306, %v313
    %v319 = vmul.f32 %v307, %v313
    %v320 = vmul.f32 %v308, %v313
    %v322 = vlaneseq
    %v323 = vshrl.u32 %v322, 7
    %v324 = vsub.s32 0, %v323
    %v325 = vrot.slane %v228, %v324
    %v327 = vadd.f32 %v315, %v325
    %v328 = vadd.f32 %v316, %v325
    %v329 = vadd.f32 %v317, %v325
    %v330 = vadd.f32 %v318, %v325
    %v331 = vadd.f32 %v319, %v325
    %v332 = vadd.f32 %v320, %v325
    %v333 = vpack.c.bf16 %v328, %v327
    %v334 = vpack.c.bf16 %v330, %v329
    %v335 = vpack.c.bf16 %v332, %v331
    %v336 = vld [vmem:[%s7] sm:$0xf]
    %v337 = vld [vmem:[%s7 + $0x4] sm:$0xf]
    %v338 = vld [vmem:[%s7 + $0x8] sm:$0xf]
    %v339 = vld [vmem:[%s7 + $0xc] sm:$0xf]
    %v344 = vunpack.c.l.b16 %v336
    %v345 = vunpack.c.l.b16 %v337
    %v346 = vunpack.c.l.b16 %v338
    %v347 = vunpack.c.l.b16 %v339
    %v348 = vpack.c.b16 %v345, %v344
    %v349 = vpack.c.b16 %v347, %v346
    %v353 = vsel %vm229, %v333, 0
    %v356 = vsel %vm229, %v334, 0
    %v359 = vsel %vm229, %v335, 0
    %361 = vmatprep.subr.bf16.mxu0 0
    %362 = vmatpush1.bf16.msra.mxu0 0
    %363 = vmatprep.subr.bf16.mxu0 0
    %364 = vmatpush1.bf16.msra.mxu0 0
    %365 = vmatprep.subr.bf16.mxu0 0
    %366 = vmatpush1.bf16.msra.mxu0 0
    %367 = vmatprep.subr.bf16.mxu0 0
    %368 = vmatpush1.bf16.msra.mxu0 0
    %369 = vmatprep.subr.bf16.mxu0 0
    %370 = vmatpush1.bf16.msra.mxu0 0
    %371 = vmatprep.subr.bf16.mxu0 0
    %372 = vmatpush1.bf16.msra.mxu0 0
    %373 = vmatprep.subr.bf16.mxu0 0
    %374 = vmatpush1.bf16.msra.mxu0 %v349
    %375 = vmatprep.subr.bf16.mxu0 0
    %376 = vmatpush1.bf16.msra.mxu0 %v348
    %377 = vmatprep.subr.bf16.mxu0 0
    %378 = vmatpush2.bf16.msra.mxu0 0
    %379 = vmatprep.subr.bf16.mxu0 0
    %380 = vmatpush2.bf16.msra.mxu0 0
    %381 = vmatprep.subr.bf16.mxu0 0
    %382 = vmatpush2.bf16.msra.mxu0 0
    %383 = vmatprep.subr.bf16.mxu0 0
    %384 = vmatpush2.bf16.msra.mxu0 0
    %385 = vmatprep.subr.bf16.mxu0 0
    %386 = vmatpush2.bf16.msra.mxu0 0
    %387 = vmatprep.subr.bf16.mxu0 0
    %388 = vmatpush2.bf16.msra.mxu0 0
    %389 = vmatprep.subr.bf16.mxu0 0
    %390 = vmatpush2.bf16.msra.mxu0 0
    %391 = vmatprep.subr.bf16.mxu0 0
    %392 = vmatpush2.bf16.msra.mxu0 0
    %393 = vmatprep.mubr.bf16.mxu0 0
    %394 = vmatmul.mubr.bf16.gmra.mxu0 %v353
    %v395 = vpop.f32.mrf.mxu0
    %v396 = vadd.f32 0.0, %v395
    %v397 = vpop.f32.mrf.mxu0
    %v398 = vpop.f32.mrf.mxu0
    %v399 = vadd.f32 0.0, %v398
    %v400 = vpop.f32.mrf.mxu0
    %401 = vmatprep.mubr.bf16.mxu0 0
    %402 = vmatmul.mubr.bf16.gmra.mxu0 %v356
    %v403 = vpop.f32.mrf.mxu0
    %v404 = vadd.f32 0.0, %v403
    %v405 = vpop.f32.mrf.mxu0
    %v406 = vpop.f32.mrf.mxu0
    %v407 = vadd.f32 0.0, %v406
    %v408 = vpop.f32.mrf.mxu0
    %409 = vmatprep.mubr.bf16.mxu0 0
    %410 = vmatmul.mubr.bf16.gmra.mxu0 %v359
    %v411 = vpop.f32.mrf.mxu0
    %v412 = vadd.f32 0.0, %v411
    %v413 = vpop.f32.mrf.mxu0
    %v414 = vpop.f32.mrf.mxu0
    %v415 = vadd.f32 0.0, %v414
    %v416 = vpop.f32.mrf.mxu0
    %417 = vdwg.mxu0
    %v418 = vld [vmem:[%s8] sm:$0xf]
    %v419 = vld [vmem:[%s8 + $0x4] sm:$0xf]
    %v420 = vld [vmem:[%s8 + $0x8] sm:$0xf]
    %v421 = vld [vmem:[%s8 + $0xc] sm:$0xf]
    %v426 = vunpack.c.l.b16 %v418
    %v427 = vunpack.c.l.b16 %v419
    %v428 = vunpack.c.l.b16 %v420
    %v429 = vunpack.c.l.b16 %v421
    %v430 = vpack.c.b16 %v427, %v426
    %v431 = vpack.c.b16 %v429, %v428
    %434 = vmatprep.subr.bf16.mxu0 0
    %435 = vmatpush1.bf16.msra.mxu0 0
    %436 = vmatprep.subr.bf16.mxu0 0
    %437 = vmatpush1.bf16.msra.mxu0 0
    %438 = vmatprep.subr.bf16.mxu0 0
    %439 = vmatpush1.bf16.msra.mxu0 0
    %440 = vmatprep.subr.bf16.mxu0 0
    %441 = vmatpush1.bf16.msra.mxu0 0
    %442 = vmatprep.subr.bf16.mxu0 0
    %443 = vmatpush1.bf16.msra.mxu0 0
    %444 = vmatprep.subr.bf16.mxu0 0
    %445 = vmatpush1.bf16.msra.mxu0 0
    %446 = vmatprep.subr.bf16.mxu0 0
    %447 = vmatpush1.bf16.msra.mxu0 %v431
    %448 = vmatprep.subr.bf16.mxu0 0
    %449 = vmatpush1.bf16.msra.mxu0 %v430
    %450 = vmatprep.subr.bf16.mxu0 0
    %451 = vmatpush2.bf16.msra.mxu0 0
    %452 = vmatprep.subr.bf16.mxu0 0
    %453 = vmatpush2.bf16.msra.mxu0 0
    %454 = vmatprep.subr.bf16.mxu0 0
    %455 = vmatpush2.bf16.msra.mxu0 0
    %456 = vmatprep.subr.bf16.mxu0 0
    %457 = vmatpush2.bf16.msra.mxu0 0
    %458 = vmatprep.subr.bf16.mxu0 0
    %459 = vmatpush2.bf16.msra.mxu0 0
    %460 = vmatprep.subr.bf16.mxu0 0
    %461 = vmatpush2.bf16.msra.mxu0 0
    %462 = vmatprep.subr.bf16.mxu0 0
    %463 = vmatpush2.bf16.msra.mxu0 0
    %464 = vmatprep.subr.bf16.mxu0 0
    %465 = vmatpush2.bf16.msra.mxu0 0
    %466 = vmatprep.mubr.bf16.mxu0 0
    %467 = vmatmul.mubr.bf16.gmra.mxu0 %v353
    %v468 = vpop.f32.mrf.mxu0
    %v469 = vadd.f32 0.0, %v468
    %v470 = vpop.f32.mrf.mxu0
    %v471 = vpop.f32.mrf.mxu0
    %v472 = vadd.f32 0.0, %v471
    %v473 = vpop.f32.mrf.mxu0
    %474 = vmatprep.mubr.bf16.mxu0 0
    %475 = vmatmul.mubr.bf16.gmra.mxu0 %v356
    %v476 = vpop.f32.mrf.mxu0
    %v477 = vadd.f32 0.0, %v476
    %v478 = vpop.f32.mrf.mxu0
    %v479 = vpop.f32.mrf.mxu0
    %v480 = vadd.f32 0.0, %v479
    %v481 = vpop.f32.mrf.mxu0
    %482 = vmatprep.mubr.bf16.mxu0 0
    %483 = vmatmul.mubr.bf16.gmra.mxu0 %v359
    %v484 = vpop.f32.mrf.mxu0
    %v485 = vadd.f32 0.0, %v484
    %v486 = vpop.f32.mrf.mxu0
    %v487 = vpop.f32.mrf.mxu0
    %v488 = vadd.f32 0.0, %v487
    %v489 = vpop.f32.mrf.mxu0
    %490 = vdwg.mxu0
    %v491 = vld [vmem:[%s9] sm:$0xf]
    %v492 = vld [vmem:[%s9 + $0x4] sm:$0xf]
    %v493 = vld [vmem:[%s9 + $0x8] sm:$0xf]
    %v494 = vld [vmem:[%s9 + $0xc] sm:$0xf]
    %v499 = vunpack.c.l.b16 %v491
    %v500 = vunpack.c.l.b16 %v492
    %v501 = vunpack.c.l.b16 %v493
    %v502 = vunpack.c.l.b16 %v494
    %v503 = vpack.c.b16 %v500, %v499
    %v504 = vpack.c.b16 %v502, %v501
    %507 = vmatprep.subr.bf16.mxu0 0
    %508 = vmatpush1.bf16.msra.mxu0 0
    %509 = vmatprep.subr.bf16.mxu0 0
    %510 = vmatpush1.bf16.msra.mxu0 0
    %511 = vmatprep.subr.bf16.mxu0 0
    %512 = vmatpush1.bf16.msra.mxu0 0
    %513 = vmatprep.subr.bf16.mxu0 0
    %514 = vmatpush1.bf16.msra.mxu0 0
    %515 = vmatprep.subr.bf16.mxu0 0
    %516 = vmatpush1.bf16.msra.mxu0 0
    %517 = vmatprep.subr.bf16.mxu0 0
    %518 = vmatpush1.bf16.msra.mxu0 0
    %519 = vmatprep.subr.bf16.mxu0 0
    %520 = vmatpush1.bf16.msra.mxu0 %v504
    %521 = vmatprep.subr.bf16.mxu0 0
    %522 = vmatpush1.bf16.msra.mxu0 %v503
    %523 = vmatprep.subr.bf16.mxu0 0
    %524 = vmatpush2.bf16.msra.mxu0 0
    %525 = vmatprep.subr.bf16.mxu0 0
    %526 = vmatpush2.bf16.msra.mxu0 0
    %527 = vmatprep.subr.bf16.mxu0 0
    %528 = vmatpush2.bf16.msra.mxu0 0
    %529 = vmatprep.subr.bf16.mxu0 0
    %530 = vmatpush2.bf16.msra.mxu0 0
    %531 = vmatprep.subr.bf16.mxu0 0
    %532 = vmatpush2.bf16.msra.mxu0 0
    %533 = vmatprep.subr.bf16.mxu0 0
    %534 = vmatpush2.bf16.msra.mxu0 0
    %535 = vmatprep.subr.bf16.mxu0 0
    %536 = vmatpush2.bf16.msra.mxu0 0
    %537 = vmatprep.subr.bf16.mxu0 0
    %538 = vmatpush2.bf16.msra.mxu0 0
    %539 = vmatprep.mubr.bf16.mxu0 0
    %540 = vmatmul.mubr.bf16.gmra.mxu0 %v353
    %v541 = vpop.f32.mrf.mxu0
    %v542 = vadd.f32 0.0, %v541
    %v543 = vpop.f32.mrf.mxu0
    %v544 = vpop.f32.mrf.mxu0
    %v545 = vadd.f32 0.0, %v544
    %v546 = vpop.f32.mrf.mxu0
    %547 = vmatprep.mubr.bf16.mxu0 0
    %548 = vmatmul.mubr.bf16.gmra.mxu0 %v356
    %v549 = vpop.f32.mrf.mxu0
    %v550 = vadd.f32 0.0, %v549
    %v551 = vpop.f32.mrf.mxu0
    %v552 = vpop.f32.mrf.mxu0
    %v553 = vadd.f32 0.0, %v552
    %v554 = vpop.f32.mrf.mxu0
    %555 = vmatprep.mubr.bf16.mxu0 0
    %556 = vmatmul.mubr.bf16.gmra.mxu0 %v359
    %v557 = vpop.f32.mrf.mxu0
    %v558 = vadd.f32 0.0, %v557
    %v559 = vpop.f32.mrf.mxu0
    %v560 = vpop.f32.mrf.mxu0
    %v561 = vadd.f32 0.0, %v560
    %v562 = vpop.f32.mrf.mxu0
    %563 = vdwg.mxu0
    %v564 = vpack.c.bf16 %v399, %v396
    %v565 = vpack.c.bf16 %v407, %v404
    %v566 = vpack.c.bf16 %v415, %v412
    %v567 = vpack.c.bf16 %v472, %v469
    %v568 = vpack.c.bf16 %v480, %v477
    %v569 = vpack.c.bf16 %v488, %v485
    %vm570 = vcmask 64512
    %v572 = vsel %vm570, %v564, 0
    %v575 = vsel %vm570, %v565, 0
    %v578 = vsel %vm570, %v566, 0
    %v581 = vsel %vm570, %v567, 0
    %v584 = vsel %vm570, %v568, 0
    %v587 = vsel %vm570, %v569, 0
    %589 = vmatprep.subr.bf16.mxu0 0
    %590 = vmatpush1.bf16.xpose.msra.mxu0 0
    %591 = vmatprep.subr.bf16.mxu0 0
    %592 = vmatpush1.bf16.xpose.msra.mxu0 0
    %593 = vmatprep.subr.bf16.mxu0 0
    %594 = vmatpush1.bf16.xpose.msra.mxu0 0
    %595 = vmatprep.subr.bf16.mxu0 0
    %596 = vmatpush1.bf16.xpose.msra.mxu0 0
    %597 = vmatprep.subr.bf16.mxu0 0
    %598 = vmatpush1.bf16.xpose.msra.mxu0 0
    %599 = vmatprep.subr.bf16.mxu0 0
    %600 = vmatpush1.bf16.xpose.msra.mxu0 %v587
    %601 = vmatprep.subr.bf16.mxu0 0
    %602 = vmatpush1.bf16.xpose.msra.mxu0 %v584
    %603 = vmatprep.subr.bf16.mxu0 0
    %604 = vmatpush1.bf16.xpose.msra.mxu0 %v581
    %605 = vmatprep.subr.bf16.mxu0 0
    %606 = vmatpush2.bf16.xpose.msra.mxu0 0
    %607 = vmatprep.subr.bf16.mxu0 0
    %608 = vmatpush2.bf16.xpose.msra.mxu0 0
    %609 = vmatprep.subr.bf16.mxu0 0
    %610 = vmatpush2.bf16.xpose.msra.mxu0 0
    %611 = vmatprep.subr.bf16.mxu0 0
    %612 = vmatpush2.bf16.xpose.msra.mxu0 0
    %613 = vmatprep.subr.bf16.mxu0 0
    %614 = vmatpush2.bf16.xpose.msra.mxu0 0
    %615 = vmatprep.subr.bf16.mxu0 0
    %616 = vmatpush2.bf16.xpose.msra.mxu0 0
    %617 = vmatprep.subr.bf16.mxu0 0
    %618 = vmatpush2.bf16.xpose.msra.mxu0 0
    %619 = vmatprep.subr.bf16.mxu0 0
    %620 = vmatpush2.bf16.xpose.msra.mxu0 0
    %621 = vmatprep.mubr.bf16.mxu0 0
    %622 = vmatmul.mubr.bf16.gmra.mxu0 %v572
    %v623 = vpop.f32.mrf.mxu0
    %v624 = vadd.f32 %v70, %v623
    %v625 = vpop.f32.mrf.mxu0
    %v626 = vpop.f32.mrf.mxu0
    %v627 = vadd.f32 %v71, %v626
    %v628 = vpop.f32.mrf.mxu0
    %629 = vmatprep.mubr.bf16.mxu0 0
    %630 = vmatmul.mubr.bf16.gmra.mxu0 %v575
    %v631 = vpop.f32.mrf.mxu0
    %v632 = vadd.f32 %v72, %v631
    %v633 = vpop.f32.mrf.mxu0
    %v634 = vpop.f32.mrf.mxu0
    %v635 = vadd.f32 %v73, %v634
    %v636 = vpop.f32.mrf.mxu0
    %637 = vmatprep.mubr.bf16.mxu0 0
    %638 = vmatmul.mubr.bf16.gmra.mxu0 %v578
    %v639 = vpop.f32.mrf.mxu0
    %v640 = vadd.f32 %v74, %v639
    %v641 = vpop.f32.mrf.mxu0
    %v642 = vpop.f32.mrf.mxu0
    %v643 = vadd.f32 %v75, %v642
    %v644 = vpop.f32.mrf.mxu0
    %645 = vdwg.mxu0
    %vm646 = vcmask 392192
    %v647 = vsel %vm646, %v624, -inf
    %648 = vmax.xlane.f32.xlu0 %v647
    %v649 = vpop.xlane.xlu0 %648
    %v650 = vsel %vm646, %v627, -inf
    %651 = vmax.xlane.f32.xlu0 %v650
    %v652 = vpop.xlane.xlu0 %651
    %v653 = vsel %vm646, %v632, -inf
    %654 = vmax.xlane.f32.xlu0 %v653
    %v655 = vpop.xlane.xlu0 %654
    %v656 = vsel %vm646, %v635, -inf
    %657 = vmax.xlane.f32.xlu0 %v656
    %v658 = vpop.xlane.xlu0 %657
    %v659 = vsel %vm646, %v640, -inf
    %660 = vmax.xlane.f32.xlu0 %v659
    %v661 = vpop.xlane.xlu0 %660
    %v662 = vsel %vm646, %v643, -inf
    %663 = vmax.xlane.f32.xlu0 %v662
    %v664 = vpop.xlane.xlu0 %663
    %v665 = vsub.f32 %v624, %v649
    %v666 = vsub.f32 %v627, %v652
    %v667 = vsub.f32 %v632, %v655
    %v668 = vsub.f32 %v635, %v658
    %v669 = vsub.f32 %v640, %v661
    %v670 = vsub.f32 %v643, %v664
    %v671 = vmul.f32 %v665, 1.442695
    %v672 = vpow.pop %v671
    %v673 = vmul.f32 %v666, 1.442695
    %v674 = vpow.pop %v673
    %v675 = vmul.f32 %v667, 1.442695
    %v676 = vpow.pop %v675
    %v677 = vmul.f32 %v668, 1.442695
    %v678 = vpow.pop %v677
    %v679 = vmul.f32 %v669, 1.442695
    %v680 = vpow.pop %v679
    %v681 = vmul.f32 %v670, 1.442695
    %v682 = vpow.pop %v681
    %v683 = vsel %vm646, %v672, 0.0
    %684 = vadd.xlane.f32.xlu0 %v683
    %v685 = vpop.xlane.xlu0 %684
    %v686 = vsel %vm646, %v674, 0.0
    %687 = vadd.xlane.f32.xlu0 %v686
    %v688 = vpop.xlane.xlu0 %687
    %v689 = vsel %vm646, %v676, 0.0
    %690 = vadd.xlane.f32.xlu0 %v689
    %v691 = vpop.xlane.xlu0 %690
    %v692 = vsel %vm646, %v678, 0.0
    %693 = vadd.xlane.f32.xlu0 %v692
    %v694 = vpop.xlane.xlu0 %693
    %v695 = vsel %vm646, %v680, 0.0
    %696 = vadd.xlane.f32.xlu0 %v695
    %v697 = vpop.xlane.xlu0 %696
    %v698 = vsel %vm646, %v682, 0.0
    %699 = vadd.xlane.f32.xlu0 %v698
    %v700 = vpop.xlane.xlu0 %699
    %v701 = vrcp.pop %v685
    %v702 = vrcp.pop %v688
    %v703 = vrcp.pop %v691
    %v704 = vrcp.pop %v694
    %v705 = vrcp.pop %v697
    %v706 = vrcp.pop %v700
    %v707 = vmul.f32 %v672, %v701
    %v708 = vmul.f32 %v674, %v702
    %v709 = vmul.f32 %v676, %v703
    %v710 = vmul.f32 %v678, %v704
    %v711 = vmul.f32 %v680, %v705
    %v712 = vmul.f32 %v682, %v706
    %v713 = vpack.c.bf16 %v708, %v707
    %v714 = vpack.c.bf16 %v710, %v709
    %v715 = vpack.c.bf16 %v712, %v711
    %v716 = vpack.c.bf16 %v545, %v542
    %v717 = vpack.c.bf16 %v553, %v550
    %v718 = vpack.c.bf16 %v561, %v558
    %s719 = scalar_lea.vmem %s7, 16
    %v720 = vld [vmem:[%s719] sm:$0xf]
    %v721 = vld [vmem:[%s719 + $0x4] sm:$0xf]
    %v722 = vld [vmem:[%s719 + $0x8] sm:$0xf]
    %v723 = vld [vmem:[%s719 + $0xc] sm:$0xf]
    %v728 = vunpack.c.l.b16 %v720
    %v729 = vunpack.c.l.b16 %v721
    %v730 = vunpack.c.l.b16 %v722
    %v731 = vunpack.c.l.b16 %v723
    %v732 = vpack.c.b16 %v729, %v728
    %v733 = vpack.c.b16 %v731, %v730
    %736 = vmatprep.subr.bf16.mxu0 0
    %737 = vmatpush1.bf16.msra.mxu0 0
    %738 = vmatprep.subr.bf16.mxu0 0
    %739 = vmatpush1.bf16.msra.mxu0 0
    %740 = vmatprep.subr.bf16.mxu0 0
    %741 = vmatpush1.bf16.msra.mxu0 0
    %742 = vmatprep.subr.bf16.mxu0 0
    %743 = vmatpush1.bf16.msra.mxu0 0
    %744 = vmatprep.subr.bf16.mxu0 0
    %745 = vmatpush1.bf16.msra.mxu0 0
    %746 = vmatprep.subr.bf16.mxu0 0
    %747 = vmatpush1.bf16.msra.mxu0 0
    %748 = vmatprep.subr.bf16.mxu0 0
    %749 = vmatpush1.bf16.msra.mxu0 %v733
    %750 = vmatprep.subr.bf16.mxu0 0
    %751 = vmatpush1.bf16.msra.mxu0 %v732
    %752 = vmatprep.subr.bf16.mxu0 0
    %753 = vmatpush2.bf16.msra.mxu0 0
    %754 = vmatprep.subr.bf16.mxu0 0
    %755 = vmatpush2.bf16.msra.mxu0 0
    %756 = vmatprep.subr.bf16.mxu0 0
    %757 = vmatpush2.bf16.msra.mxu0 0
    %758 = vmatprep.subr.bf16.mxu0 0
    %759 = vmatpush2.bf16.msra.mxu0 0
    %760 = vmatprep.subr.bf16.mxu0 0
    %761 = vmatpush2.bf16.msra.mxu0 0
    %762 = vmatprep.subr.bf16.mxu0 0
    %763 = vmatpush2.bf16.msra.mxu0 0
    %764 = vmatprep.subr.bf16.mxu0 0
    %765 = vmatpush2.bf16.msra.mxu0 0
    %766 = vmatprep.subr.bf16.mxu0 0
    %767 = vmatpush2.bf16.msra.mxu0 0
    %768 = vmatprep.mubr.bf16.mxu0 0
    %769 = vmatmul.mubr.bf16.gmra.mxu0 %v353
    %v770 = vpop.f32.mrf.mxu0
    %v771 = vadd.f32 0.0, %v770
    %v772 = vpop.f32.mrf.mxu0
    %v773 = vpop.f32.mrf.mxu0
    %v774 = vadd.f32 0.0, %v773
    %v775 = vpop.f32.mrf.mxu0
    %776 = vmatprep.mubr.bf16.mxu0 0
    %777 = vmatmul.mubr.bf16.gmra.mxu0 %v356
    %v778 = vpop.f32.mrf.mxu0
    %v779 = vadd.f32 0.0, %v778
    %v780 = vpop.f32.mrf.mxu0
    %v781 = vpop.f32.mrf.mxu0
    %v782 = vadd.f32 0.0, %v781
    %v783 = vpop.f32.mrf.mxu0
    %784 = vmatprep.mubr.bf16.mxu0 0
    %785 = vmatmul.mubr.bf16.gmra.mxu0 %v359
    %v786 = vpop.f32.mrf.mxu0
    %v787 = vadd.f32 0.0, %v786
    %v788 = vpop.f32.mrf.mxu0
    %v789 = vpop.f32.mrf.mxu0
    %v790 = vadd.f32 0.0, %v789
    %v791 = vpop.f32.mrf.mxu0
    %792 = vdwg.mxu0
    %s793 = scalar_lea.vmem %s8, 16
    %v794 = vld [vmem:[%s793] sm:$0xf]
    %v795 = vld [vmem:[%s793 + $0x4] sm:$0xf]
    %v796 = vld [vmem:[%s793 + $0x8] sm:$0xf]
    %v797 = vld [vmem:[%s793 + $0xc] sm:$0xf]
    %v802 = vunpack.c.l.b16 %v794
    %v803 = vunpack.c.l.b16 %v795
    %v804 = vunpack.c.l.b16 %v796
    %v805 = vunpack.c.l.b16 %v797
    %v806 = vpack.c.b16 %v803, %v802
    %v807 = vpack.c.b16 %v805, %v804
    %810 = vmatprep.subr.bf16.mxu0 0
    %811 = vmatpush1.bf16.msra.mxu0 0
    %812 = vmatprep.subr.bf16.mxu0 0
    %813 = vmatpush1.bf16.msra.mxu0 0
    %814 = vmatprep.subr.bf16.mxu0 0
    %815 = vmatpush1.bf16.msra.mxu0 0
    %816 = vmatprep.subr.bf16.mxu0 0
    %817 = vmatpush1.bf16.msra.mxu0 0
    %818 = vmatprep.subr.bf16.mxu0 0
    %819 = vmatpush1.bf16.msra.mxu0 0
    %820 = vmatprep.subr.bf16.mxu0 0
    %821 = vmatpush1.bf16.msra.mxu0 0
    %822 = vmatprep.subr.bf16.mxu0 0
    %823 = vmatpush1.bf16.msra.mxu0 %v807
    %824 = vmatprep.subr.bf16.mxu0 0
    %825 = vmatpush1.bf16.msra.mxu0 %v806
    %826 = vmatprep.subr.bf16.mxu0 0
    %827 = vmatpush2.bf16.msra.mxu0 0
    %828 = vmatprep.subr.bf16.mxu0 0
    %829 = vmatpush2.bf16.msra.mxu0 0
    %830 = vmatprep.subr.bf16.mxu0 0
    %831 = vmatpush2.bf16.msra.mxu0 0
    %832 = vmatprep.subr.bf16.mxu0 0
    %833 = vmatpush2.bf16.msra.mxu0 0
    %834 = vmatprep.subr.bf16.mxu0 0
    %835 = vmatpush2.bf16.msra.mxu0 0
    %836 = vmatprep.subr.bf16.mxu0 0
    %837 = vmatpush2.bf16.msra.mxu0 0
    %838 = vmatprep.subr.bf16.mxu0 0
    %839 = vmatpush2.bf16.msra.mxu0 0
    %840 = vmatprep.subr.bf16.mxu0 0
    %841 = vmatpush2.bf16.msra.mxu0 0
    %842 = vmatprep.mubr.bf16.mxu0 0
    %843 = vmatmul.mubr.bf16.gmra.mxu0 %v353
    %v844 = vpop.f32.mrf.mxu0
    %v845 = vadd.f32 0.0, %v844
    %v846 = vpop.f32.mrf.mxu0
    %v847 = vpop.f32.mrf.mxu0
    %v848 = vadd.f32 0.0, %v847
    %v849 = vpop.f32.mrf.mxu0
    %850 = vmatprep.mubr.bf16.mxu0 0
    %851 = vmatmul.mubr.bf16.gmra.mxu0 %v356
    %v852 = vpop.f32.mrf.mxu0
    %v853 = vadd.f32 0.0, %v852
    %v854 = vpop.f32.mrf.mxu0
    %v855 = vpop.f32.mrf.mxu0
    %v856 = vadd.f32 0.0, %v855
    %v857 = vpop.f32.mrf.mxu0
    %858 = vmatprep.mubr.bf16.mxu0 0
    %859 = vmatmul.mubr.bf16.gmra.mxu0 %v359
    %v860 = vpop.f32.mrf.mxu0
    %v861 = vadd.f32 0.0, %v860
    %v862 = vpop.f32.mrf.mxu0
    %v863 = vpop.f32.mrf.mxu0
    %v864 = vadd.f32 0.0, %v863
    %v865 = vpop.f32.mrf.mxu0
    %866 = vdwg.mxu0
    %s867 = scalar_lea.vmem %s9, 16
    %v868 = vld [vmem:[%s867] sm:$0xf]
    %v869 = vld [vmem:[%s867 + $0x4] sm:$0xf]
    %v870 = vld [vmem:[%s867 + $0x8] sm:$0xf]
    %v871 = vld [vmem:[%s867 + $0xc] sm:$0xf]
    %v876 = vunpack.c.l.b16 %v868
    %v877 = vunpack.c.l.b16 %v869
    %v878 = vunpack.c.l.b16 %v870
    %v879 = vunpack.c.l.b16 %v871
    %v880 = vpack.c.b16 %v877, %v876
    %v881 = vpack.c.b16 %v879, %v878
    %884 = vmatprep.subr.bf16.mxu0 0
    %885 = vmatpush1.bf16.msra.mxu0 0
    %886 = vmatprep.subr.bf16.mxu0 0
    %887 = vmatpush1.bf16.msra.mxu0 0
    %888 = vmatprep.subr.bf16.mxu0 0
    %889 = vmatpush1.bf16.msra.mxu0 0
    %890 = vmatprep.subr.bf16.mxu0 0
    %891 = vmatpush1.bf16.msra.mxu0 0
    %892 = vmatprep.subr.bf16.mxu0 0
    %893 = vmatpush1.bf16.msra.mxu0 0
    %894 = vmatprep.subr.bf16.mxu0 0
    %895 = vmatpush1.bf16.msra.mxu0 0
    %896 = vmatprep.subr.bf16.mxu0 0
    %897 = vmatpush1.bf16.msra.mxu0 %v881
    %898 = vmatprep.subr.bf16.mxu0 0
    %899 = vmatpush1.bf16.msra.mxu0 %v880
    %900 = vmatprep.subr.bf16.mxu0 0
    %901 = vmatpush2.bf16.msra.mxu0 0
    %902 = vmatprep.subr.bf16.mxu0 0
    %903 = vmatpush2.bf16.msra.mxu0 0
    %904 = vmatprep.subr.bf16.mxu0 0
    %905 = vmatpush2.bf16.msra.mxu0 0
    %906 = vmatprep.subr.bf16.mxu0 0
    %907 = vmatpush2.bf16.msra.mxu0 0
    %908 = vmatprep.subr.bf16.mxu0 0
    %909 = vmatpush2.bf16.msra.mxu0 0
    %910 = vmatprep.subr.bf16.mxu0 0
    %911 = vmatpush2.bf16.msra.mxu0 0
    %912 = vmatprep.subr.bf16.mxu0 0
    %913 = vmatpush2.bf16.msra.mxu0 0
    %914 = vmatprep.subr.bf16.mxu0 0
    %915 = vmatpush2.bf16.msra.mxu0 0
    %916 = vmatprep.mubr.bf16.mxu0 0
    %917 = vmatmul.mubr.bf16.gmra.mxu0 %v353
    %v918 = vpop.f32.mrf.mxu0
    %v919 = vadd.f32 0.0, %v918
    %v920 = vpop.f32.mrf.mxu0
    %v921 = vpop.f32.mrf.mxu0
    %v922 = vadd.f32 0.0, %v921
    %v923 = vpop.f32.mrf.mxu0
    %924 = vmatprep.mubr.bf16.mxu0 0
    %925 = vmatmul.mubr.bf16.gmra.mxu0 %v356
    %v926 = vpop.f32.mrf.mxu0
    %v927 = vadd.f32 0.0, %v926
    %v928 = vpop.f32.mrf.mxu0
    %v929 = vpop.f32.mrf.mxu0
    %v930 = vadd.f32 0.0, %v929
    %v931 = vpop.f32.mrf.mxu0
    %932 = vmatprep.mubr.bf16.mxu0 0
    %933 = vmatmul.mubr.bf16.gmra.mxu0 %v359
    %v934 = vpop.f32.mrf.mxu0
    %v935 = vadd.f32 0.0, %v934
    %v936 = vpop.f32.mrf.mxu0
    %v937 = vpop.f32.mrf.mxu0
    %v938 = vadd.f32 0.0, %v937
    %v939 = vpop.f32.mrf.mxu0
    %940 = vdwg.mxu0
    %v941 = vpack.c.bf16 %v774, %v771
    %v942 = vpack.c.bf16 %v782, %v779
    %v943 = vpack.c.bf16 %v790, %v787
    %v944 = vpack.c.bf16 %v848, %v845
    %v945 = vpack.c.bf16 %v856, %v853
    %v946 = vpack.c.bf16 %v864, %v861
    %v948 = vsel %vm570, %v941, 0
    %v951 = vsel %vm570, %v942, 0
    %v954 = vsel %vm570, %v943, 0
    %v957 = vsel %vm570, %v944, 0
    %v960 = vsel %vm570, %v945, 0
    %v963 = vsel %vm570, %v946, 0
    %965 = vmatprep.subr.bf16.mxu0 0
    %966 = vmatpush1.bf16.xpose.msra.mxu0 0
    %967 = vmatprep.subr.bf16.mxu0 0
    %968 = vmatpush1.bf16.xpose.msra.mxu0 0
    %969 = vmatprep.subr.bf16.mxu0 0
    %970 = vmatpush1.bf16.xpose.msra.mxu0 0
    %971 = vmatprep.subr.bf16.mxu0 0
    %972 = vmatpush1.bf16.xpose.msra.mxu0 0
    %973 = vmatprep.subr.bf16.mxu0 0
    %974 = vmatpush1.bf16.xpose.msra.mxu0 0
    %975 = vmatprep.subr.bf16.mxu0 0
    %976 = vmatpush1.bf16.xpose.msra.mxu0 %v963
    %977 = vmatprep.subr.bf16.mxu0 0
    %978 = vmatpush1.bf16.xpose.msra.mxu0 %v960
    %979 = vmatprep.subr.bf16.mxu0 0
    %980 = vmatpush1.bf16.xpose.msra.mxu0 %v957
    %981 = vmatprep.subr.bf16.mxu0 0
    %982 = vmatpush2.bf16.xpose.msra.mxu0 0
    %983 = vmatprep.subr.bf16.mxu0 0
    %984 = vmatpush2.bf16.xpose.msra.mxu0 0
    %985 = vmatprep.subr.bf16.mxu0 0
    %986 = vmatpush2.bf16.xpose.msra.mxu0 0
    %987 = vmatprep.subr.bf16.mxu0 0
    %988 = vmatpush2.bf16.xpose.msra.mxu0 0
    %989 = vmatprep.subr.bf16.mxu0 0
    %990 = vmatpush2.bf16.xpose.msra.mxu0 0
    %991 = vmatprep.subr.bf16.mxu0 0
    %992 = vmatpush2.bf16.xpose.msra.mxu0 0
    %993 = vmatprep.subr.bf16.mxu0 0
    %994 = vmatpush2.bf16.xpose.msra.mxu0 0
    %995 = vmatprep.subr.bf16.mxu0 0
    %996 = vmatpush2.bf16.xpose.msra.mxu0 0
    %997 = vmatprep.mubr.bf16.mxu0 0
    %998 = vmatmul.mubr.bf16.gmra.mxu0 %v948
    %v999 = vpop.f32.mrf.mxu0
    %v1000 = vadd.f32 %v70, %v999
    %v1001 = vpop.f32.mrf.mxu0
    %v1002 = vpop.f32.mrf.mxu0
    %v1003 = vadd.f32 %v71, %v1002
    %v1004 = vpop.f32.mrf.mxu0
    %1005 = vmatprep.mubr.bf16.mxu0 0
    %1006 = vmatmul.mubr.bf16.gmra.mxu0 %v951
    %v1007 = vpop.f32.mrf.mxu0
    %v1008 = vadd.f32 %v72, %v1007
    %v1009 = vpop.f32.mrf.mxu0
    %v1010 = vpop.f32.mrf.mxu0
    %v1011 = vadd.f32 %v73, %v1010
    %v1012 = vpop.f32.mrf.mxu0
    %1013 = vmatprep.mubr.bf16.mxu0 0
    %1014 = vmatmul.mubr.bf16.gmra.mxu0 %v954
    %v1015 = vpop.f32.mrf.mxu0
    %v1016 = vadd.f32 %v74, %v1015
    %v1017 = vpop.f32.mrf.mxu0
    %v1018 = vpop.f32.mrf.mxu0
    %v1019 = vadd.f32 %v75, %v1018
    %v1020 = vpop.f32.mrf.mxu0
    %1021 = vdwg.mxu0
    %v1022 = vsel %vm646, %v1000, -inf
    %1023 = vmax.xlane.f32.xlu0 %v1022
    %v1024 = vpop.xlane.xlu0 %1023
    %v1025 = vsel %vm646, %v1003, -inf
    %1026 = vmax.xlane.f32.xlu0 %v1025
    %v1027 = vpop.xlane.xlu0 %1026
    %v1028 = vsel %vm646, %v1008, -inf
    %1029 = vmax.xlane.f32.xlu0 %v1028
    %v1030 = vpop.xlane.xlu0 %1029
    %v1031 = vsel %vm646, %v1011, -inf
    %1032 = vmax.xlane.f32.xlu0 %v1031
    %v1033 = vpop.xlane.xlu0 %1032
    %v1034 = vsel %vm646, %v1016, -inf
    %1035 = vmax.xlane.f32.xlu0 %v1034
    %v1036 = vpop.xlane.xlu0 %1035
    %v1037 = vsel %vm646, %v1019, -inf
    %1038 = vmax.xlane.f32.xlu0 %v1037
    %v1039 = vpop.xlane.xlu0 %1038
    %v1040 = vsub.f32 %v1000, %v1024
    %v1041 = vsub.f32 %v1003, %v1027
    %v1042 = vsub.f32 %v1008, %v1030
    %v1043 = vsub.f32 %v1011, %v1033
    %v1044 = vsub.f32 %v1016, %v1036
    %v1045 = vsub.f32 %v1019, %v1039
    %v1046 = vmul.f32 %v1040, 1.442695
    %v1047 = vpow.pop %v1046
    %v1048 = vmul.f32 %v1041, 1.442695
    %v1049 = vpow.pop %v1048
    %v1050 = vmul.f32 %v1042, 1.442695
    %v1051 = vpow.pop %v1050
    %v1052 = vmul.f32 %v1043, 1.442695
    %v1053 = vpow.pop %v1052
    %v1054 = vmul.f32 %v1044, 1.442695
    %v1055 = vpow.pop %v1054
    %v1056 = vmul.f32 %v1045, 1.442695
    %v1057 = vpow.pop %v1056
    %v1058 = vsel %vm646, %v1047, 0.0
    %1059 = vadd.xlane.f32.xlu0 %v1058
    %v1060 = vpop.xlane.xlu0 %1059
    %v1061 = vsel %vm646, %v1049, 0.0
    %1062 = vadd.xlane.f32.xlu0 %v1061
    %v1063 = vpop.xlane.xlu0 %1062
    %v1064 = vsel %vm646, %v1051, 0.0
    %1065 = vadd.xlane.f32.xlu0 %v1064
    %v1066 = vpop.xlane.xlu0 %1065
    %v1067 = vsel %vm646, %v1053, 0.0
    %1068 = vadd.xlane.f32.xlu0 %v1067
    %v1069 = vpop.xlane.xlu0 %1068
    %v1070 = vsel %vm646, %v1055, 0.0
    %1071 = vadd.xlane.f32.xlu0 %v1070
    %v1072 = vpop.xlane.xlu0 %1071
    %v1073 = vsel %vm646, %v1057, 0.0
    %1074 = vadd.xlane.f32.xlu0 %v1073
    %v1075 = vpop.xlane.xlu0 %1074
    %v1076 = vrcp.pop %v1060
    %v1077 = vrcp.pop %v1063
    %v1078 = vrcp.pop %v1066
    %v1079 = vrcp.pop %v1069
    %v1080 = vrcp.pop %v1072
    %v1081 = vrcp.pop %v1075
    %v1082 = vmul.f32 %v1047, %v1076
    %v1083 = vmul.f32 %v1049, %v1077
    %v1084 = vmul.f32 %v1051, %v1078
    %v1085 = vmul.f32 %v1053, %v1079
    %v1086 = vmul.f32 %v1055, %v1080
    %v1087 = vmul.f32 %v1057, %v1081
    %v1088 = vpack.c.bf16 %v1083, %v1082
    %v1089 = vpack.c.bf16 %v1085, %v1084
    %v1090 = vpack.c.bf16 %v1087, %v1086
    %v1091 = vpack.c.bf16 %v922, %v919
    %v1092 = vpack.c.bf16 %v930, %v927
    %v1093 = vpack.c.bf16 %v938, %v935
    %v1095 = vsel %vm646, %v1088, 0
    %v1098 = vsel %vm646, %v1089, 0
    %v1101 = vsel %vm646, %v1090, 0
    %1103 = vmatprep.subr.bf16.mxu0 0
    %1104 = vmatpush1.bf16.msra.mxu0 0
    %1105 = vmatprep.subr.bf16.mxu0 0
    %1106 = vmatpush1.bf16.msra.mxu0 0
    %1107 = vmatprep.subr.bf16.mxu0 0
    %1108 = vmatpush1.bf16.msra.mxu0 0
    %1109 = vmatprep.subr.bf16.mxu0 0
    %1110 = vmatpush1.bf16.msra.mxu0 0
    %1111 = vmatprep.subr.bf16.mxu0 0
    %1112 = vmatpush1.bf16.msra.mxu0 0
    %1113 = vmatprep.subr.bf16.mxu0 0
    %1114 = vmatpush1.bf16.msra.mxu0 %v1093
    %1115 = vmatprep.subr.bf16.mxu0 0
    %1116 = vmatpush1.bf16.msra.mxu0 %v1092
    %1117 = vmatprep.subr.bf16.mxu0 0
    %1118 = vmatpush1.bf16.msra.mxu0 %v1091
    %1119 = vmatprep.subr.bf16.mxu0 0
    %1120 = vmatpush2.bf16.msra.mxu0 0
    %1121 = vmatprep.subr.bf16.mxu0 0
    %1122 = vmatpush2.bf16.msra.mxu0 0
    %1123 = vmatprep.subr.bf16.mxu0 0
    %1124 = vmatpush2.bf16.msra.mxu0 0
    %1125 = vmatprep.subr.bf16.mxu0 0
    %1126 = vmatpush2.bf16.msra.mxu0 0
    %1127 = vmatprep.subr.bf16.mxu0 0
    %1128 = vmatpush2.bf16.msra.mxu0 0
    %1129 = vmatprep.subr.bf16.mxu0 0
    %1130 = vmatpush2.bf16.msra.mxu0 0
    %1131 = vmatprep.subr.bf16.mxu0 0
    %1132 = vmatpush2.bf16.msra.mxu0 0
    %1133 = vmatprep.subr.bf16.mxu0 0
    %1134 = vmatpush2.bf16.msra.mxu0 0
    %1135 = vmatprep.mubr.bf16.mxu0 0
    %1136 = vmatmul.mubr.bf16.gmra.mxu0 %v1095
    %v1137 = vpop.f32.mrf.mxu0
    %v1138 = vadd.f32 0.0, %v1137
    %v1139 = vpop.f32.mrf.mxu0
    %v1140 = vpop.f32.mrf.mxu0
    %v1141 = vadd.f32 0.0, %v1140
    %v1142 = vpop.f32.mrf.mxu0
    %1143 = vmatprep.mubr.bf16.mxu0 0
    %1144 = vmatmul.mubr.bf16.gmra.mxu0 %v1098
    %v1145 = vpop.f32.mrf.mxu0
    %v1146 = vadd.f32 0.0, %v1145
    %v1147 = vpop.f32.mrf.mxu0
    %v1148 = vpop.f32.mrf.mxu0
    %v1149 = vadd.f32 0.0, %v1148
    %v1150 = vpop.f32.mrf.mxu0
    %1151 = vmatprep.mubr.bf16.mxu0 0
    %1152 = vmatmul.mubr.bf16.gmra.mxu0 %v1101
    %v1153 = vpop.f32.mrf.mxu0
    %v1154 = vadd.f32 0.0, %v1153
    %v1155 = vpop.f32.mrf.mxu0
    %v1156 = vpop.f32.mrf.mxu0
    %v1157 = vadd.f32 0.0, %v1156
    %v1158 = vpop.f32.mrf.mxu0
    %1159 = vdwg.mxu0
    %v1161 = vsel %vm646, %v713, 0
    %v1164 = vsel %vm646, %v714, 0
    %v1167 = vsel %vm646, %v715, 0
    %1169 = vmatprep.subr.bf16.mxu0 0
    %1170 = vmatpush1.bf16.msra.mxu0 0
    %1171 = vmatprep.subr.bf16.mxu0 0
    %1172 = vmatpush1.bf16.msra.mxu0 0
    %1173 = vmatprep.subr.bf16.mxu0 0
    %1174 = vmatpush1.bf16.msra.mxu0 0
    %1175 = vmatprep.subr.bf16.mxu0 0
    %1176 = vmatpush1.bf16.msra.mxu0 0
    %1177 = vmatprep.subr.bf16.mxu0 0
    %1178 = vmatpush1.bf16.msra.mxu0 0
    %1179 = vmatprep.subr.bf16.mxu0 0
    %1180 = vmatpush1.bf16.msra.mxu0 %v718
    %1181 = vmatprep.subr.bf16.mxu0 0
    %1182 = vmatpush1.bf16.msra.mxu0 %v717
    %1183 = vmatprep.subr.bf16.mxu0 0
    %1184 = vmatpush1.bf16.msra.mxu0 %v716
    %1185 = vmatprep.subr.bf16.mxu0 0
    %1186 = vmatpush2.bf16.msra.mxu0 0
    %1187 = vmatprep.subr.bf16.mxu0 0
    %1188 = vmatpush2.bf16.msra.mxu0 0
    %1189 = vmatprep.subr.bf16.mxu0 0
    %1190 = vmatpush2.bf16.msra.mxu0 0
    %1191 = vmatprep.subr.bf16.mxu0 0
    %1192 = vmatpush2.bf16.msra.mxu0 0
    %1193 = vmatprep.subr.bf16.mxu0 0
    %1194 = vmatpush2.bf16.msra.mxu0 0
    %1195 = vmatprep.subr.bf16.mxu0 0
    %1196 = vmatpush2.bf16.msra.mxu0 0
    %1197 = vmatprep.subr.bf16.mxu0 0
    %1198 = vmatpush2.bf16.msra.mxu0 0
    %1199 = vmatprep.subr.bf16.mxu0 0
    %1200 = vmatpush2.bf16.msra.mxu0 0
    %1201 = vmatprep.mubr.bf16.mxu0 0
    %1202 = vmatmul.mubr.bf16.gmra.mxu0 %v1161
    %v1203 = vpop.f32.mrf.mxu0
    %v1204 = vadd.f32 %v1138, %v1203
    %v1205 = vpop.f32.mrf.mxu0
    %v1206 = vpop.f32.mrf.mxu0
    %v1207 = vadd.f32 %v1141, %v1206
    %v1208 = vpop.f32.mrf.mxu0
    %1209 = vmatprep.mubr.bf16.mxu0 0
    %1210 = vmatmul.mubr.bf16.gmra.mxu0 %v1164
    %v1211 = vpop.f32.mrf.mxu0
    %v1212 = vadd.f32 %v1146, %v1211
    %v1213 = vpop.f32.mrf.mxu0
    %v1214 = vpop.f32.mrf.mxu0
    %v1215 = vadd.f32 %v1149, %v1214
    %v1216 = vpop.f32.mrf.mxu0
    %1217 = vmatprep.mubr.bf16.mxu0 0
    %1218 = vmatmul.mubr.bf16.gmra.mxu0 %v1167
    %v1219 = vpop.f32.mrf.mxu0
    %v1220 = vadd.f32 %v1154, %v1219
    %v1221 = vpop.f32.mrf.mxu0
    %v1222 = vpop.f32.mrf.mxu0
    %v1223 = vadd.f32 %v1157, %v1222
    %v1224 = vpop.f32.mrf.mxu0
    %1225 = vdwg.mxu0
    %v1226 = vadd.f32 %v205, %v1204
    %v1227 = vadd.f32 %v208, %v1207
    %v1228 = vadd.f32 %v213, %v1212
    %v1229 = vadd.f32 %v216, %v1215
    %v1230 = vadd.f32 %v221, %v1220
    %v1231 = vadd.f32 %v224, %v1223
    %v1232 = vld [vmem:[%s10] sm:$0x1]
    %v1234 = vlaneseq
    %v1235 = vshrl.u32 %v1234, 7
    %v1236 = vsub.s32 0, %v1235
    %v1237 = vrot.slane %v1232, %v1236
    %v1239 = vadd.f32 %v1226, %v1237
    %v1240 = vadd.f32 %v1227, %v1237
    %v1241 = vadd.f32 %v1228, %v1237
    %v1242 = vadd.f32 %v1229, %v1237
    %v1243 = vadd.f32 %v1230, %v1237
    %v1244 = vadd.f32 %v1231, %v1237
    %v1245 = vld [vmem:[%s11] sm:$0x1]
    %v1246 = vld [vmem:[%s12] sm:$0x1]
    %v1247 = vsel %vm229, %v1239, 0.0
    %1248 = vadd.xlane.f32.xlu0 %v1247
    %v1249 = vpop.xlane.xlu0 %1248
    %v1250 = vsel %vm229, %v1240, 0.0
    %1251 = vadd.xlane.f32.xlu0 %v1250
    %v1252 = vpop.xlane.xlu0 %1251
    %v1253 = vsel %vm229, %v1241, 0.0
    %1254 = vadd.xlane.f32.xlu0 %v1253
    %v1255 = vpop.xlane.xlu0 %1254
    %v1256 = vsel %vm229, %v1242, 0.0
    %1257 = vadd.xlane.f32.xlu0 %v1256
    %v1258 = vpop.xlane.xlu0 %1257
    %v1259 = vsel %vm229, %v1243, 0.0
    %1260 = vadd.xlane.f32.xlu0 %v1259
    %v1261 = vpop.xlane.xlu0 %1260
    %v1262 = vsel %vm229, %v1244, 0.0
    %1263 = vadd.xlane.f32.xlu0 %v1262
    %v1264 = vpop.xlane.xlu0 %1263
    %v1265 = vmul.f32 %v1249, %v248
    %v1266 = vmul.f32 %v1252, %v248
    %v1267 = vmul.f32 %v1255, %v248
    %v1268 = vmul.f32 %v1258, %v248
    %v1269 = vmul.f32 %v1261, %v248
    %v1270 = vmul.f32 %v1264, %v248
    %v1271 = vsub.f32 %v1239, %v1265
    %v1272 = vsub.f32 %v1240, %v1266
    %v1273 = vsub.f32 %v1241, %v1267
    %v1274 = vsub.f32 %v1242, %v1268
    %v1275 = vsub.f32 %v1243, %v1269
    %v1276 = vsub.f32 %v1244, %v1270
    %v1277 = vmul.f32 %v1271, %v1271
    %v1278 = vmul.f32 %v1272, %v1272
    %v1279 = vmul.f32 %v1273, %v1273
    %v1280 = vmul.f32 %v1274, %v1274
    %v1281 = vmul.f32 %v1275, %v1275
    %v1282 = vmul.f32 %v1276, %v1276
    %v1283 = vsel %vm229, %v1277, 0.0
    %1284 = vadd.xlane.f32.xlu0 %v1283
    %v1285 = vpop.xlane.xlu0 %1284
    %v1286 = vsel %vm229, %v1278, 0.0
    %1287 = vadd.xlane.f32.xlu0 %v1286
    %v1288 = vpop.xlane.xlu0 %1287
    %v1289 = vsel %vm229, %v1279, 0.0
    %1290 = vadd.xlane.f32.xlu0 %v1289
    %v1291 = vpop.xlane.xlu0 %1290
    %v1292 = vsel %vm229, %v1280, 0.0
    %1293 = vadd.xlane.f32.xlu0 %v1292
    %v1294 = vpop.xlane.xlu0 %1293
    %v1295 = vsel %vm229, %v1281, 0.0
    %1296 = vadd.xlane.f32.xlu0 %v1295
    %v1297 = vpop.xlane.xlu0 %1296
    %v1298 = vsel %vm229, %v1282, 0.0
    %1299 = vadd.xlane.f32.xlu0 %v1298
    %v1300 = vpop.xlane.xlu0 %1299
    %v1301 = vmul.f32 %v1285, %v248
    %v1302 = vmul.f32 %v1288, %v248
    %v1303 = vmul.f32 %v1291, %v248
    %v1304 = vmul.f32 %v1294, %v248
    %v1305 = vmul.f32 %v1297, %v248
    %v1306 = vmul.f32 %v1300, %v248
    %v1307 = vadd.f32 %v1301, 1e-05
    %v1308 = vadd.f32 %v1302, 1e-05
    %v1309 = vadd.f32 %v1303, 1e-05
    %v1310 = vadd.f32 %v1304, 1e-05
    %v1311 = vadd.f32 %v1305, 1e-05
    %v1312 = vadd.f32 %v1306, 1e-05
    %v1313 = vrsqrt.pop %v1307
    %v1314 = vrsqrt.pop %v1308
    %v1315 = vrsqrt.pop %v1309
    %v1316 = vrsqrt.pop %v1310
    %v1317 = vrsqrt.pop %v1311
    %v1318 = vrsqrt.pop %v1312
    %v1319 = vmul.f32 %v1271, %v1313
    %v1320 = vmul.f32 %v1272, %v1314
    %v1321 = vmul.f32 %v1273, %v1315
    %v1322 = vmul.f32 %v1274, %v1316
    %v1323 = vmul.f32 %v1275, %v1317
    %v1324 = vmul.f32 %v1276, %v1318
    %v1326 = vlaneseq
    %v1327 = vshrl.u32 %v1326, 7
    %v1328 = vsub.s32 0, %v1327
    %v1329 = vrot.slane %v1245, %v1328
    %v1331 = vmul.f32 %v1319, %v1329
    %v1332 = vmul.f32 %v1320, %v1329
    %v1333 = vmul.f32 %v1321, %v1329
    %v1334 = vmul.f32 %v1322, %v1329
    %v1335 = vmul.f32 %v1323, %v1329
    %v1336 = vmul.f32 %v1324, %v1329
    %v1338 = vlaneseq
    %v1339 = vshrl.u32 %v1338, 7
    %v1340 = vsub.s32 0, %v1339
    %v1341 = vrot.slane %v1246, %v1340
    %v1343 = vadd.f32 %v1331, %v1341
    %v1344 = vadd.f32 %v1332, %v1341
    %v1345 = vadd.f32 %v1333, %v1341
    %v1346 = vadd.f32 %v1334, %v1341
    %v1347 = vadd.f32 %v1335, %v1341
    %v1348 = vadd.f32 %v1336, %v1341
    %v1349 = vpack.c.bf16 %v1344, %v1343
    %v1350 = vpack.c.bf16 %v1346, %v1345
    %v1351 = vpack.c.bf16 %v1348, %v1347
    %v1352 = vld [vmem:[%s13] sm:$0xf]
    %v1353 = vld [vmem:[%s13 + $0x4] sm:$0xf]
    %v1354 = vld [vmem:[%s13 + $0x8] sm:$0xf]
    %v1355 = vld [vmem:[%s13 + $0xc] sm:$0xf]
    %v1356 = vld [vmem:[%s14] sm:$0x1]
    %v1358 = vlaneseq
    %v1359 = vshrl.u32 %v1358, 7
    %v1360 = vsub.s32 0, %v1359
    %v1361 = vrot.slane %v1356, %v1360
    %v1367 = vunpack.c.l.b16 %v1352
    %v1368 = vunpack.c.l.b16 %v1353
    %v1369 = vunpack.c.l.b16 %v1354
    %v1370 = vunpack.c.l.b16 %v1355
    %v1371 = vpack.c.b16 %v1368, %v1367
    %v1372 = vpack.c.b16 %v1370, %v1369
    %v1376 = vsel %vm229, %v1349, 0
    %v1379 = vsel %vm229, %v1350, 0
    %v1382 = vsel %vm229, %v1351, 0
    %1384 = vmatprep.subr.bf16.mxu0 0
    %1385 = vmatpush1.bf16.msra.mxu0 0
    %1386 = vmatprep.subr.bf16.mxu0 0
    %1387 = vmatpush1.bf16.msra.mxu0 0
    %1388 = vmatprep.subr.bf16.mxu0 0
    %1389 = vmatpush1.bf16.msra.mxu0 0
    %1390 = vmatprep.subr.bf16.mxu0 0
    %1391 = vmatpush1.bf16.msra.mxu0 0
    %1392 = vmatprep.subr.bf16.mxu0 0
    %1393 = vmatpush1.bf16.msra.mxu0 0
    %1394 = vmatprep.subr.bf16.mxu0 0
    %1395 = vmatpush1.bf16.msra.mxu0 0
    %1396 = vmatprep.subr.bf16.mxu0 0
    %1397 = vmatpush1.bf16.msra.mxu0 %v1372
    %1398 = vmatprep.subr.bf16.mxu0 0
    %1399 = vmatpush1.bf16.msra.mxu0 %v1371
    %1400 = vmatprep.subr.bf16.mxu0 0
    %1401 = vmatpush2.bf16.msra.mxu0 0
    %1402 = vmatprep.subr.bf16.mxu0 0
    %1403 = vmatpush2.bf16.msra.mxu0 0
    %1404 = vmatprep.subr.bf16.mxu0 0
    %1405 = vmatpush2.bf16.msra.mxu0 0
    %1406 = vmatprep.subr.bf16.mxu0 0
    %1407 = vmatpush2.bf16.msra.mxu0 0
    %1408 = vmatprep.subr.bf16.mxu0 0
    %1409 = vmatpush2.bf16.msra.mxu0 0
    %1410 = vmatprep.subr.bf16.mxu0 0
    %1411 = vmatpush2.bf16.msra.mxu0 0
    %1412 = vmatprep.subr.bf16.mxu0 0
    %1413 = vmatpush2.bf16.msra.mxu0 0
    %1414 = vmatprep.subr.bf16.mxu0 0
    %1415 = vmatpush2.bf16.msra.mxu0 0
    %1416 = vmatprep.mubr.bf16.mxu0 0
    %1417 = vmatmul.mubr.bf16.gmra.mxu0 %v1376
    %v1418 = vpop.f32.mrf.mxu0
    %v1419 = vadd.f32 %v1361, %v1418
    %v1420 = vpop.f32.mrf.mxu0
    %v1421 = vpop.f32.mrf.mxu0
    %v1422 = vadd.f32 %v1361, %v1421
    %v1423 = vpop.f32.mrf.mxu0
    %1424 = vmatprep.mubr.bf16.mxu0 0
    %1425 = vmatmul.mubr.bf16.gmra.mxu0 %v1379
    %v1426 = vpop.f32.mrf.mxu0
    %v1427 = vadd.f32 %v1361, %v1426
    %v1428 = vpop.f32.mrf.mxu0
    %v1429 = vpop.f32.mrf.mxu0
    %v1430 = vadd.f32 %v1361, %v1429
    %v1431 = vpop.f32.mrf.mxu0
    %1432 = vmatprep.mubr.bf16.mxu0 0
    %1433 = vmatmul.mubr.bf16.gmra.mxu0 %v1382
    %v1434 = vpop.f32.mrf.mxu0
    %v1435 = vadd.f32 %v1361, %v1434
    %v1436 = vpop.f32.mrf.mxu0
    %v1437 = vpop.f32.mrf.mxu0
    %v1438 = vadd.f32 %v1361, %v1437
    %v1439 = vpop.f32.mrf.mxu0
    %1440 = vdwg.mxu0
    %v1441 = vmul.f32 %v1419, 0.5
    %v1442 = vmul.f32 %v1422, 0.5
    %v1443 = vmul.f32 %v1427, 0.5
    %v1444 = vmul.f32 %v1430, 0.5
    %v1445 = vmul.f32 %v1435, 0.5
    %v1446 = vmul.f32 %v1438, 0.5
    %v1447 = vmul.f32 %v1419, 0.70710677
    %v1448 = vmul.f32 %v1422, 0.70710677
    %v1449 = vmul.f32 %v1427, 0.70710677
    %v1450 = vmul.f32 %v1430, 0.70710677
    %v1451 = vmul.f32 %v1435, 0.70710677
    %v1452 = vmul.f32 %v1438, 0.70710677
    %v1453 = verf.f32.pop %v1447
    %v1454 = verf.f32.pop %v1448
    %v1455 = verf.f32.pop %v1449
    %v1456 = verf.f32.pop %v1450
    %v1457 = verf.f32.pop %v1451
    %v1458 = verf.f32.pop %v1452
    %v1459 = vadd.f32 %v1453, 1.0
    %v1460 = vadd.f32 %v1454, 1.0
    %v1461 = vadd.f32 %v1455, 1.0
    %v1462 = vadd.f32 %v1456, 1.0
    %v1463 = vadd.f32 %v1457, 1.0
    %v1464 = vadd.f32 %v1458, 1.0
    %v1465 = vmul.f32 %v1441, %v1459
    %v1466 = vmul.f32 %v1442, %v1460
    %v1467 = vmul.f32 %v1443, %v1461
    %v1468 = vmul.f32 %v1444, %v1462
    %v1469 = vmul.f32 %v1445, %v1463
    %v1470 = vmul.f32 %v1446, %v1464
    %v1471 = vpack.c.bf16 %v1466, %v1465
    %v1472 = vpack.c.bf16 %v1468, %v1467
    %v1473 = vpack.c.bf16 %v1470, %v1469
    %v1474 = vld [vmem:[%s15] sm:$0xf]
    %v1475 = vld [vmem:[%s15 + $0x4] sm:$0xf]
    %v1476 = vld [vmem:[%s15 + $0x8] sm:$0xf]
    %v1477 = vld [vmem:[%s15 + $0xc] sm:$0xf]
    %v1478 = vld [vmem:[%s15 + $0x10] sm:$0xf]
    %v1479 = vld [vmem:[%s15 + $0x14] sm:$0xf]
    %v1480 = vld [vmem:[%s15 + $0x18] sm:$0xf]
    %v1481 = vld [vmem:[%s15 + $0x1c] sm:$0xf]
    %v1482 = vld [vmem:[%s16] sm:$0x1]
    %v1484 = vlaneseq
    %v1485 = vshrl.u32 %v1484, 7
    %v1486 = vsub.s32 0, %v1485
    %v1487 = vrot.slane %v1482, %v1486
    %v1497 = vunpack.c.l.b16 %v1474
    %v1498 = vunpack.c.l.b16 %v1475
    %v1499 = vunpack.c.l.b16 %v1476
    %v1500 = vunpack.c.l.b16 %v1477
    %v1501 = vunpack.c.l.b16 %v1478
    %v1502 = vunpack.c.l.b16 %v1479
    %v1503 = vunpack.c.l.b16 %v1480
    %v1504 = vunpack.c.l.b16 %v1481
    %v1505 = vpack.c.b16 %v1498, %v1497
    %v1506 = vpack.c.b16 %v1500, %v1499
    %v1507 = vpack.c.b16 %v1502, %v1501
    %v1508 = vpack.c.b16 %v1504, %v1503
    %vm1513 = vcmask 523264
    %v1515 = vsel %vm1513, %v1471, 0
    %v1518 = vsel %vm1513, %v1472, 0
    %v1521 = vsel %vm1513, %v1473, 0
    %1523 = vmatprep.subr.bf16.mxu0 0
    %1524 = vmatpush1.bf16.msra.mxu0 0
    %1525 = vmatprep.subr.bf16.mxu0 0
    %1526 = vmatpush1.bf16.msra.mxu0 0
    %1527 = vmatprep.subr.bf16.mxu0 0
    %1528 = vmatpush1.bf16.msra.mxu0 0
    %1529 = vmatprep.subr.bf16.mxu0 0
    %1530 = vmatpush1.bf16.msra.mxu0 0
    %1531 = vmatprep.subr.bf16.mxu0 0
    %1532 = vmatpush1.bf16.msra.mxu0 %v1508
    %1533 = vmatprep.subr.bf16.mxu0 0
    %1534 = vmatpush1.bf16.msra.mxu0 %v1507
    %1535 = vmatprep.subr.bf16.mxu0 0
    %1536 = vmatpush1.bf16.msra.mxu0 %v1506
    %1537 = vmatprep.subr.bf16.mxu0 0
    %1538 = vmatpush1.bf16.msra.mxu0 %v1505
    %1539 = vmatprep.subr.bf16.mxu0 0
    %1540 = vmatpush2.bf16.msra.mxu0 0
    %1541 = vmatprep.subr.bf16.mxu0 0
    %1542 = vmatpush2.bf16.msra.mxu0 0
    %1543 = vmatprep.subr.bf16.mxu0 0
    %1544 = vmatpush2.bf16.msra.mxu0 0
    %1545 = vmatprep.subr.bf16.mxu0 0
    %1546 = vmatpush2.bf16.msra.mxu0 0
    %1547 = vmatprep.subr.bf16.mxu0 0
    %1548 = vmatpush2.bf16.msra.mxu0 0
    %1549 = vmatprep.subr.bf16.mxu0 0
    %1550 = vmatpush2.bf16.msra.mxu0 0
    %1551 = vmatprep.subr.bf16.mxu0 0
    %1552 = vmatpush2.bf16.msra.mxu0 0
    %1553 = vmatprep.subr.bf16.mxu0 0
    %1554 = vmatpush2.bf16.msra.mxu0 0
    %1555 = vmatprep.mubr.bf16.mxu0 0
    %1556 = vmatmul.mubr.bf16.gmra.mxu0 %v1515
    %v1557 = vpop.f32.mrf.mxu0
    %v1558 = vadd.f32 %v1487, %v1557
    %v1559 = vpop.f32.mrf.mxu0
    %v1560 = vpop.f32.mrf.mxu0
    %v1561 = vadd.f32 %v1487, %v1560
    %v1562 = vpop.f32.mrf.mxu0
    %1563 = vmatprep.mubr.bf16.mxu0 0
    %1564 = vmatmul.mubr.bf16.gmra.mxu0 %v1518
    %v1565 = vpop.f32.mrf.mxu0
    %v1566 = vadd.f32 %v1487, %v1565
    %v1567 = vpop.f32.mrf.mxu0
    %v1568 = vpop.f32.mrf.mxu0
    %v1569 = vadd.f32 %v1487, %v1568
    %v1570 = vpop.f32.mrf.mxu0
    %1571 = vmatprep.mubr.bf16.mxu0 0
    %1572 = vmatmul.mubr.bf16.gmra.mxu0 %v1521
    %v1573 = vpop.f32.mrf.mxu0
    %v1574 = vadd.f32 %v1487, %v1573
    %v1575 = vpop.f32.mrf.mxu0
    %v1576 = vpop.f32.mrf.mxu0
    %v1577 = vadd.f32 %v1487, %v1576
    %v1578 = vpop.f32.mrf.mxu0
    %1579 = vdwg.mxu0
    %v1580 = vadd.f32 %v1239, %v1558
    %v1581 = vadd.f32 %v1240, %v1561
    %v1582 = vadd.f32 %v1241, %v1566
    %v1583 = vadd.f32 %v1242, %v1569
    %v1584 = vadd.f32 %v1243, %v1574
    %v1585 = vadd.f32 %v1244, %v1577
    %s1586 = scalar_lea.vmem %s5, 1
    %v1587 = vld [vmem:[%s1586] sm:$0x1]
    %s1588 = scalar_lea.vmem %s6, 1
    %v1589 = vld [vmem:[%s1588] sm:$0x1]
    %v1590 = vsel %vm229, %v1580, 0.0
    %1591 = vadd.xlane.f32.xlu0 %v1590
    %v1592 = vpop.xlane.xlu0 %1591
    %v1593 = vsel %vm229, %v1581, 0.0
    %1594 = vadd.xlane.f32.xlu0 %v1593
    %v1595 = vpop.xlane.xlu0 %1594
    %v1596 = vsel %vm229, %v1582, 0.0
    %1597 = vadd.xlane.f32.xlu0 %v1596
    %v1598 = vpop.xlane.xlu0 %1597
    %v1599 = vsel %vm229, %v1583, 0.0
    %1600 = vadd.xlane.f32.xlu0 %v1599
    %v1601 = vpop.xlane.xlu0 %1600
    %v1602 = vsel %vm229, %v1584, 0.0
    %1603 = vadd.xlane.f32.xlu0 %v1602
    %v1604 = vpop.xlane.xlu0 %1603
    %v1605 = vsel %vm229, %v1585, 0.0
    %1606 = vadd.xlane.f32.xlu0 %v1605
    %v1607 = vpop.xlane.xlu0 %1606
    %v1608 = vmul.f32 %v1592, %v248
    %v1609 = vmul.f32 %v1595, %v248
    %v1610 = vmul.f32 %v1598, %v248
    %v1611 = vmul.f32 %v1601, %v248
    %v1612 = vmul.f32 %v1604, %v248
    %v1613 = vmul.f32 %v1607, %v248
    %v1614 = vsub.f32 %v1580, %v1608
    %v1615 = vsub.f32 %v1581, %v1609
    %v1616 = vsub.f32 %v1582, %v1610
    %v1617 = vsub.f32 %v1583, %v1611
    %v1618 = vsub.f32 %v1584, %v1612
    %v1619 = vsub.f32 %v1585, %v1613
    %v1620 = vmul.f32 %v1614, %v1614
    %v1621 = vmul.f32 %v1615, %v1615
    %v1622 = vmul.f32 %v1616, %v1616
    %v1623 = vmul.f32 %v1617, %v1617
    %v1624 = vmul.f32 %v1618, %v1618
    %v1625 = vmul.f32 %v1619, %v1619
    %v1626 = vsel %vm229, %v1620, 0.0
    %1627 = vadd.xlane.f32.xlu0 %v1626
    %v1628 = vpop.xlane.xlu0 %1627
    %v1629 = vsel %vm229, %v1621, 0.0
    %1630 = vadd.xlane.f32.xlu0 %v1629
    %v1631 = vpop.xlane.xlu0 %1630
    %v1632 = vsel %vm229, %v1622, 0.0
    %1633 = vadd.xlane.f32.xlu0 %v1632
    %v1634 = vpop.xlane.xlu0 %1633
    %v1635 = vsel %vm229, %v1623, 0.0
    %1636 = vadd.xlane.f32.xlu0 %v1635
    %v1637 = vpop.xlane.xlu0 %1636
    %v1638 = vsel %vm229, %v1624, 0.0
    %1639 = vadd.xlane.f32.xlu0 %v1638
    %v1640 = vpop.xlane.xlu0 %1639
    %v1641 = vsel %vm229, %v1625, 0.0
    %1642 = vadd.xlane.f32.xlu0 %v1641
    %v1643 = vpop.xlane.xlu0 %1642
    %v1644 = vmul.f32 %v1628, %v248
    %v1645 = vmul.f32 %v1631, %v248
    %v1646 = vmul.f32 %v1634, %v248
    %v1647 = vmul.f32 %v1637, %v248
    %v1648 = vmul.f32 %v1640, %v248
    %v1649 = vmul.f32 %v1643, %v248
    %v1650 = vadd.f32 %v1644, 1e-05
    %v1651 = vadd.f32 %v1645, 1e-05
    %v1652 = vadd.f32 %v1646, 1e-05
    %v1653 = vadd.f32 %v1647, 1e-05
    %v1654 = vadd.f32 %v1648, 1e-05
    %v1655 = vadd.f32 %v1649, 1e-05
    %v1656 = vrsqrt.pop %v1650
    %v1657 = vrsqrt.pop %v1651
    %v1658 = vrsqrt.pop %v1652
    %v1659 = vrsqrt.pop %v1653
    %v1660 = vrsqrt.pop %v1654
    %v1661 = vrsqrt.pop %v1655
    %v1662 = vmul.f32 %v1614, %v1656
    %v1663 = vmul.f32 %v1615, %v1657
    %v1664 = vmul.f32 %v1616, %v1658
    %v1665 = vmul.f32 %v1617, %v1659
    %v1666 = vmul.f32 %v1618, %v1660
    %v1667 = vmul.f32 %v1619, %v1661
    %v1669 = vlaneseq
    %v1670 = vshrl.u32 %v1669, 7
    %v1671 = vsub.s32 0, %v1670
    %v1672 = vrot.slane %v1587, %v1671
    %v1674 = vmul.f32 %v1662, %v1672
    %v1675 = vmul.f32 %v1663, %v1672
    %v1676 = vmul.f32 %v1664, %v1672
    %v1677 = vmul.f32 %v1665, %v1672
    %v1678 = vmul.f32 %v1666, %v1672
    %v1679 = vmul.f32 %v1667, %v1672
    %v1681 = vlaneseq
    %v1682 = vshrl.u32 %v1681, 7
    %v1683 = vsub.s32 0, %v1682
    %v1684 = vrot.slane %v1589, %v1683
    %v1686 = vadd.f32 %v1674, %v1684
    %v1687 = vadd.f32 %v1675, %v1684
    %v1688 = vadd.f32 %v1676, %v1684
    %v1689 = vadd.f32 %v1677, %v1684
    %v1690 = vadd.f32 %v1678, %v1684
    %v1691 = vadd.f32 %v1679, %v1684
    %v1692 = vpack.c.bf16 %v1687, %v1686
    %v1693 = vpack.c.bf16 %v1689, %v1688
    %v1694 = vpack.c.bf16 %v1691, %v1690
    %s1695 = scalar_lea.vmem %s7, 32
    %v1696 = vld [vmem:[%s1695] sm:$0xf]
    %v1697 = vld [vmem:[%s1695 + $0x4] sm:$0xf]
    %v1698 = vld [vmem:[%s1695 + $0x8] sm:$0xf]
    %v1699 = vld [vmem:[%s1695 + $0xc] sm:$0xf]
    %v1704 = vunpack.c.l.b16 %v1696
    %v1705 = vunpack.c.l.b16 %v1697
    %v1706 = vunpack.c.l.b16 %v1698
    %v1707 = vunpack.c.l.b16 %v1699
    %v1708 = vpack.c.b16 %v1705, %v1704
    %v1709 = vpack.c.b16 %v1707, %v1706
    %v1713 = vsel %vm229, %v1692, 0
    %v1716 = vsel %vm229, %v1693, 0
    %v1719 = vsel %vm229, %v1694, 0
    %1721 = vmatprep.subr.bf16.mxu0 0
    %1722 = vmatpush1.bf16.msra.mxu0 0
    %1723 = vmatprep.subr.bf16.mxu0 0
    %1724 = vmatpush1.bf16.msra.mxu0 0
    %1725 = vmatprep.subr.bf16.mxu0 0
    %1726 = vmatpush1.bf16.msra.mxu0 0
    %1727 = vmatprep.subr.bf16.mxu0 0
    %1728 = vmatpush1.bf16.msra.mxu0 0
    %1729 = vmatprep.subr.bf16.mxu0 0
    %1730 = vmatpush1.bf16.msra.mxu0 0
    %1731 = vmatprep.subr.bf16.mxu0 0
    %1732 = vmatpush1.bf16.msra.mxu0 0
    %1733 = vmatprep.subr.bf16.mxu0 0
    %1734 = vmatpush1.bf16.msra.mxu0 %v1709
    %1735 = vmatprep.subr.bf16.mxu0 0
    %1736 = vmatpush1.bf16.msra.mxu0 %v1708
    %1737 = vmatprep.subr.bf16.mxu0 0
    %1738 = vmatpush2.bf16.msra.mxu0 0
    %1739 = vmatprep.subr.bf16.mxu0 0
    %1740 = vmatpush2.bf16.msra.mxu0 0
    %1741 = vmatprep.subr.bf16.mxu0 0
    %1742 = vmatpush2.bf16.msra.mxu0 0
    %1743 = vmatprep.subr.bf16.mxu0 0
    %1744 = vmatpush2.bf16.msra.mxu0 0
    %1745 = vmatprep.subr.bf16.mxu0 0
    %1746 = vmatpush2.bf16.msra.mxu0 0
    %1747 = vmatprep.subr.bf16.mxu0 0
    %1748 = vmatpush2.bf16.msra.mxu0 0
    %1749 = vmatprep.subr.bf16.mxu0 0
    %1750 = vmatpush2.bf16.msra.mxu0 0
    %1751 = vmatprep.subr.bf16.mxu0 0
    %1752 = vmatpush2.bf16.msra.mxu0 0
    %1753 = vmatprep.mubr.bf16.mxu0 0
    %1754 = vmatmul.mubr.bf16.gmra.mxu0 %v1713
    %v1755 = vpop.f32.mrf.mxu0
    %v1756 = vadd.f32 0.0, %v1755
    %v1757 = vpop.f32.mrf.mxu0
    %v1758 = vpop.f32.mrf.mxu0
    %v1759 = vadd.f32 0.0, %v1758
    %v1760 = vpop.f32.mrf.mxu0
    %1761 = vmatprep.mubr.bf16.mxu0 0
    %1762 = vmatmul.mubr.bf16.gmra.mxu0 %v1716
    %v1763 = vpop.f32.mrf.mxu0
    %v1764 = vadd.f32 0.0, %v1763
    %v1765 = vpop.f32.mrf.mxu0
    %v1766 = vpop.f32.mrf.mxu0
    %v1767 = vadd.f32 0.0, %v1766
    %v1768 = vpop.f32.mrf.mxu0
    %1769 = vmatprep.mubr.bf16.mxu0 0
    %1770 = vmatmul.mubr.bf16.gmra.mxu0 %v1719
    %v1771 = vpop.f32.mrf.mxu0
    %v1772 = vadd.f32 0.0, %v1771
    %v1773 = vpop.f32.mrf.mxu0
    %v1774 = vpop.f32.mrf.mxu0
    %v1775 = vadd.f32 0.0, %v1774
    %v1776 = vpop.f32.mrf.mxu0
    %1777 = vdwg.mxu0
    %s1778 = scalar_lea.vmem %s8, 32
    %v1779 = vld [vmem:[%s1778] sm:$0xf]
    %v1780 = vld [vmem:[%s1778 + $0x4] sm:$0xf]
    %v1781 = vld [vmem:[%s1778 + $0x8] sm:$0xf]
    %v1782 = vld [vmem:[%s1778 + $0xc] sm:$0xf]
    %v1787 = vunpack.c.l.b16 %v1779
    %v1788 = vunpack.c.l.b16 %v1780
    %v1789 = vunpack.c.l.b16 %v1781
    %v1790 = vunpack.c.l.b16 %v1782
    %v1791 = vpack.c.b16 %v1788, %v1787
    %v1792 = vpack.c.b16 %v1790, %v1789
    %1795 = vmatprep.subr.bf16.mxu0 0
    %1796 = vmatpush1.bf16.msra.mxu0 0
    %1797 = vmatprep.subr.bf16.mxu0 0
    %1798 = vmatpush1.bf16.msra.mxu0 0
    %1799 = vmatprep.subr.bf16.mxu0 0
    %1800 = vmatpush1.bf16.msra.mxu0 0
    %1801 = vmatprep.subr.bf16.mxu0 0
    %1802 = vmatpush1.bf16.msra.mxu0 0
    %1803 = vmatprep.subr.bf16.mxu0 0
    %1804 = vmatpush1.bf16.msra.mxu0 0
    %1805 = vmatprep.subr.bf16.mxu0 0
    %1806 = vmatpush1.bf16.msra.mxu0 0
    %1807 = vmatprep.subr.bf16.mxu0 0
    %1808 = vmatpush1.bf16.msra.mxu0 %v1792
    %1809 = vmatprep.subr.bf16.mxu0 0
    %1810 = vmatpush1.bf16.msra.mxu0 %v1791
    %1811 = vmatprep.subr.bf16.mxu0 0
    %1812 = vmatpush2.bf16.msra.mxu0 0
    %1813 = vmatprep.subr.bf16.mxu0 0
    %1814 = vmatpush2.bf16.msra.mxu0 0
    %1815 = vmatprep.subr.bf16.mxu0 0
    %1816 = vmatpush2.bf16.msra.mxu0 0
    %1817 = vmatprep.subr.bf16.mxu0 0
    %1818 = vmatpush2.bf16.msra.mxu0 0
    %1819 = vmatprep.subr.bf16.mxu0 0
    %1820 = vmatpush2.bf16.msra.mxu0 0
    %1821 = vmatprep.subr.bf16.mxu0 0
    %1822 = vmatpush2.bf16.msra.mxu0 0
    %1823 = vmatprep.subr.bf16.mxu0 0
    %1824 = vmatpush2.bf16.msra.mxu0 0
    %1825 = vmatprep.subr.bf16.mxu0 0
    %1826 = vmatpush2.bf16.msra.mxu0 0
    %1827 = vmatprep.mubr.bf16.mxu0 0
    %1828 = vmatmul.mubr.bf16.gmra.mxu0 %v1713
    %v1829 = vpop.f32.mrf.mxu0
    %v1830 = vadd.f32 0.0, %v1829
    %v1831 = vpop.f32.mrf.mxu0
    %v1832 = vpop.f32.mrf.mxu0
    %v1833 = vadd.f32 0.0, %v1832
    %v1834 = vpop.f32.mrf.mxu0
    %1835 = vmatprep.mubr.bf16.mxu0 0
    %1836 = vmatmul.mubr.bf16.gmra.mxu0 %v1716
    %v1837 = vpop.f32.mrf.mxu0
    %v1838 = vadd.f32 0.0, %v1837
    %v1839 = vpop.f32.mrf.mxu0
    %v1840 = vpop.f32.mrf.mxu0
    %v1841 = vadd.f32 0.0, %v1840
    %v1842 = vpop.f32.mrf.mxu0
    %1843 = vmatprep.mubr.bf16.mxu0 0
    %1844 = vmatmul.mubr.bf16.gmra.mxu0 %v1719
    %v1845 = vpop.f32.mrf.mxu0
    %v1846 = vadd.f32 0.0, %v1845
    %v1847 = vpop.f32.mrf.mxu0
    %v1848 = vpop.f32.mrf.mxu0
    %v1849 = vadd.f32 0.0, %v1848
    %v1850 = vpop.f32.mrf.mxu0
    %1851 = vdwg.mxu0
    %s1852 = scalar_lea.vmem %s9, 32
    %v1853 = vld [vmem:[%s1852] sm:$0xf]
    %v1854 = vld [vmem:[%s1852 + $0x4] sm:$0xf]
    %v1855 = vld [vmem:[%s1852 + $0x8] sm:$0xf]
    %v1856 = vld [vmem:[%s1852 + $0xc] sm:$0xf]
    %v1861 = vunpack.c.l.b16 %v1853
    %v1862 = vunpack.c.l.b16 %v1854
    %v1863 = vunpack.c.l.b16 %v1855
    %v1864 = vunpack.c.l.b16 %v1856
    %v1865 = vpack.c.b16 %v1862, %v1861
    %v1866 = vpack.c.b16 %v1864, %v1863
    %1869 = vmatprep.subr.bf16.mxu0 0
    %1870 = vmatpush1.bf16.msra.mxu0 0
    %1871 = vmatprep.subr.bf16.mxu0 0
    %1872 = vmatpush1.bf16.msra.mxu0 0
    %1873 = vmatprep.subr.bf16.mxu0 0
    %1874 = vmatpush1.bf16.msra.mxu0 0
    %1875 = vmatprep.subr.bf16.mxu0 0
    %1876 = vmatpush1.bf16.msra.mxu0 0
    %1877 = vmatprep.subr.bf16.mxu0 0
    %1878 = vmatpush1.bf16.msra.mxu0 0
    %1879 = vmatprep.subr.bf16.mxu0 0
    %1880 = vmatpush1.bf16.msra.mxu0 0
    %1881 = vmatprep.subr.bf16.mxu0 0
    %1882 = vmatpush1.bf16.msra.mxu0 %v1866
    %1883 = vmatprep.subr.bf16.mxu0 0
    %1884 = vmatpush1.bf16.msra.mxu0 %v1865
    %1885 = vmatprep.subr.bf16.mxu0 0
    %1886 = vmatpush2.bf16.msra.mxu0 0
    %1887 = vmatprep.subr.bf16.mxu0 0
    %1888 = vmatpush2.bf16.msra.mxu0 0
    %1889 = vmatprep.subr.bf16.mxu0 0
    %1890 = vmatpush2.bf16.msra.mxu0 0
    %1891 = vmatprep.subr.bf16.mxu0 0
    %1892 = vmatpush2.bf16.msra.mxu0 0
    %1893 = vmatprep.subr.bf16.mxu0 0
    %1894 = vmatpush2.bf16.msra.mxu0 0
    %1895 = vmatprep.subr.bf16.mxu0 0
    %1896 = vmatpush2.bf16.msra.mxu0 0
    %1897 = vmatprep.subr.bf16.mxu0 0
    %1898 = vmatpush2.bf16.msra.mxu0 0
    %1899 = vmatprep.subr.bf16.mxu0 0
    %1900 = vmatpush2.bf16.msra.mxu0 0
    %1901 = vmatprep.mubr.bf16.mxu0 0
    %1902 = vmatmul.mubr.bf16.gmra.mxu0 %v1713
    %v1903 = vpop.f32.mrf.mxu0
    %v1904 = vadd.f32 0.0, %v1903
    %v1905 = vpop.f32.mrf.mxu0
    %v1906 = vpop.f32.mrf.mxu0
    %v1907 = vadd.f32 0.0, %v1906
    %v1908 = vpop.f32.mrf.mxu0
    %1909 = vmatprep.mubr.bf16.mxu0 0
    %1910 = vmatmul.mubr.bf16.gmra.mxu0 %v1716
    %v1911 = vpop.f32.mrf.mxu0
    %v1912 = vadd.f32 0.0, %v1911
    %v1913 = vpop.f32.mrf.mxu0
    %v1914 = vpop.f32.mrf.mxu0
    %v1915 = vadd.f32 0.0, %v1914
    %v1916 = vpop.f32.mrf.mxu0
    %1917 = vmatprep.mubr.bf16.mxu0 0
    %1918 = vmatmul.mubr.bf16.gmra.mxu0 %v1719
    %v1919 = vpop.f32.mrf.mxu0
    %v1920 = vadd.f32 0.0, %v1919
    %v1921 = vpop.f32.mrf.mxu0
    %v1922 = vpop.f32.mrf.mxu0
    %v1923 = vadd.f32 0.0, %v1922
    %v1924 = vpop.f32.mrf.mxu0
    %1925 = vdwg.mxu0
    %v1926 = vpack.c.bf16 %v1759, %v1756
    %v1927 = vpack.c.bf16 %v1767, %v1764
    %v1928 = vpack.c.bf16 %v1775, %v1772
    %v1929 = vpack.c.bf16 %v1833, %v1830
    %v1930 = vpack.c.bf16 %v1841, %v1838
    %v1931 = vpack.c.bf16 %v1849, %v1846
    %v1933 = vsel %vm570, %v1926, 0
    %v1936 = vsel %vm570, %v1927, 0
    %v1939 = vsel %vm570, %v1928, 0
    %v1942 = vsel %vm570, %v1929, 0
    %v1945 = vsel %vm570, %v1930, 0
    %v1948 = vsel %vm570, %v1931, 0
    %1950 = vmatprep.subr.bf16.mxu0 0
    %1951 = vmatpush1.bf16.xpose.msra.mxu0 0
    %1952 = vmatprep.subr.bf16.mxu0 0
    %1953 = vmatpush1.bf16.xpose.msra.mxu0 0
    %1954 = vmatprep.subr.bf16.mxu0 0
    %1955 = vmatpush1.bf16.xpose.msra.mxu0 0
    %1956 = vmatprep.subr.bf16.mxu0 0
    %1957 = vmatpush1.bf16.xpose.msra.mxu0 0
    %1958 = vmatprep.subr.bf16.mxu0 0
    %1959 = vmatpush1.bf16.xpose.msra.mxu0 0
    %1960 = vmatprep.subr.bf16.mxu0 0
    %1961 = vmatpush1.bf16.xpose.msra.mxu0 %v1948
    %1962 = vmatprep.subr.bf16.mxu0 0
    %1963 = vmatpush1.bf16.xpose.msra.mxu0 %v1945
    %1964 = vmatprep.subr.bf16.mxu0 0
    %1965 = vmatpush1.bf16.xpose.msra.mxu0 %v1942
    %1966 = vmatprep.subr.bf16.mxu0 0
    %1967 = vmatpush2.bf16.xpose.msra.mxu0 0
    %1968 = vmatprep.subr.bf16.mxu0 0
    %1969 = vmatpush2.bf16.xpose.msra.mxu0 0
    %1970 = vmatprep.subr.bf16.mxu0 0
    %1971 = vmatpush2.bf16.xpose.msra.mxu0 0
    %1972 = vmatprep.subr.bf16.mxu0 0
    %1973 = vmatpush2.bf16.xpose.msra.mxu0 0
    %1974 = vmatprep.subr.bf16.mxu0 0
    %1975 = vmatpush2.bf16.xpose.msra.mxu0 0
    %1976 = vmatprep.subr.bf16.mxu0 0
    %1977 = vmatpush2.bf16.xpose.msra.mxu0 0
    %1978 = vmatprep.subr.bf16.mxu0 0
    %1979 = vmatpush2.bf16.xpose.msra.mxu0 0
    %1980 = vmatprep.subr.bf16.mxu0 0
    %1981 = vmatpush2.bf16.xpose.msra.mxu0 0
    %1982 = vmatprep.mubr.bf16.mxu0 0
    %1983 = vmatmul.mubr.bf16.gmra.mxu0 %v1933
    %v1984 = vpop.f32.mrf.mxu0
    %v1985 = vadd.f32 %v70, %v1984
    %v1986 = vpop.f32.mrf.mxu0
    %v1987 = vpop.f32.mrf.mxu0
    %v1988 = vadd.f32 %v71, %v1987
    %v1989 = vpop.f32.mrf.mxu0
    %1990 = vmatprep.mubr.bf16.mxu0 0
    %1991 = vmatmul.mubr.bf16.gmra.mxu0 %v1936
    %v1992 = vpop.f32.mrf.mxu0
    %v1993 = vadd.f32 %v72, %v1992
    %v1994 = vpop.f32.mrf.mxu0
    %v1995 = vpop.f32.mrf.mxu0
    %v1996 = vadd.f32 %v73, %v1995
    %v1997 = vpop.f32.mrf.mxu0
    %1998 = vmatprep.mubr.bf16.mxu0 0
    %1999 = vmatmul.mubr.bf16.gmra.mxu0 %v1939
    %v2000 = vpop.f32.mrf.mxu0
    %v2001 = vadd.f32 %v74, %v2000
    %v2002 = vpop.f32.mrf.mxu0
    %v2003 = vpop.f32.mrf.mxu0
    %v2004 = vadd.f32 %v75, %v2003
    %v2005 = vpop.f32.mrf.mxu0
    %2006 = vdwg.mxu0
    %v2007 = vsel %vm646, %v1985, -inf
    %2008 = vmax.xlane.f32.xlu0 %v2007
    %v2009 = vpop.xlane.xlu0 %2008
    %v2010 = vsel %vm646, %v1988, -inf
    %2011 = vmax.xlane.f32.xlu0 %v2010
    %v2012 = vpop.xlane.xlu0 %2011
    %v2013 = vsel %vm646, %v1993, -inf
    %2014 = vmax.xlane.f32.xlu0 %v2013
    %v2015 = vpop.xlane.xlu0 %2014
    %v2016 = vsel %vm646, %v1996, -inf
    %2017 = vmax.xlane.f32.xlu0 %v2016
    %v2018 = vpop.xlane.xlu0 %2017
    %v2019 = vsel %vm646, %v2001, -inf
    %2020 = vmax.xlane.f32.xlu0 %v2019
    %v2021 = vpop.xlane.xlu0 %2020
    %v2022 = vsel %vm646, %v2004, -inf
    %2023 = vmax.xlane.f32.xlu0 %v2022
    %v2024 = vpop.xlane.xlu0 %2023
    %v2025 = vsub.f32 %v1985, %v2009
    %v2026 = vsub.f32 %v1988, %v2012
    %v2027 = vsub.f32 %v1993, %v2015
    %v2028 = vsub.f32 %v1996, %v2018
    %v2029 = vsub.f32 %v2001, %v2021
    %v2030 = vsub.f32 %v2004, %v2024
    %v2031 = vmul.f32 %v2025, 1.442695
    %v2032 = vpow.pop %v2031
    %v2033 = vmul.f32 %v2026, 1.442695
    %v2034 = vpow.pop %v2033
    %v2035 = vmul.f32 %v2027, 1.442695
    %v2036 = vpow.pop %v2035
    %v2037 = vmul.f32 %v2028, 1.442695
    %v2038 = vpow.pop %v2037
    %v2039 = vmul.f32 %v2029, 1.442695
    %v2040 = vpow.pop %v2039
    %v2041 = vmul.f32 %v2030, 1.442695
    %v2042 = vpow.pop %v2041
    %v2043 = vsel %vm646, %v2032, 0.0
    %2044 = vadd.xlane.f32.xlu0 %v2043
    %v2045 = vpop.xlane.xlu0 %2044
    %v2046 = vsel %vm646, %v2034, 0.0
    %2047 = vadd.xlane.f32.xlu0 %v2046
    %v2048 = vpop.xlane.xlu0 %2047
    %v2049 = vsel %vm646, %v2036, 0.0
    %2050 = vadd.xlane.f32.xlu0 %v2049
    %v2051 = vpop.xlane.xlu0 %2050
    %v2052 = vsel %vm646, %v2038, 0.0
    %2053 = vadd.xlane.f32.xlu0 %v2052
    %v2054 = vpop.xlane.xlu0 %2053
    %v2055 = vsel %vm646, %v2040, 0.0
    %2056 = vadd.xlane.f32.xlu0 %v2055
    %v2057 = vpop.xlane.xlu0 %2056
    %v2058 = vsel %vm646, %v2042, 0.0
    %2059 = vadd.xlane.f32.xlu0 %v2058
    %v2060 = vpop.xlane.xlu0 %2059
    %v2061 = vrcp.pop %v2045
    %v2062 = vrcp.pop %v2048
    %v2063 = vrcp.pop %v2051
    %v2064 = vrcp.pop %v2054
    %v2065 = vrcp.pop %v2057
    %v2066 = vrcp.pop %v2060
    %v2067 = vmul.f32 %v2032, %v2061
    %v2068 = vmul.f32 %v2034, %v2062
    %v2069 = vmul.f32 %v2036, %v2063
    %v2070 = vmul.f32 %v2038, %v2064
    %v2071 = vmul.f32 %v2040, %v2065
    %v2072 = vmul.f32 %v2042, %v2066
    %v2073 = vpack.c.bf16 %v2068, %v2067
    %v2074 = vpack.c.bf16 %v2070, %v2069
    %v2075 = vpack.c.bf16 %v2072, %v2071
    %v2076 = vpack.c.bf16 %v1907, %v1904
    %v2077 = vpack.c.bf16 %v1915, %v1912
    %v2078 = vpack.c.bf16 %v1923, %v1920
    %s2079 = scalar_lea.vmem %s7, 48
    %v2080 = vld [vmem:[%s2079] sm:$0xf]
    %v2081 = vld [vmem:[%s2079 + $0x4] sm:$0xf]
    %v2082 = vld [vmem:[%s2079 + $0x8] sm:$0xf]
    %v2083 = vld [vmem:[%s2079 + $0xc] sm:$0xf]
    %v2088 = vunpack.c.l.b16 %v2080
    %v2089 = vunpack.c.l.b16 %v2081
    %v2090 = vunpack.c.l.b16 %v2082
    %v2091 = vunpack.c.l.b16 %v2083
    %v2092 = vpack.c.b16 %v2089, %v2088
    %v2093 = vpack.c.b16 %v2091, %v2090
    %2096 = vmatprep.subr.bf16.mxu0 0
    %2097 = vmatpush1.bf16.msra.mxu0 0
    %2098 = vmatprep.subr.bf16.mxu0 0
    %2099 = vmatpush1.bf16.msra.mxu0 0
    %2100 = vmatprep.subr.bf16.mxu0 0
    %2101 = vmatpush1.bf16.msra.mxu0 0
    %2102 = vmatprep.subr.bf16.mxu0 0
    %2103 = vmatpush1.bf16.msra.mxu0 0
    %2104 = vmatprep.subr.bf16.mxu0 0
    %2105 = vmatpush1.bf16.msra.mxu0 0
    %2106 = vmatprep.subr.bf16.mxu0 0
    %2107 = vmatpush1.bf16.msra.mxu0 0
    %2108 = vmatprep.subr.bf16.mxu0 0
    %2109 = vmatpush1.bf16.msra.mxu0 %v2093
    %2110 = vmatprep.subr.bf16.mxu0 0
    %2111 = vmatpush1.bf16.msra.mxu0 %v2092
    %2112 = vmatprep.subr.bf16.mxu0 0
    %2113 = vmatpush2.bf16.msra.mxu0 0
    %2114 = vmatprep.subr.bf16.mxu0 0
    %2115 = vmatpush2.bf16.msra.mxu0 0
    %2116 = vmatprep.subr.bf16.mxu0 0
    %2117 = vmatpush2.bf16.msra.mxu0 0
    %2118 = vmatprep.subr.bf16.mxu0 0
    %2119 = vmatpush2.bf16.msra.mxu0 0
    %2120 = vmatprep.subr.bf16.mxu0 0
    %2121 = vmatpush2.bf16.msra.mxu0 0
    %2122 = vmatprep.subr.bf16.mxu0 0
    %2123 = vmatpush2.bf16.msra.mxu0 0
    %2124 = vmatprep.subr.bf16.mxu0 0
    %2125 = vmatpush2.bf16.msra.mxu0 0
    %2126 = vmatprep.subr.bf16.mxu0 0
    %2127 = vmatpush2.bf16.msra.mxu0 0
    %2128 = vmatprep.mubr.bf16.mxu0 0
    %2129 = vmatmul.mubr.bf16.gmra.mxu0 %v1713
    %v2130 = vpop.f32.mrf.mxu0
    %v2131 = vadd.f32 0.0, %v2130
    %v2132 = vpop.f32.mrf.mxu0
    %v2133 = vpop.f32.mrf.mxu0
    %v2134 = vadd.f32 0.0, %v2133
    %v2135 = vpop.f32.mrf.mxu0
    %2136 = vmatprep.mubr.bf16.mxu0 0
    %2137 = vmatmul.mubr.bf16.gmra.mxu0 %v1716
    %v2138 = vpop.f32.mrf.mxu0
    %v2139 = vadd.f32 0.0, %v2138
    %v2140 = vpop.f32.mrf.mxu0
    %v2141 = vpop.f32.mrf.mxu0
    %v2142 = vadd.f32 0.0, %v2141
    %v2143 = vpop.f32.mrf.mxu0
    %2144 = vmatprep.mubr.bf16.mxu0 0
    %2145 = vmatmul.mubr.bf16.gmra.mxu0 %v1719
    %v2146 = vpop.f32.mrf.mxu0
    %v2147 = vadd.f32 0.0, %v2146
    %v2148 = vpop.f32.mrf.mxu0
    %v2149 = vpop.f32.mrf.mxu0
    %v2150 = vadd.f32 0.0, %v2149
    %v2151 = vpop.f32.mrf.mxu0
    %2152 = vdwg.mxu0
    %s2153 = scalar_lea.vmem %s8, 48
    %v2154 = vld [vmem:[%s2153] sm:$0xf]
    %v2155 = vld [vmem:[%s2153 + $0x4] sm:$0xf]
    %v2156 = vld [vmem:[%s2153 + $0x8] sm:$0xf]
    %v2157 = vld [vmem:[%s2153 + $0xc] sm:$0xf]
    %v2162 = vunpack.c.l.b16 %v2154
    %v2163 = vunpack.c.l.b16 %v2155
    %v2164 = vunpack.c.l.b16 %v2156
    %v2165 = vunpack.c.l.b16 %v2157
    %v2166 = vpack.c.b16 %v2163, %v2162
    %v2167 = vpack.c.b16 %v2165, %v2164
    %2170 = vmatprep.subr.bf16.mxu0 0
    %2171 = vmatpush1.bf16.msra.mxu0 0
    %2172 = vmatprep.subr.bf16.mxu0 0
    %2173 = vmatpush1.bf16.msra.mxu0 0
    %2174 = vmatprep.subr.bf16.mxu0 0
    %2175 = vmatpush1.bf16.msra.mxu0 0
    %2176 = vmatprep.subr.bf16.mxu0 0
    %2177 = vmatpush1.bf16.msra.mxu0 0
    %2178 = vmatprep.subr.bf16.mxu0 0
    %2179 = vmatpush1.bf16.msra.mxu0 0
    %2180 = vmatprep.subr.bf16.mxu0 0
    %2181 = vmatpush1.bf16.msra.mxu0 0
    %2182 = vmatprep.subr.bf16.mxu0 0
    %2183 = vmatpush1.bf16.msra.mxu0 %v2167
    %2184 = vmatprep.subr.bf16.mxu0 0
    %2185 = vmatpush1.bf16.msra.mxu0 %v2166
    %2186 = vmatprep.subr.bf16.mxu0 0
    %2187 = vmatpush2.bf16.msra.mxu0 0
    %2188 = vmatprep.subr.bf16.mxu0 0
    %2189 = vmatpush2.bf16.msra.mxu0 0
    %2190 = vmatprep.subr.bf16.mxu0 0
    %2191 = vmatpush2.bf16.msra.mxu0 0
    %2192 = vmatprep.subr.bf16.mxu0 0
    %2193 = vmatpush2.bf16.msra.mxu0 0
    %2194 = vmatprep.subr.bf16.mxu0 0
    %2195 = vmatpush2.bf16.msra.mxu0 0
    %2196 = vmatprep.subr.bf16.mxu0 0
    %2197 = vmatpush2.bf16.msra.mxu0 0
    %2198 = vmatprep.subr.bf16.mxu0 0
    %2199 = vmatpush2.bf16.msra.mxu0 0
    %2200 = vmatprep.subr.bf16.mxu0 0
    %2201 = vmatpush2.bf16.msra.mxu0 0
    %2202 = vmatprep.mubr.bf16.mxu0 0
    %2203 = vmatmul.mubr.bf16.gmra.mxu0 %v1713
    %v2204 = vpop.f32.mrf.mxu0
    %v2205 = vadd.f32 0.0, %v2204
    %v2206 = vpop.f32.mrf.mxu0
    %v2207 = vpop.f32.mrf.mxu0
    %v2208 = vadd.f32 0.0, %v2207
    %v2209 = vpop.f32.mrf.mxu0
    %2210 = vmatprep.mubr.bf16.mxu0 0
    %2211 = vmatmul.mubr.bf16.gmra.mxu0 %v1716
    %v2212 = vpop.f32.mrf.mxu0
    %v2213 = vadd.f32 0.0, %v2212
    %v2214 = vpop.f32.mrf.mxu0
    %v2215 = vpop.f32.mrf.mxu0
    %v2216 = vadd.f32 0.0, %v2215
    %v2217 = vpop.f32.mrf.mxu0
    %2218 = vmatprep.mubr.bf16.mxu0 0
    %2219 = vmatmul.mubr.bf16.gmra.mxu0 %v1719
    %v2220 = vpop.f32.mrf.mxu0
    %v2221 = vadd.f32 0.0, %v2220
    %v2222 = vpop.f32.mrf.mxu0
    %v2223 = vpop.f32.mrf.mxu0
    %v2224 = vadd.f32 0.0, %v2223
    %v2225 = vpop.f32.mrf.mxu0
    %2226 = vdwg.mxu0
    %s2227 = scalar_lea.vmem %s9, 48
    %v2228 = vld [vmem:[%s2227] sm:$0xf]
    %v2229 = vld [vmem:[%s2227 + $0x4] sm:$0xf]
    %v2230 = vld [vmem:[%s2227 + $0x8] sm:$0xf]
    %v2231 = vld [vmem:[%s2227 + $0xc] sm:$0xf]
    %v2236 = vunpack.c.l.b16 %v2228
    %v2237 = vunpack.c.l.b16 %v2229
    %v2238 = vunpack.c.l.b16 %v2230
    %v2239 = vunpack.c.l.b16 %v2231
    %v2240 = vpack.c.b16 %v2237, %v2236
    %v2241 = vpack.c.b16 %v2239, %v2238
    %2244 = vmatprep.subr.bf16.mxu0 0
    %2245 = vmatpush1.bf16.msra.mxu0 0
    %2246 = vmatprep.subr.bf16.mxu0 0
    %2247 = vmatpush1.bf16.msra.mxu0 0
    %2248 = vmatprep.subr.bf16.mxu0 0
    %2249 = vmatpush1.bf16.msra.mxu0 0
    %2250 = vmatprep.subr.bf16.mxu0 0
    %2251 = vmatpush1.bf16.msra.mxu0 0
    %2252 = vmatprep.subr.bf16.mxu0 0
    %2253 = vmatpush1.bf16.msra.mxu0 0
    %2254 = vmatprep.subr.bf16.mxu0 0
    %2255 = vmatpush1.bf16.msra.mxu0 0
    %2256 = vmatprep.subr.bf16.mxu0 0
    %2257 = vmatpush1.bf16.msra.mxu0 %v2241
    %2258 = vmatprep.subr.bf16.mxu0 0
    %2259 = vmatpush1.bf16.msra.mxu0 %v2240
    %2260 = vmatprep.subr.bf16.mxu0 0
    %2261 = vmatpush2.bf16.msra.mxu0 0
    %2262 = vmatprep.subr.bf16.mxu0 0
    %2263 = vmatpush2.bf16.msra.mxu0 0
    %2264 = vmatprep.subr.bf16.mxu0 0
    %2265 = vmatpush2.bf16.msra.mxu0 0
    %2266 = vmatprep.subr.bf16.mxu0 0
    %2267 = vmatpush2.bf16.msra.mxu0 0
    %2268 = vmatprep.subr.bf16.mxu0 0
    %2269 = vmatpush2.bf16.msra.mxu0 0
    %2270 = vmatprep.subr.bf16.mxu0 0
    %2271 = vmatpush2.bf16.msra.mxu0 0
    %2272 = vmatprep.subr.bf16.mxu0 0
    %2273 = vmatpush2.bf16.msra.mxu0 0
    %2274 = vmatprep.subr.bf16.mxu0 0
    %2275 = vmatpush2.bf16.msra.mxu0 0
    %2276 = vmatprep.mubr.bf16.mxu0 0
    %2277 = vmatmul.mubr.bf16.gmra.mxu0 %v1713
    %v2278 = vpop.f32.mrf.mxu0
    %v2279 = vadd.f32 0.0, %v2278
    %v2280 = vpop.f32.mrf.mxu0
    %v2281 = vpop.f32.mrf.mxu0
    %v2282 = vadd.f32 0.0, %v2281
    %v2283 = vpop.f32.mrf.mxu0
    %2284 = vmatprep.mubr.bf16.mxu0 0
    %2285 = vmatmul.mubr.bf16.gmra.mxu0 %v1716
    %v2286 = vpop.f32.mrf.mxu0
    %v2287 = vadd.f32 0.0, %v2286
    %v2288 = vpop.f32.mrf.mxu0
    %v2289 = vpop.f32.mrf.mxu0
    %v2290 = vadd.f32 0.0, %v2289
    %v2291 = vpop.f32.mrf.mxu0
    %2292 = vmatprep.mubr.bf16.mxu0 0
    %2293 = vmatmul.mubr.bf16.gmra.mxu0 %v1719
    %v2294 = vpop.f32.mrf.mxu0
    %v2295 = vadd.f32 0.0, %v2294
    %v2296 = vpop.f32.mrf.mxu0
    %v2297 = vpop.f32.mrf.mxu0
    %v2298 = vadd.f32 0.0, %v2297
    %v2299 = vpop.f32.mrf.mxu0
    %2300 = vdwg.mxu0
    %v2301 = vpack.c.bf16 %v2134, %v2131
    %v2302 = vpack.c.bf16 %v2142, %v2139
    %v2303 = vpack.c.bf16 %v2150, %v2147
    %v2304 = vpack.c.bf16 %v2208, %v2205
    %v2305 = vpack.c.bf16 %v2216, %v2213
    %v2306 = vpack.c.bf16 %v2224, %v2221
    %v2308 = vsel %vm570, %v2301, 0
    %v2311 = vsel %vm570, %v2302, 0
    %v2314 = vsel %vm570, %v2303, 0
    %v2317 = vsel %vm570, %v2304, 0
    %v2320 = vsel %vm570, %v2305, 0
    %v2323 = vsel %vm570, %v2306, 0
    %2325 = vmatprep.subr.bf16.mxu0 0
    %2326 = vmatpush1.bf16.xpose.msra.mxu0 0
    %2327 = vmatprep.subr.bf16.mxu0 0
    %2328 = vmatpush1.bf16.xpose.msra.mxu0 0
    %2329 = vmatprep.subr.bf16.mxu0 0
    %2330 = vmatpush1.bf16.xpose.msra.mxu0 0
    %2331 = vmatprep.subr.bf16.mxu0 0
    %2332 = vmatpush1.bf16.xpose.msra.mxu0 0
    %2333 = vmatprep.subr.bf16.mxu0 0
    %2334 = vmatpush1.bf16.xpose.msra.mxu0 0
    %2335 = vmatprep.subr.bf16.mxu0 0
    %2336 = vmatpush1.bf16.xpose.msra.mxu0 %v2323
    %2337 = vmatprep.subr.bf16.mxu0 0
    %2338 = vmatpush1.bf16.xpose.msra.mxu0 %v2320
    %2339 = vmatprep.subr.bf16.mxu0 0
    %2340 = vmatpush1.bf16.xpose.msra.mxu0 %v2317
    %2341 = vmatprep.subr.bf16.mxu0 0
    %2342 = vmatpush2.bf16.xpose.msra.mxu0 0
    %2343 = vmatprep.subr.bf16.mxu0 0
    %2344 = vmatpush2.bf16.xpose.msra.mxu0 0
    %2345 = vmatprep.subr.bf16.mxu0 0
    %2346 = vmatpush2.bf16.xpose.msra.mxu0 0
    %2347 = vmatprep.subr.bf16.mxu0 0
    %2348 = vmatpush2.bf16.xpose.msra.mxu0 0
    %2349 = vmatprep.subr.bf16.mxu0 0
    %2350 = vmatpush2.bf16.xpose.msra.mxu0 0
    %2351 = vmatprep.subr.bf16.mxu0 0
    %2352 = vmatpush2.bf16.xpose.msra.mxu0 0
    %2353 = vmatprep.subr.bf16.mxu0 0
    %2354 = vmatpush2.bf16.xpose.msra.mxu0 0
    %2355 = vmatprep.subr.bf16.mxu0 0
    %2356 = vmatpush2.bf16.xpose.msra.mxu0 0
    %2357 = vmatprep.mubr.bf16.mxu0 0
    %2358 = vmatmul.mubr.bf16.gmra.mxu0 %v2308
    %v2359 = vpop.f32.mrf.mxu0
    %v2360 = vadd.f32 %v70, %v2359
    %v2361 = vpop.f32.mrf.mxu0
    %v2362 = vpop.f32.mrf.mxu0
    %v2363 = vadd.f32 %v71, %v2362
    %v2364 = vpop.f32.mrf.mxu0
    %2365 = vmatprep.mubr.bf16.mxu0 0
    %2366 = vmatmul.mubr.bf16.gmra.mxu0 %v2311
    %v2367 = vpop.f32.mrf.mxu0
    %v2368 = vadd.f32 %v72, %v2367
    %v2369 = vpop.f32.mrf.mxu0
    %v2370 = vpop.f32.mrf.mxu0
    %v2371 = vadd.f32 %v73, %v2370
    %v2372 = vpop.f32.mrf.mxu0
    %2373 = vmatprep.mubr.bf16.mxu0 0
    %2374 = vmatmul.mubr.bf16.gmra.mxu0 %v2314
    %v2375 = vpop.f32.mrf.mxu0
    %v2376 = vadd.f32 %v74, %v2375
    %v2377 = vpop.f32.mrf.mxu0
    %v2378 = vpop.f32.mrf.mxu0
    %v2379 = vadd.f32 %v75, %v2378
    %v2380 = vpop.f32.mrf.mxu0
    %2381 = vdwg.mxu0
    %v2382 = vsel %vm646, %v2360, -inf
    %2383 = vmax.xlane.f32.xlu0 %v2382
    %v2384 = vpop.xlane.xlu0 %2383
    %v2385 = vsel %vm646, %v2363, -inf
    %2386 = vmax.xlane.f32.xlu0 %v2385
    %v2387 = vpop.xlane.xlu0 %2386
    %v2388 = vsel %vm646, %v2368, -inf
    %2389 = vmax.xlane.f32.xlu0 %v2388
    %v2390 = vpop.xlane.xlu0 %2389
    %v2391 = vsel %vm646, %v2371, -inf
    %2392 = vmax.xlane.f32.xlu0 %v2391
    %v2393 = vpop.xlane.xlu0 %2392
    %v2394 = vsel %vm646, %v2376, -inf
    %2395 = vmax.xlane.f32.xlu0 %v2394
    %v2396 = vpop.xlane.xlu0 %2395
    %v2397 = vsel %vm646, %v2379, -inf
    %2398 = vmax.xlane.f32.xlu0 %v2397
    %v2399 = vpop.xlane.xlu0 %2398
    %v2400 = vsub.f32 %v2360, %v2384
    %v2401 = vsub.f32 %v2363, %v2387
    %v2402 = vsub.f32 %v2368, %v2390
    %v2403 = vsub.f32 %v2371, %v2393
    %v2404 = vsub.f32 %v2376, %v2396
    %v2405 = vsub.f32 %v2379, %v2399
    %v2406 = vmul.f32 %v2400, 1.442695
    %v2407 = vpow.pop %v2406
    %v2408 = vmul.f32 %v2401, 1.442695
    %v2409 = vpow.pop %v2408
    %v2410 = vmul.f32 %v2402, 1.442695
    %v2411 = vpow.pop %v2410
    %v2412 = vmul.f32 %v2403, 1.442695
    %v2413 = vpow.pop %v2412
    %v2414 = vmul.f32 %v2404, 1.442695
    %v2415 = vpow.pop %v2414
    %v2416 = vmul.f32 %v2405, 1.442695
    %v2417 = vpow.pop %v2416
    %v2418 = vsel %vm646, %v2407, 0.0
    %2419 = vadd.xlane.f32.xlu0 %v2418
    %v2420 = vpop.xlane.xlu0 %2419
    %v2421 = vsel %vm646, %v2409, 0.0
    %2422 = vadd.xlane.f32.xlu0 %v2421
    %v2423 = vpop.xlane.xlu0 %2422
    %v2424 = vsel %vm646, %v2411, 0.0
    %2425 = vadd.xlane.f32.xlu0 %v2424
    %v2426 = vpop.xlane.xlu0 %2425
    %v2427 = vsel %vm646, %v2413, 0.0
    %2428 = vadd.xlane.f32.xlu0 %v2427
    %v2429 = vpop.xlane.xlu0 %2428
    %v2430 = vsel %vm646, %v2415, 0.0
    %2431 = vadd.xlane.f32.xlu0 %v2430
    %v2432 = vpop.xlane.xlu0 %2431
    %v2433 = vsel %vm646, %v2417, 0.0
    %2434 = vadd.xlane.f32.xlu0 %v2433
    %v2435 = vpop.xlane.xlu0 %2434
    %v2436 = vrcp.pop %v2420
    %v2437 = vrcp.pop %v2423
    %v2438 = vrcp.pop %v2426
    %v2439 = vrcp.pop %v2429
    %v2440 = vrcp.pop %v2432
    %v2441 = vrcp.pop %v2435
    %v2442 = vmul.f32 %v2407, %v2436
    %v2443 = vmul.f32 %v2409, %v2437
    %v2444 = vmul.f32 %v2411, %v2438
    %v2445 = vmul.f32 %v2413, %v2439
    %v2446 = vmul.f32 %v2415, %v2440
    %v2447 = vmul.f32 %v2417, %v2441
    %v2448 = vpack.c.bf16 %v2443, %v2442
    %v2449 = vpack.c.bf16 %v2445, %v2444
    %v2450 = vpack.c.bf16 %v2447, %v2446
    %v2451 = vpack.c.bf16 %v2282, %v2279
    %v2452 = vpack.c.bf16 %v2290, %v2287
    %v2453 = vpack.c.bf16 %v2298, %v2295
    %v2455 = vsel %vm646, %v2448, 0
    %v2458 = vsel %vm646, %v2449, 0
    %v2461 = vsel %vm646, %v2450, 0
    %2463 = vmatprep.subr.bf16.mxu0 0
    %2464 = vmatpush1.bf16.msra.mxu0 0
    %2465 = vmatprep.subr.bf16.mxu0 0
    %2466 = vmatpush1.bf16.msra.mxu0 0
    %2467 = vmatprep.subr.bf16.mxu0 0
    %2468 = vmatpush1.bf16.msra.mxu0 0
    %2469 = vmatprep.subr.bf16.mxu0 0
    %2470 = vmatpush1.bf16.msra.mxu0 0
    %2471 = vmatprep.subr.bf16.mxu0 0
    %2472 = vmatpush1.bf16.msra.mxu0 0
    %2473 = vmatprep.subr.bf16.mxu0 0
    %2474 = vmatpush1.bf16.msra.mxu0 %v2453
    %2475 = vmatprep.subr.bf16.mxu0 0
    %2476 = vmatpush1.bf16.msra.mxu0 %v2452
    %2477 = vmatprep.subr.bf16.mxu0 0
    %2478 = vmatpush1.bf16.msra.mxu0 %v2451
    %2479 = vmatprep.subr.bf16.mxu0 0
    %2480 = vmatpush2.bf16.msra.mxu0 0
    %2481 = vmatprep.subr.bf16.mxu0 0
    %2482 = vmatpush2.bf16.msra.mxu0 0
    %2483 = vmatprep.subr.bf16.mxu0 0
    %2484 = vmatpush2.bf16.msra.mxu0 0
    %2485 = vmatprep.subr.bf16.mxu0 0
    %2486 = vmatpush2.bf16.msra.mxu0 0
    %2487 = vmatprep.subr.bf16.mxu0 0
    %2488 = vmatpush2.bf16.msra.mxu0 0
    %2489 = vmatprep.subr.bf16.mxu0 0
    %2490 = vmatpush2.bf16.msra.mxu0 0
    %2491 = vmatprep.subr.bf16.mxu0 0
    %2492 = vmatpush2.bf16.msra.mxu0 0
    %2493 = vmatprep.subr.bf16.mxu0 0
    %2494 = vmatpush2.bf16.msra.mxu0 0
    %2495 = vmatprep.mubr.bf16.mxu0 0
    %2496 = vmatmul.mubr.bf16.gmra.mxu0 %v2455
    %v2497 = vpop.f32.mrf.mxu0
    %v2498 = vadd.f32 0.0, %v2497
    %v2499 = vpop.f32.mrf.mxu0
    %v2500 = vpop.f32.mrf.mxu0
    %v2501 = vadd.f32 0.0, %v2500
    %v2502 = vpop.f32.mrf.mxu0
    %2503 = vmatprep.mubr.bf16.mxu0 0
    %2504 = vmatmul.mubr.bf16.gmra.mxu0 %v2458
    %v2505 = vpop.f32.mrf.mxu0
    %v2506 = vadd.f32 0.0, %v2505
    %v2507 = vpop.f32.mrf.mxu0
    %v2508 = vpop.f32.mrf.mxu0
    %v2509 = vadd.f32 0.0, %v2508
    %v2510 = vpop.f32.mrf.mxu0
    %2511 = vmatprep.mubr.bf16.mxu0 0
    %2512 = vmatmul.mubr.bf16.gmra.mxu0 %v2461
    %v2513 = vpop.f32.mrf.mxu0
    %v2514 = vadd.f32 0.0, %v2513
    %v2515 = vpop.f32.mrf.mxu0
    %v2516 = vpop.f32.mrf.mxu0
    %v2517 = vadd.f32 0.0, %v2516
    %v2518 = vpop.f32.mrf.mxu0
    %2519 = vdwg.mxu0
    %v2521 = vsel %vm646, %v2073, 0
    %v2524 = vsel %vm646, %v2074, 0
    %v2527 = vsel %vm646, %v2075, 0
    %2529 = vmatprep.subr.bf16.mxu0 0
    %2530 = vmatpush1.bf16.msra.mxu0 0
    %2531 = vmatprep.subr.bf16.mxu0 0
    %2532 = vmatpush1.bf16.msra.mxu0 0
    %2533 = vmatprep.subr.bf16.mxu0 0
    %2534 = vmatpush1.bf16.msra.mxu0 0
    %2535 = vmatprep.subr.bf16.mxu0 0
    %2536 = vmatpush1.bf16.msra.mxu0 0
    %2537 = vmatprep.subr.bf16.mxu0 0
    %2538 = vmatpush1.bf16.msra.mxu0 0
    %2539 = vmatprep.subr.bf16.mxu0 0
    %2540 = vmatpush1.bf16.msra.mxu0 %v2078
    %2541 = vmatprep.subr.bf16.mxu0 0
    %2542 = vmatpush1.bf16.msra.mxu0 %v2077
    %2543 = vmatprep.subr.bf16.mxu0 0
    %2544 = vmatpush1.bf16.msra.mxu0 %v2076
    %2545 = vmatprep.subr.bf16.mxu0 0
    %2546 = vmatpush2.bf16.msra.mxu0 0
    %2547 = vmatprep.subr.bf16.mxu0 0
    %2548 = vmatpush2.bf16.msra.mxu0 0
    %2549 = vmatprep.subr.bf16.mxu0 0
    %2550 = vmatpush2.bf16.msra.mxu0 0
    %2551 = vmatprep.subr.bf16.mxu0 0
    %2552 = vmatpush2.bf16.msra.mxu0 0
    %2553 = vmatprep.subr.bf16.mxu0 0
    %2554 = vmatpush2.bf16.msra.mxu0 0
    %2555 = vmatprep.subr.bf16.mxu0 0
    %2556 = vmatpush2.bf16.msra.mxu0 0
    %2557 = vmatprep.subr.bf16.mxu0 0
    %2558 = vmatpush2.bf16.msra.mxu0 0
    %2559 = vmatprep.subr.bf16.mxu0 0
    %2560 = vmatpush2.bf16.msra.mxu0 0
    %2561 = vmatprep.mubr.bf16.mxu0 0
    %2562 = vmatmul.mubr.bf16.gmra.mxu0 %v2521
    %v2563 = vpop.f32.mrf.mxu0
    %v2564 = vadd.f32 %v2498, %v2563
    %v2565 = vpop.f32.mrf.mxu0
    %v2566 = vpop.f32.mrf.mxu0
    %v2567 = vadd.f32 %v2501, %v2566
    %v2568 = vpop.f32.mrf.mxu0
    %2569 = vmatprep.mubr.bf16.mxu0 0
    %2570 = vmatmul.mubr.bf16.gmra.mxu0 %v2524
    %v2571 = vpop.f32.mrf.mxu0
    %v2572 = vadd.f32 %v2506, %v2571
    %v2573 = vpop.f32.mrf.mxu0
    %v2574 = vpop.f32.mrf.mxu0
    %v2575 = vadd.f32 %v2509, %v2574
    %v2576 = vpop.f32.mrf.mxu0
    %2577 = vmatprep.mubr.bf16.mxu0 0
    %2578 = vmatmul.mubr.bf16.gmra.mxu0 %v2527
    %v2579 = vpop.f32.mrf.mxu0
    %v2580 = vadd.f32 %v2514, %v2579
    %v2581 = vpop.f32.mrf.mxu0
    %v2582 = vpop.f32.mrf.mxu0
    %v2583 = vadd.f32 %v2517, %v2582
    %v2584 = vpop.f32.mrf.mxu0
    %2585 = vdwg.mxu0
    %v2586 = vadd.f32 %v1580, %v2564
    %v2587 = vadd.f32 %v1581, %v2567
    %v2588 = vadd.f32 %v1582, %v2572
    %v2589 = vadd.f32 %v1583, %v2575
    %v2590 = vadd.f32 %v1584, %v2580
    %v2591 = vadd.f32 %v1585, %v2583
    %s2592 = scalar_lea.vmem %s10, 1
    %v2593 = vld [vmem:[%s2592] sm:$0x1]
    %v2595 = vlaneseq
    %v2596 = vshrl.u32 %v2595, 7
    %v2597 = vsub.s32 0, %v2596
    %v2598 = vrot.slane %v2593, %v2597
    %v2600 = vadd.f32 %v2586, %v2598
    %v2601 = vadd.f32 %v2587, %v2598
    %v2602 = vadd.f32 %v2588, %v2598
    %v2603 = vadd.f32 %v2589, %v2598
    %v2604 = vadd.f32 %v2590, %v2598
    %v2605 = vadd.f32 %v2591, %v2598
    %s2606 = scalar_lea.vmem %s11, 1
    %v2607 = vld [vmem:[%s2606] sm:$0x1]
    %s2608 = scalar_lea.vmem %s12, 1
    %v2609 = vld [vmem:[%s2608] sm:$0x1]
    %v2610 = vsel %vm229, %v2600, 0.0
    %2611 = vadd.xlane.f32.xlu0 %v2610
    %v2612 = vpop.xlane.xlu0 %2611
    %v2613 = vsel %vm229, %v2601, 0.0
    %2614 = vadd.xlane.f32.xlu0 %v2613
    %v2615 = vpop.xlane.xlu0 %2614
    %v2616 = vsel %vm229, %v2602, 0.0
    %2617 = vadd.xlane.f32.xlu0 %v2616
    %v2618 = vpop.xlane.xlu0 %2617
    %v2619 = vsel %vm229, %v2603, 0.0
    %2620 = vadd.xlane.f32.xlu0 %v2619
    %v2621 = vpop.xlane.xlu0 %2620
    %v2622 = vsel %vm229, %v2604, 0.0
    %2623 = vadd.xlane.f32.xlu0 %v2622
    %v2624 = vpop.xlane.xlu0 %2623
    %v2625 = vsel %vm229, %v2605, 0.0
    %2626 = vadd.xlane.f32.xlu0 %v2625
    %v2627 = vpop.xlane.xlu0 %2626
    %v2628 = vmul.f32 %v2612, %v248
    %v2629 = vmul.f32 %v2615, %v248
    %v2630 = vmul.f32 %v2618, %v248
    %v2631 = vmul.f32 %v2621, %v248
    %v2632 = vmul.f32 %v2624, %v248
    %v2633 = vmul.f32 %v2627, %v248
    %v2634 = vsub.f32 %v2600, %v2628
    %v2635 = vsub.f32 %v2601, %v2629
    %v2636 = vsub.f32 %v2602, %v2630
    %v2637 = vsub.f32 %v2603, %v2631
    %v2638 = vsub.f32 %v2604, %v2632
    %v2639 = vsub.f32 %v2605, %v2633
    %v2640 = vmul.f32 %v2634, %v2634
    %v2641 = vmul.f32 %v2635, %v2635
    %v2642 = vmul.f32 %v2636, %v2636
    %v2643 = vmul.f32 %v2637, %v2637
    %v2644 = vmul.f32 %v2638, %v2638
    %v2645 = vmul.f32 %v2639, %v2639
    %v2646 = vsel %vm229, %v2640, 0.0
    %2647 = vadd.xlane.f32.xlu0 %v2646
    %v2648 = vpop.xlane.xlu0 %2647
    %v2649 = vsel %vm229, %v2641, 0.0
    %2650 = vadd.xlane.f32.xlu0 %v2649
    %v2651 = vpop.xlane.xlu0 %2650
    %v2652 = vsel %vm229, %v2642, 0.0
    %2653 = vadd.xlane.f32.xlu0 %v2652
    %v2654 = vpop.xlane.xlu0 %2653
    %v2655 = vsel %vm229, %v2643, 0.0
    %2656 = vadd.xlane.f32.xlu0 %v2655
    %v2657 = vpop.xlane.xlu0 %2656
    %v2658 = vsel %vm229, %v2644, 0.0
    %2659 = vadd.xlane.f32.xlu0 %v2658
    %v2660 = vpop.xlane.xlu0 %2659
    %v2661 = vsel %vm229, %v2645, 0.0
    %2662 = vadd.xlane.f32.xlu0 %v2661
    %v2663 = vpop.xlane.xlu0 %2662
    %v2664 = vmul.f32 %v2648, %v248
    %v2665 = vmul.f32 %v2651, %v248
    %v2666 = vmul.f32 %v2654, %v248
    %v2667 = vmul.f32 %v2657, %v248
    %v2668 = vmul.f32 %v2660, %v248
    %v2669 = vmul.f32 %v2663, %v248
    %v2670 = vadd.f32 %v2664, 1e-05
    %v2671 = vadd.f32 %v2665, 1e-05
    %v2672 = vadd.f32 %v2666, 1e-05
    %v2673 = vadd.f32 %v2667, 1e-05
    %v2674 = vadd.f32 %v2668, 1e-05
    %v2675 = vadd.f32 %v2669, 1e-05
    %v2676 = vrsqrt.pop %v2670
    %v2677 = vrsqrt.pop %v2671
    %v2678 = vrsqrt.pop %v2672
    %v2679 = vrsqrt.pop %v2673
    %v2680 = vrsqrt.pop %v2674
    %v2681 = vrsqrt.pop %v2675
    %v2682 = vmul.f32 %v2634, %v2676
    %v2683 = vmul.f32 %v2635, %v2677
    %v2684 = vmul.f32 %v2636, %v2678
    %v2685 = vmul.f32 %v2637, %v2679
    %v2686 = vmul.f32 %v2638, %v2680
    %v2687 = vmul.f32 %v2639, %v2681
    %v2689 = vlaneseq
    %v2690 = vshrl.u32 %v2689, 7
    %v2691 = vsub.s32 0, %v2690
    %v2692 = vrot.slane %v2607, %v2691
    %v2694 = vmul.f32 %v2682, %v2692
    %v2695 = vmul.f32 %v2683, %v2692
    %v2696 = vmul.f32 %v2684, %v2692
    %v2697 = vmul.f32 %v2685, %v2692
    %v2698 = vmul.f32 %v2686, %v2692
    %v2699 = vmul.f32 %v2687, %v2692
    %v2701 = vlaneseq
    %v2702 = vshrl.u32 %v2701, 7
    %v2703 = vsub.s32 0, %v2702
    %v2704 = vrot.slane %v2609, %v2703
    %v2706 = vadd.f32 %v2694, %v2704
    %v2707 = vadd.f32 %v2695, %v2704
    %v2708 = vadd.f32 %v2696, %v2704
    %v2709 = vadd.f32 %v2697, %v2704
    %v2710 = vadd.f32 %v2698, %v2704
    %v2711 = vadd.f32 %v2699, %v2704
    %v2712 = vpack.c.bf16 %v2707, %v2706
    %v2713 = vpack.c.bf16 %v2709, %v2708
    %v2714 = vpack.c.bf16 %v2711, %v2710
    %s2715 = scalar_lea.vmem %s13, 16
    %v2716 = vld [vmem:[%s2715] sm:$0xf]
    %v2717 = vld [vmem:[%s2715 + $0x4] sm:$0xf]
    %v2718 = vld [vmem:[%s2715 + $0x8] sm:$0xf]
    %v2719 = vld [vmem:[%s2715 + $0xc] sm:$0xf]
    %s2720 = scalar_lea.vmem %s14, 1
    %v2721 = vld [vmem:[%s2720] sm:$0x1]
    %v2723 = vlaneseq
    %v2724 = vshrl.u32 %v2723, 7
    %v2725 = vsub.s32 0, %v2724
    %v2726 = vrot.slane %v2721, %v2725
    %v2732 = vunpack.c.l.b16 %v2716
    %v2733 = vunpack.c.l.b16 %v2717
    %v2734 = vunpack.c.l.b16 %v2718
    %v2735 = vunpack.c.l.b16 %v2719
    %v2736 = vpack.c.b16 %v2733, %v2732
    %v2737 = vpack.c.b16 %v2735, %v2734
    %v2741 = vsel %vm229, %v2712, 0
    %v2744 = vsel %vm229, %v2713, 0
    %v2747 = vsel %vm229, %v2714, 0
    %2749 = vmatprep.subr.bf16.mxu0 0
    %2750 = vmatpush1.bf16.msra.mxu0 0
    %2751 = vmatprep.subr.bf16.mxu0 0
    %2752 = vmatpush1.bf16.msra.mxu0 0
    %2753 = vmatprep.subr.bf16.mxu0 0
    %2754 = vmatpush1.bf16.msra.mxu0 0
    %2755 = vmatprep.subr.bf16.mxu0 0
    %2756 = vmatpush1.bf16.msra.mxu0 0
    %2757 = vmatprep.subr.bf16.mxu0 0
    %2758 = vmatpush1.bf16.msra.mxu0 0
    %2759 = vmatprep.subr.bf16.mxu0 0
    %2760 = vmatpush1.bf16.msra.mxu0 0
    %2761 = vmatprep.subr.bf16.mxu0 0
    %2762 = vmatpush1.bf16.msra.mxu0 %v2737
    %2763 = vmatprep.subr.bf16.mxu0 0
    %2764 = vmatpush1.bf16.msra.mxu0 %v2736
    %2765 = vmatprep.subr.bf16.mxu0 0
    %2766 = vmatpush2.bf16.msra.mxu0 0
    %2767 = vmatprep.subr.bf16.mxu0 0
    %2768 = vmatpush2.bf16.msra.mxu0 0
    %2769 = vmatprep.subr.bf16.mxu0 0
    %2770 = vmatpush2.bf16.msra.mxu0 0
    %2771 = vmatprep.subr.bf16.mxu0 0
    %2772 = vmatpush2.bf16.msra.mxu0 0
    %2773 = vmatprep.subr.bf16.mxu0 0
    %2774 = vmatpush2.bf16.msra.mxu0 0
    %2775 = vmatprep.subr.bf16.mxu0 0
    %2776 = vmatpush2.bf16.msra.mxu0 0
    %2777 = vmatprep.subr.bf16.mxu0 0
    %2778 = vmatpush2.bf16.msra.mxu0 0
    %2779 = vmatprep.subr.bf16.mxu0 0
    %2780 = vmatpush2.bf16.msra.mxu0 0
    %2781 = vmatprep.mubr.bf16.mxu0 0
    %2782 = vmatmul.mubr.bf16.gmra.mxu0 %v2741
    %v2783 = vpop.f32.mrf.mxu0
    %v2784 = vadd.f32 %v2726, %v2783
    %v2785 = vpop.f32.mrf.mxu0
    %v2786 = vpop.f32.mrf.mxu0
    %v2787 = vadd.f32 %v2726, %v2786
    %v2788 = vpop.f32.mrf.mxu0
    %2789 = vmatprep.mubr.bf16.mxu0 0
    %2790 = vmatmul.mubr.bf16.gmra.mxu0 %v2744
    %v2791 = vpop.f32.mrf.mxu0
    %v2792 = vadd.f32 %v2726, %v2791
    %v2793 = vpop.f32.mrf.mxu0
    %v2794 = vpop.f32.mrf.mxu0
    %v2795 = vadd.f32 %v2726, %v2794
    %v2796 = vpop.f32.mrf.mxu0
    %2797 = vmatprep.mubr.bf16.mxu0 0
    %2798 = vmatmul.mubr.bf16.gmra.mxu0 %v2747
    %v2799 = vpop.f32.mrf.mxu0
    %v2800 = vadd.f32 %v2726, %v2799
    %v2801 = vpop.f32.mrf.mxu0
    %v2802 = vpop.f32.mrf.mxu0
    %v2803 = vadd.f32 %v2726, %v2802
    %v2804 = vpop.f32.mrf.mxu0
    %2805 = vdwg.mxu0
    %v2806 = vmul.f32 %v2784, 0.5
    %v2807 = vmul.f32 %v2787, 0.5
    %v2808 = vmul.f32 %v2792, 0.5
    %v2809 = vmul.f32 %v2795, 0.5
    %v2810 = vmul.f32 %v2800, 0.5
    %v2811 = vmul.f32 %v2803, 0.5
    %v2812 = vmul.f32 %v2784, 0.70710677
    %v2813 = vmul.f32 %v2787, 0.70710677
    %v2814 = vmul.f32 %v2792, 0.70710677
    %v2815 = vmul.f32 %v2795, 0.70710677
    %v2816 = vmul.f32 %v2800, 0.70710677
    %v2817 = vmul.f32 %v2803, 0.70710677
    %v2818 = verf.f32.pop %v2812
    %v2819 = verf.f32.pop %v2813
    %v2820 = verf.f32.pop %v2814
    %v2821 = verf.f32.pop %v2815
    %v2822 = verf.f32.pop %v2816
    %v2823 = verf.f32.pop %v2817
    %v2824 = vadd.f32 %v2818, 1.0
    %v2825 = vadd.f32 %v2819, 1.0
    %v2826 = vadd.f32 %v2820, 1.0
    %v2827 = vadd.f32 %v2821, 1.0
    %v2828 = vadd.f32 %v2822, 1.0
    %v2829 = vadd.f32 %v2823, 1.0
    %v2830 = vmul.f32 %v2806, %v2824
    %v2831 = vmul.f32 %v2807, %v2825
    %v2832 = vmul.f32 %v2808, %v2826
    %v2833 = vmul.f32 %v2809, %v2827
    %v2834 = vmul.f32 %v2810, %v2828
    %v2835 = vmul.f32 %v2811, %v2829
    %v2836 = vpack.c.bf16 %v2831, %v2830
    %v2837 = vpack.c.bf16 %v2833, %v2832
    %v2838 = vpack.c.bf16 %v2835, %v2834
    %s2839 = scalar_lea.vmem %s15, 32
    %v2840 = vld [vmem:[%s2839] sm:$0xf]
    %v2841 = vld [vmem:[%s2839 + $0x4] sm:$0xf]
    %v2842 = vld [vmem:[%s2839 + $0x8] sm:$0xf]
    %v2843 = vld [vmem:[%s2839 + $0xc] sm:$0xf]
    %v2844 = vld [vmem:[%s2839 + $0x10] sm:$0xf]
    %v2845 = vld [vmem:[%s2839 + $0x14] sm:$0xf]
    %v2846 = vld [vmem:[%s2839 + $0x18] sm:$0xf]
    %v2847 = vld [vmem:[%s2839 + $0x1c] sm:$0xf]
    %s2848 = scalar_lea.vmem %s16, 1
    %v2849 = vld [vmem:[%s2848] sm:$0x1]
    %v2851 = vlaneseq
    %v2852 = vshrl.u32 %v2851, 7
    %v2853 = vsub.s32 0, %v2852
    %v2854 = vrot.slane %v2849, %v2853
    %v2864 = vunpack.c.l.b16 %v2840
    %v2865 = vunpack.c.l.b16 %v2841
    %v2866 = vunpack.c.l.b16 %v2842
    %v2867 = vunpack.c.l.b16 %v2843
    %v2868 = vunpack.c.l.b16 %v2844
    %v2869 = vunpack.c.l.b16 %v2845
    %v2870 = vunpack.c.l.b16 %v2846
    %v2871 = vunpack.c.l.b16 %v2847
    %v2872 = vpack.c.b16 %v2865, %v2864
    %v2873 = vpack.c.b16 %v2867, %v2866
    %v2874 = vpack.c.b16 %v2869, %v2868
    %v2875 = vpack.c.b16 %v2871, %v2870
    %v2881 = vsel %vm1513, %v2836, 0
    %v2884 = vsel %vm1513, %v2837, 0
    %v2887 = vsel %vm1513, %v2838, 0
    %2889 = vmatprep.subr.bf16.mxu0 0
    %2890 = vmatpush1.bf16.msra.mxu0 0
    %2891 = vmatprep.subr.bf16.mxu0 0
    %2892 = vmatpush1.bf16.msra.mxu0 0
    %2893 = vmatprep.subr.bf16.mxu0 0
    %2894 = vmatpush1.bf16.msra.mxu0 0
    %2895 = vmatprep.subr.bf16.mxu0 0
    %2896 = vmatpush1.bf16.msra.mxu0 0
    %2897 = vmatprep.subr.bf16.mxu0 0
    %2898 = vmatpush1.bf16.msra.mxu0 %v2875
    %2899 = vmatprep.subr.bf16.mxu0 0
    %2900 = vmatpush1.bf16.msra.mxu0 %v2874
    %2901 = vmatprep.subr.bf16.mxu0 0
    %2902 = vmatpush1.bf16.msra.mxu0 %v2873
    %2903 = vmatprep.subr.bf16.mxu0 0
    %2904 = vmatpush1.bf16.msra.mxu0 %v2872
    %2905 = vmatprep.subr.bf16.mxu0 0
    %2906 = vmatpush2.bf16.msra.mxu0 0
    %2907 = vmatprep.subr.bf16.mxu0 0
    %2908 = vmatpush2.bf16.msra.mxu0 0
    %2909 = vmatprep.subr.bf16.mxu0 0
    %2910 = vmatpush2.bf16.msra.mxu0 0
    %2911 = vmatprep.subr.bf16.mxu0 0
    %2912 = vmatpush2.bf16.msra.mxu0 0
    %2913 = vmatprep.subr.bf16.mxu0 0
    %2914 = vmatpush2.bf16.msra.mxu0 0
    %2915 = vmatprep.subr.bf16.mxu0 0
    %2916 = vmatpush2.bf16.msra.mxu0 0
    %2917 = vmatprep.subr.bf16.mxu0 0
    %2918 = vmatpush2.bf16.msra.mxu0 0
    %2919 = vmatprep.subr.bf16.mxu0 0
    %2920 = vmatpush2.bf16.msra.mxu0 0
    %2921 = vmatprep.mubr.bf16.mxu0 0
    %2922 = vmatmul.mubr.bf16.gmra.mxu0 %v2881
    %v2923 = vpop.f32.mrf.mxu0
    %v2924 = vadd.f32 %v2854, %v2923
    %v2925 = vpop.f32.mrf.mxu0
    %v2926 = vpop.f32.mrf.mxu0
    %v2927 = vadd.f32 %v2854, %v2926
    %v2928 = vpop.f32.mrf.mxu0
    %2929 = vmatprep.mubr.bf16.mxu0 0
    %2930 = vmatmul.mubr.bf16.gmra.mxu0 %v2884
    %v2931 = vpop.f32.mrf.mxu0
    %v2932 = vadd.f32 %v2854, %v2931
    %v2933 = vpop.f32.mrf.mxu0
    %v2934 = vpop.f32.mrf.mxu0
    %v2935 = vadd.f32 %v2854, %v2934
    %v2936 = vpop.f32.mrf.mxu0
    %2937 = vmatprep.mubr.bf16.mxu0 0
    %2938 = vmatmul.mubr.bf16.gmra.mxu0 %v2887
    %v2939 = vpop.f32.mrf.mxu0
    %v2940 = vadd.f32 %v2854, %v2939
    %v2941 = vpop.f32.mrf.mxu0
    %v2942 = vpop.f32.mrf.mxu0
    %v2943 = vadd.f32 %v2854, %v2942
    %v2944 = vpop.f32.mrf.mxu0
    %2945 = vdwg.mxu0
    %v2946 = vadd.f32 %v2600, %v2924
    %v2947 = vadd.f32 %v2601, %v2927
    %v2948 = vadd.f32 %v2602, %v2932
    %v2949 = vadd.f32 %v2603, %v2935
    %v2950 = vadd.f32 %v2604, %v2940
    %v2951 = vadd.f32 %v2605, %v2943
    %v2952 = vld [vmem:[%s4] sm:$0x3]
    %v2954 = vsel %vm646, %v2952, 0
    %2956 = vmatprep.subr.mxu0 0.0
    %2957 = vmatpush1.msra.mxu0 0.0
    %2958 = vmatprep.subr.mxu0 0.0
    %2959 = vmatpush1.msra.mxu0 0.0
    %2960 = vmatprep.subr.mxu0 0.0
    %2961 = vmatpush1.msra.mxu0 0.0
    %2962 = vmatprep.subr.mxu0 0.0
    %2963 = vmatpush1.msra.mxu0 0.0
    %2964 = vmatprep.subr.mxu0 0.0
    %2965 = vmatpush1.msra.mxu0 0.0
    %2966 = vmatprep.subr.mxu0 0.0
    %2967 = vmatpush1.msra.mxu0 0.0
    %2968 = vmatprep.subr.mxu0 0.0
    %2969 = vmatpush1.msra.mxu0 0.0
    %2970 = vmatprep.subr.mxu0 0.0
    %2971 = vmatpush1.msra.mxu0 0.0
    %2972 = vmatprep.subr.mxu0 0.0
    %2973 = vmatpush1.msra.mxu0 0.0
    %2974 = vmatprep.subr.mxu0 0.0
    %2975 = vmatpush1.msra.mxu0 0.0
    %2976 = vmatprep.subr.mxu0 0.0
    %2977 = vmatpush1.msra.mxu0 %v2951
    %2978 = vmatprep.subr.mxu0 0.0
    %2979 = vmatpush1.msra.mxu0 %v2950
    %2980 = vmatprep.subr.mxu0 0.0
    %2981 = vmatpush1.msra.mxu0 %v2949
    %2982 = vmatprep.subr.mxu0 0.0
    %2983 = vmatpush1.msra.mxu0 %v2948
    %2984 = vmatprep.subr.mxu0 0.0
    %2985 = vmatpush1.msra.mxu0 %v2947
    %2986 = vmatprep.subr.mxu0 0.0
    %2987 = vmatpush1.msra.mxu0 %v2946
    %2988 = vmatprep.subr.mxu0 0.0
    %2989 = vmatpush2.msra.mxu0 0.0
    %2990 = vmatprep.subr.mxu0 0.0
    %2991 = vmatpush2.msra.mxu0 0.0
    %2992 = vmatprep.subr.mxu0 0.0
    %2993 = vmatpush2.msra.mxu0 0.0
    %2994 = vmatprep.subr.mxu0 0.0
    %2995 = vmatpush2.msra.mxu0 0.0
    %2996 = vmatprep.subr.mxu0 0.0
    %2997 = vmatpush2.msra.mxu0 0.0
    %2998 = vmatprep.subr.mxu0 0.0
    %2999 = vmatpush2.msra.mxu0 0.0
    %3000 = vmatprep.subr.mxu0 0.0
    %3001 = vmatpush2.msra.mxu0 0.0
    %3002 = vmatprep.subr.mxu0 0.0
    %3003 = vmatpush2.msra.mxu0 0.0
    %3004 = vmatprep.subr.mxu0 0.0
    %3005 = vmatpush2.msra.mxu0 0.0
    %3006 = vmatprep.subr.mxu0 0.0
    %3007 = vmatpush2.msra.mxu0 0.0
    %3008 = vmatprep.subr.mxu0 0.0
    %3009 = vmatpush2.msra.mxu0 0.0
    %3010 = vmatprep.subr.mxu0 0.0
    %3011 = vmatpush2.msra.mxu0 0.0
    %3012 = vmatprep.subr.mxu0 0.0
    %3013 = vmatpush2.msra.mxu0 0.0
    %3014 = vmatprep.subr.mxu0 0.0
    %3015 = vmatpush2.msra.mxu0 0.0
    %3016 = vmatprep.subr.mxu0 0.0
    %3017 = vmatpush2.msra.mxu0 0.0
    %3018 = vmatprep.subr.mxu0 0.0
    %3019 = vmatpush2.msra.mxu0 0.0
    %3020 = vmatprep.mubr.f32.mxu0 0.0
    %3021 = vmatmul.mubr.f32.gmra.mxu0 %v2954
    %v3022 = vpop.f32.mrf.mxu0
    %v3023 = vadd.f32 0.0, %v3022
    %v3024 = vpop.f32.mrf.mxu0
    %3025 = vdwg.mxu0
    %v3026 = vld [vmem:[%s17] sm:$0x1]
    %v3027 = vld [vmem:[%s18] sm:$0x1]
    %vm3028 = vcmask 254976
    %v3029 = vsel %vm3028, %v3023, 0.0
    %3030 = vadd.xlane.f32.xlu0 %v3029
    %v3031 = vpop.xlane.xlu0 %3030
    %v3032 = vmul.f32 %v3031, %v248
    %v3033 = vsub.f32 %v3023, %v3032
    %v3034 = vmul.f32 %v3033, %v3033
    %v3035 = vsel %vm3028, %v3034, 0.0
    %3036 = vadd.xlane.f32.xlu0 %v3035
    %v3037 = vpop.xlane.xlu0 %3036
    %v3038 = vmul.f32 %v3037, %v248
    %v3039 = vadd.f32 %v3038, 1e-05
    %v3040 = vrsqrt.pop %v3039
    %v3041 = vmul.f32 %v3033, %v3040
    %v3043 = vlaneseq
    %v3044 = vshrl.u32 %v3043, 7
    %v3045 = vsub.s32 0, %v3044
    %v3046 = vrot.slane %v3026, %v3045
    %v3048 = vmul.f32 %v3041, %v3046
    %v3050 = vlaneseq
    %v3051 = vshrl.u32 %v3050, 7
    %v3052 = vsub.s32 0, %v3051
    %v3053 = vrot.slane %v3027, %v3052
    %v3055 = vadd.f32 %v3048, %v3053
    %v3056 = vpack.c.bf16 %v3055, %v3055
    %v3057 = vld [vmem:[%s19] sm:$0xf]
    %v3058 = vld [vmem:[%s19 + $0x4] sm:$0xf]
    %v3059 = vld [vmem:[%s19 + $0x8] sm:$0xf]
    %v3060 = vld [vmem:[%s19 + $0xc] sm:$0xf]
    %v3061 = vld [vmem:[%s20] sm:$0x1]
    %v3063 = vlaneseq
    %v3064 = vshrl.u32 %v3063, 7
    %v3065 = vsub.s32 0, %v3064
    %v3066 = vrot.slane %v3061, %v3065
    %v3072 = vunpack.c.l.b16 %v3057
    %v3073 = vunpack.c.l.b16 %v3058
    %v3074 = vunpack.c.l.b16 %v3059
    %v3075 = vunpack.c.l.b16 %v3060
    %v3076 = vpack.c.b16 %v3073, %v3072
    %v3077 = vpack.c.b16 %v3075, %v3074
    %v3081 = vsel %vm229, %v3056, 0
    %3083 = vmatprep.subr.bf16.mxu0 0
    %3084 = vmatpush1.bf16.msra.mxu0 0
    %3085 = vmatprep.subr.bf16.mxu0 0
    %3086 = vmatpush1.bf16.msra.mxu0 0
    %3087 = vmatprep.subr.bf16.mxu0 0
    %3088 = vmatpush1.bf16.msra.mxu0 0
    %3089 = vmatprep.subr.bf16.mxu0 0
    %3090 = vmatpush1.bf16.msra.mxu0 0
    %3091 = vmatprep.subr.bf16.mxu0 0
    %3092 = vmatpush1.bf16.msra.mxu0 0
    %3093 = vmatprep.subr.bf16.mxu0 0
    %3094 = vmatpush1.bf16.msra.mxu0 0
    %3095 = vmatprep.subr.bf16.mxu0 0
    %3096 = vmatpush1.bf16.msra.mxu0 %v3077
    %3097 = vmatprep.subr.bf16.mxu0 0
    %3098 = vmatpush1.bf16.msra.mxu0 %v3076
    %3099 = vmatprep.subr.bf16.mxu0 0
    %3100 = vmatpush2.bf16.msra.mxu0 0
    %3101 = vmatprep.subr.bf16.mxu0 0
    %3102 = vmatpush2.bf16.msra.mxu0 0
    %3103 = vmatprep.subr.bf16.mxu0 0
    %3104 = vmatpush2.bf16.msra.mxu0 0
    %3105 = vmatprep.subr.bf16.mxu0 0
    %3106 = vmatpush2.bf16.msra.mxu0 0
    %3107 = vmatprep.subr.bf16.mxu0 0
    %3108 = vmatpush2.bf16.msra.mxu0 0
    %3109 = vmatprep.subr.bf16.mxu0 0
    %3110 = vmatpush2.bf16.msra.mxu0 0
    %3111 = vmatprep.subr.bf16.mxu0 0
    %3112 = vmatpush2.bf16.msra.mxu0 0
    %3113 = vmatprep.subr.bf16.mxu0 0
    %3114 = vmatpush2.bf16.msra.mxu0 0
    %3115 = vmatprep.mubr.bf16.mxu0 0
    %3116 = vmatmul.mubr.bf16.gmra.mxu0 %v3081
    %v3117 = vpop.f32.mrf.mxu0
    %v3118 = vadd.f32 %v3066, %v3117
    %v3119 = vpop.f32.mrf.mxu0
    %v3120 = vpop.f32.mrf.mxu0
    %v3121 = vpop.f32.mrf.mxu0
    %3122 = vdwg.mxu0
    %3123 = vst [vmem:[#allocation2] sm:$0x3] %v3118
    // Predicated region
    $region86: #{cropped_vit_forward.1} parent=1 // pred_check
      _
    $region87: #{cropped_vit_forward.1} parent=1 // pred_check_branch
      %3125 = sbr.rel (0) target = $region89
    $region88: #{cropped_vit_forward.1} parent=1 // pred_region
      %s3127 = ssub.s32 32, 32
      %3128 = vsyncadd [#allocation3], %s3127
      %s3130 = sshll.u32 [#allocation2], 4
      %s3131 = int_to_ptr.vmem [resolvable:$true] %s3130
      %3133 = dma.vmem_to_hbm [thread:$0]  %s3131, 32, %s21, [#allocation3]
    $region89: #{cropped_vit_forward.1} parent=1 // pred_fallthru
      _
    // Predicated region
    $region90: #{cropped_vit_forward.1} parent=1 // pred_check
      _
    $region91: #{cropped_vit_forward.1} parent=1 // pred_check_branch
      %3135 = sbr.rel (0) target = $region93
    $region92: #{cropped_vit_forward.1} parent=1 // pred_region
      %3136 = dma.done [#allocation3], 32
    $region93: #{cropped_vit_forward.1} parent=1 // pred_fallthru
      _
    %3137 = vsyncpa [#allocation3], 1

</llo_original>
